<compile_context>
chip_gen: v7x
topology: tpu7x:2x2x1
jax: 0.10.0
libtpu: 0.0.40
codegen_flags: <defaults>
</compile_context>

<pallas_src>
import functools
import math

import jax
import jax.numpy as jnp
from jax.experimental import pallas as pl
from jax.experimental.pallas import tpu as pltpu

# ---- model config (the `args` the PyTorch module expects) -------------------
CAPACITY = 8           # args.capacity
UNDERTONES = 1         # args.hcnn_undertones
OVERTONES = 2          # args.hcnn_overtones
HCNN_ONLYINPUT = True  # args.hcnn_onlyinput
HCNN_MULT = UNDERTONES + OVERTONES
BN_EPS = 1e-4
NUM_NOTES = 88


def harmonic_shifts(octave_bins, undertones, overtones):
    harmonics = [1.0 / (x + 2) for x in range(undertones)] + list(range(1, overtones + 1))
    return [int(round(octave_bins * math.log2(h))) for h in harmonics]


SHIFTS = harmonic_shifts(48, UNDERTONES, OVERTONES)   # [-48, 0, 48]
PAD = max(abs(s) for s in SHIFTS)                     # 48
OFFSETS = tuple(PAD + s for s in SHIFTS)              # (0, 48, 96) into the padded row

# conv layer table: (name, kh, kw, cin, cout)
LAYERS = [
    ("conv1", 3, 3, HCNN_MULT, CAPACITY),
    ("conv2", 3, 3, CAPACITY, CAPACITY),
    ("conv3", 1, 3, CAPACITY, CAPACITY),
    ("conv4", 1, 3, CAPACITY, CAPACITY),
    ("conv5", 1, 25, CAPACITY, 2 * CAPACITY),
    ("conv6", 1, 25, 2 * CAPACITY, 4 * CAPACITY),
    ("conv7", 1, 1, 4 * CAPACITY, NUM_NOTES),
]


# ---- the single fused kernel -------------------------------------------------
def _fused_forward_kernel(x_ref,
                          w1, s1, b1, w2, s2, b2, w3, s3, b3, w4, s4, b4,
                          w5, s5, b5, w6, s6, b6, w7, s7, b7,
                          o_ref, *, h_in, w_in, offsets):
    f32 = jnp.float32

    def bn(y, s_ref, b_ref, relu):
        # BatchNorm (inference) folded to per-channel scale/shift; (cout,1)
        # broadcasts along the lane (W) dim.
        y = y * s_ref[...] + b_ref[...]
        return jnp.maximum(y, 0.0) if relu else y

    def conv_rows(rows, w_ref, kh, kw):
        # rows: list over H of (cin, W) tiles (C on sublanes, W on lanes).
        # One im2col matmul (K = kh*kw*cin) per output row.
        wout = rows[0].shape[-1] - kw + 1
        wmat = w_ref[...]                                    # (cout, kh*kw*cin)
        outs = []
        for r in range(len(rows) - kh + 1):
            patches = [rows[r + i][:, j:j + wout] for i in range(kh) for j in range(kw)]
            x2 = jnp.concatenate(patches, axis=0)            # (kh*kw*cin, wout)
            outs.append(jnp.dot(wmat, x2, preferred_element_type=f32))
        return outs

    def conv_w(x, w_ref, kw):
        # 1 x kw conv on a single row: one im2col matmul with K = kw*cin.
        wout = x.shape[-1] - kw + 1
        x2 = jnp.concatenate([x[:, j:j + wout] for j in range(kw)], axis=0)
        return jnp.dot(w_ref[...], x2, preferred_element_type=f32)

    def maxpool2(y):
        # MaxPool2d((1, 2)): even/odd lane decimation via exact 0/1 selection
        # matmuls (MXU is idle here) -> no rank-5 reshape, no strided lane slice.
        wdt = y.shape[-1]
        wo = wdt // 2
        rr = jax.lax.broadcasted_iota(jnp.int32, (wdt, wo), 0)
        cc = jax.lax.broadcasted_iota(jnp.int32, (wdt, wo), 1)
        even = (rr == 2 * cc).astype(f32)
        odd = (rr == 2 * cc + 1).astype(f32)
        return jnp.maximum(jnp.dot(y, even, preferred_element_type=f32),
                           jnp.dot(y, odd, preferred_element_type=f32))

    xp = x_ref[0]                                            # (h_in, w_in + 2*PAD)

    # HarmonicStacking(48, 1, 2) folded in: channel c of the stacked input is a
    # shifted window of the zero-padded spectrogram row (shifts -48/0/+48 on W).
    hs = [jnp.concatenate([xp[h:h + 1, o:o + w_in] for o in offsets], axis=0)
          for h in range(h_in)]                              # h_in x (3, w_in)

    y = conv_rows(hs, w1, 3, 3)                              # 3 x (8, w-2)
    y = [bn(t, s1, b1, True) for t in y]
    y = bn(conv_rows(y, w2, 3, 3)[0], s2, b2, True)          # (8, w-4)
    y = maxpool2(y)                                          # (8, (w-4)//2)
    # TODO(synk): Dropout2d(0.25) is identity here (inference semantics).
    y = bn(conv_w(y, w3, 3), s3, b3, True)
    y = bn(conv_w(y, w4, 3), s4, b4, True)
    y = maxpool2(y)
    # TODO(synk): Dropout2d(0.25) is identity here (inference semantics).
    y = bn(conv_w(y, w5, 25), s5, b5, True)                  # (16, .)
    y = bn(conv_w(y, w6, 25), s6, b6, True)                  # (32, 6)
    y = bn(jnp.dot(w7[...], y, preferred_element_type=f32), s7, b7, False)  # (88, 6)
    y = jnp.mean(y, axis=1, keepdims=True)                   # AvgPool2d((1, 6)) -> (88, 1)
    o_ref[...] = y.reshape(1, y.shape[0], 1).astype(o_ref.dtype)


# ---- wrapper -----------------------------------------------------------------
def all_conv_2016_forward(x_nchw, params):
    n, cin, h, w = x_nchw.shape
    assert cin == 1, "AllConv2016 expects a single input channel"
    # Shape chain checks (same assumptions as the PyTorch module's final squeeze):
    assert h - 4 == 1, "the two 3x3 convs must reduce H to 1 (use H = 5)"
    wc = (w - 4) // 2          # two 3x3 convs + MaxPool(1,2)
    wc = (wc - 4) // 2         # two 1x3 convs + MaxPool(1,2)
    wc = wc - 48               # two 1x25 convs
    assert wc == 6, "width chain must end at 6 for AvgPool2d((1,6)) (use W = 228)"

    # Frequency axis (W) goes on the TPU lane dim; zero-pad once for the +-48
    # harmonic shifts (tiny, avoids materializing the 3x-stacked tensor in HBM).
    x = x_nchw.reshape(n, h, w)
    xp = jnp.pad(x, ((0, 0), (0, 0), (PAD, PAD)))            # (n, h, w + 2*PAD)

    flat = []
    for name, *_ in LAYERS:
        flat.extend(params[name])                            # w2, scale, bias per layer

    kernel = functools.partial(_fused_forward_kernel, h_in=h, w_in=w, offsets=OFFSETS)
    out = pl.pallas_call(
        kernel,
        out_shape=jax.ShapeDtypeStruct((n, NUM_NOTES, 1), jnp.float32),
        grid=(n,),
        in_specs=[pl.BlockSpec((1, h, w + 2 * PAD), lambda b: (b, 0, 0))]
                 + [pl.BlockSpec(p.shape, lambda b: (0, 0)) for p in flat],
        out_specs=pl.BlockSpec((1, NUM_NOTES, 1), lambda b: (b, 0, 0)),
        compiler_params=pltpu.CompilerParams(dimension_semantics=("parallel",)),
    )(xp, *flat)
    return out.reshape(n, NUM_NOTES)                         # == h.squeeze(-1).squeeze(-1)


# ---- deterministic parameter init (matches __init__ shapes & init scheme) ----
def init_params(key):
    params = {}
    keys = jax.random.split(key, len(LAYERS))
    for k, (name, kh, kw, cin, cout) in zip(keys, LAYERS):
        # Xavier-uniform, same fan computation as torch.nn.init.xavier_uniform_.
        fan_in, fan_out = cin * kh * kw, cout * kh * kw
        bound = math.sqrt(6.0 / (fan_in + fan_out))
        w = jax.random.uniform(k, (cout, cin, kh, kw), jnp.float32, -bound, bound)
        # Reorder to (cout, kh*kw*cin) matching the kernel's im2col row order
        # (taps (i, j) outer, cin fastest).
        w2 = jnp.transpose(w, (0, 2, 3, 1)).reshape(cout, kh * kw * cin)
        # BatchNorm2d freshly initialized: gamma=1, beta=0, running stats (0, 1).
        gamma = jnp.ones((cout,), jnp.float32)
        beta = jnp.zeros((cout,), jnp.float32)
        rmean = jnp.zeros((cout,), jnp.float32)
        rvar = jnp.ones((cout,), jnp.float32)
        scale = gamma / jnp.sqrt(rvar + BN_EPS)
        bias = beta - rmean * scale
        params[name] = (w2, scale.reshape(cout, 1), bias.reshape(cout, 1))
    return params


if __name__ == "__main__":
    key = jax.random.PRNGKey(0)
    k_x, k_p = jax.random.split(key)
    # Smallest input consistent with the conv chain: H=5 (two 3x3 convs -> 1),
    # W=228 -> 226 -> 224 -> 112 -> 110 -> 108 -> 54 -> 30 -> 6 -> AvgPool(1,6) -> 1.
    x = jax.random.normal(k_x, (2, 1, 5, 228), jnp.float32)   # NCHW, 1 input channel
    params = init_params(k_p)
    out = jax.jit(all_conv_2016_forward)(x, params)
    out = jax.block_until_ready(out)
    assert out.shape == (2, NUM_NOTES), out.shape
    assert bool(jnp.all(jnp.isfinite(out)))
    print("KERNEL_OK")
</pallas_src>

<mosaic_0001>
module attributes {stable_mosaic.version = 11 : i64} {
  func.func @_fused_forward_kernel(%arg0: i32, %arg1: memref<1x5x324xf32, #tpu.memory_space<vmem>>, %arg2: memref<8x27xf32, #tpu.memory_space<vmem>>, %arg3: memref<8x1xf32, #tpu.memory_space<vmem>>, %arg4: memref<8x1xf32, #tpu.memory_space<vmem>>, %arg5: memref<8x72xf32, #tpu.memory_space<vmem>>, %arg6: memref<8x1xf32, #tpu.memory_space<vmem>>, %arg7: memref<8x1xf32, #tpu.memory_space<vmem>>, %arg8: memref<8x24xf32, #tpu.memory_space<vmem>>, %arg9: memref<8x1xf32, #tpu.memory_space<vmem>>, %arg10: memref<8x1xf32, #tpu.memory_space<vmem>>, %arg11: memref<8x24xf32, #tpu.memory_space<vmem>>, %arg12: memref<8x1xf32, #tpu.memory_space<vmem>>, %arg13: memref<8x1xf32, #tpu.memory_space<vmem>>, %arg14: memref<16x200xf32, #tpu.memory_space<vmem>>, %arg15: memref<16x1xf32, #tpu.memory_space<vmem>>, %arg16: memref<16x1xf32, #tpu.memory_space<vmem>>, %arg17: memref<32x400xf32, #tpu.memory_space<vmem>>, %arg18: memref<32x1xf32, #tpu.memory_space<vmem>>, %arg19: memref<32x1xf32, #tpu.memory_space<vmem>>, %arg20: memref<88x32xf32, #tpu.memory_space<vmem>>, %arg21: memref<88x1xf32, #tpu.memory_space<vmem>>, %arg22: memref<88x1xf32, #tpu.memory_space<vmem>>, %arg23: memref<1x88x1xf32, #tpu.memory_space<vmem>>) attributes {dimension_semantics = [#tpu.dimension_semantics<parallel>], iteration_bounds = array<i64: 2>, scalar_prefetch = 0 : i64, scratch_operands = 0 : i64, tpu.core_type = #tpu.core_type<tc>, window_params = [{transform_indices = @transform_0, window_bounds = array<i64: 1, 5, 324>}, {pipeline_mode = #tpu.pipeline_mode<synchronous>, transform_indices = @transform_1, window_bounds = array<i64: 8, 27>}, {pipeline_mode = #tpu.pipeline_mode<synchronous>, transform_indices = @transform_2, window_bounds = array<i64: 8, 1>}, {pipeline_mode = #tpu.pipeline_mode<synchronous>, transform_indices = @transform_3, window_bounds = array<i64: 8, 1>}, {pipeline_mode = #tpu.pipeline_mode<synchronous>, transform_indices = @transform_4, window_bounds = array<i64: 8, 72>}, {pipeline_mode = #tpu.pipeline_mode<synchronous>, transform_indices = @transform_5, window_bounds = array<i64: 8, 1>}, {pipeline_mode = #tpu.pipeline_mode<synchronous>, transform_indices = @transform_6, window_bounds = array<i64: 8, 1>}, {pipeline_mode = #tpu.pipeline_mode<synchronous>, transform_indices = @transform_7, window_bounds = array<i64: 8, 24>}, {pipeline_mode = #tpu.pipeline_mode<synchronous>, transform_indices = @transform_8, window_bounds = array<i64: 8, 1>}, {pipeline_mode = #tpu.pipeline_mode<synchronous>, transform_indices = @transform_9, window_bounds = array<i64: 8, 1>}, {pipeline_mode = #tpu.pipeline_mode<synchronous>, transform_indices = @transform_10, window_bounds = array<i64: 8, 24>}, {pipeline_mode = #tpu.pipeline_mode<synchronous>, transform_indices = @transform_11, window_bounds = array<i64: 8, 1>}, {pipeline_mode = #tpu.pipeline_mode<synchronous>, transform_indices = @transform_12, window_bounds = array<i64: 8, 1>}, {pipeline_mode = #tpu.pipeline_mode<synchronous>, transform_indices = @transform_13, window_bounds = array<i64: 16, 200>}, {pipeline_mode = #tpu.pipeline_mode<synchronous>, transform_indices = @transform_14, window_bounds = array<i64: 16, 1>}, {pipeline_mode = #tpu.pipeline_mode<synchronous>, transform_indices = @transform_15, window_bounds = array<i64: 16, 1>}, {pipeline_mode = #tpu.pipeline_mode<synchronous>, transform_indices = @transform_16, window_bounds = array<i64: 32, 400>}, {pipeline_mode = #tpu.pipeline_mode<synchronous>, transform_indices = @transform_17, window_bounds = array<i64: 32, 1>}, {pipeline_mode = #tpu.pipeline_mode<synchronous>, transform_indices = @transform_18, window_bounds = array<i64: 32, 1>}, {pipeline_mode = #tpu.pipeline_mode<synchronous>, transform_indices = @transform_19, window_bounds = array<i64: 88, 32>}, {pipeline_mode = #tpu.pipeline_mode<synchronous>, transform_indices = @transform_20, window_bounds = array<i64: 88, 1>}, {pipeline_mode = #tpu.pipeline_mode<synchronous>, transform_indices = @transform_21, window_bounds = array<i64: 88, 1>}, {transform_indices = @transform_22, window_bounds = array<i64: 1, 88, 1>}]} {
    %c0 = arith.constant 0 : index
    %c0_0 = arith.constant 0 : index
    %c0_1 = arith.constant 0 : index
    %0 = vector.load %arg1[%c0, %c0_0, %c0_1] : memref<1x5x324xf32, #tpu.memory_space<vmem>>, vector<1x5x324xf32>
    %1 = vector.shape_cast %0 : vector<1x5x324xf32> to vector<5x324xf32>
    %2 = vector.extract_strided_slice %1 {offsets = [0, 0], sizes = [1, 228], strides = [1, 1]} : vector<5x324xf32> to vector<1x228xf32>
    %3 = vector.extract_strided_slice %1 {offsets = [0, 48], sizes = [1, 228], strides = [1, 1]} : vector<5x324xf32> to vector<1x228xf32>
    %4 = vector.extract_strided_slice %1 {offsets = [0, 96], sizes = [1, 228], strides = [1, 1]} : vector<5x324xf32> to vector<1x228xf32>
    %5 = tpu.concatenate %2, %3, %4 in 0 : vector<1x228xf32>, vector<1x228xf32>, vector<1x228xf32> -> vector<3x228xf32>
    %6 = vector.extract_strided_slice %1 {offsets = [1, 0], sizes = [1, 228], strides = [1, 1]} : vector<5x324xf32> to vector<1x228xf32>
    %7 = vector.extract_strided_slice %1 {offsets = [1, 48], sizes = [1, 228], strides = [1, 1]} : vector<5x324xf32> to vector<1x228xf32>
    %8 = vector.extract_strided_slice %1 {offsets = [1, 96], sizes = [1, 228], strides = [1, 1]} : vector<5x324xf32> to vector<1x228xf32>
    %9 = tpu.concatenate %6, %7, %8 in 0 : vector<1x228xf32>, vector<1x228xf32>, vector<1x228xf32> -> vector<3x228xf32>
    %10 = vector.extract_strided_slice %1 {offsets = [2, 0], sizes = [1, 228], strides = [1, 1]} : vector<5x324xf32> to vector<1x228xf32>
    %11 = vector.extract_strided_slice %1 {offsets = [2, 48], sizes = [1, 228], strides = [1, 1]} : vector<5x324xf32> to vector<1x228xf32>
    %12 = vector.extract_strided_slice %1 {offsets = [2, 96], sizes = [1, 228], strides = [1, 1]} : vector<5x324xf32> to vector<1x228xf32>
    %13 = tpu.concatenate %10, %11, %12 in 0 : vector<1x228xf32>, vector<1x228xf32>, vector<1x228xf32> -> vector<3x228xf32>
    %14 = vector.extract_strided_slice %1 {offsets = [3, 0], sizes = [1, 228], strides = [1, 1]} : vector<5x324xf32> to vector<1x228xf32>
    %15 = vector.extract_strided_slice %1 {offsets = [3, 48], sizes = [1, 228], strides = [1, 1]} : vector<5x324xf32> to vector<1x228xf32>
    %16 = vector.extract_strided_slice %1 {offsets = [3, 96], sizes = [1, 228], strides = [1, 1]} : vector<5x324xf32> to vector<1x228xf32>
    %17 = tpu.concatenate %14, %15, %16 in 0 : vector<1x228xf32>, vector<1x228xf32>, vector<1x228xf32> -> vector<3x228xf32>
    %18 = vector.extract_strided_slice %1 {offsets = [4, 0], sizes = [1, 228], strides = [1, 1]} : vector<5x324xf32> to vector<1x228xf32>
    %19 = vector.extract_strided_slice %1 {offsets = [4, 48], sizes = [1, 228], strides = [1, 1]} : vector<5x324xf32> to vector<1x228xf32>
    %20 = vector.extract_strided_slice %1 {offsets = [4, 96], sizes = [1, 228], strides = [1, 1]} : vector<5x324xf32> to vector<1x228xf32>
    %21 = tpu.concatenate %18, %19, %20 in 0 : vector<1x228xf32>, vector<1x228xf32>, vector<1x228xf32> -> vector<3x228xf32>
    %c0_2 = arith.constant 0 : index
    %c0_3 = arith.constant 0 : index
    %22 = vector.load %arg2[%c0_2, %c0_3] : memref<8x27xf32, #tpu.memory_space<vmem>>, vector<8x27xf32>
    %23 = vector.extract_strided_slice %5 {offsets = [0, 0], sizes = [3, 226], strides = [1, 1]} : vector<3x228xf32> to vector<3x226xf32>
    %24 = vector.extract_strided_slice %5 {offsets = [0, 1], sizes = [3, 226], strides = [1, 1]} : vector<3x228xf32> to vector<3x226xf32>
    %25 = vector.extract_strided_slice %5 {offsets = [0, 2], sizes = [3, 226], strides = [1, 1]} : vector<3x228xf32> to vector<3x226xf32>
    %26 = vector.extract_strided_slice %9 {offsets = [0, 0], sizes = [3, 226], strides = [1, 1]} : vector<3x228xf32> to vector<3x226xf32>
    %27 = vector.extract_strided_slice %9 {offsets = [0, 1], sizes = [3, 226], strides = [1, 1]} : vector<3x228xf32> to vector<3x226xf32>
    %28 = vector.extract_strided_slice %9 {offsets = [0, 2], sizes = [3, 226], strides = [1, 1]} : vector<3x228xf32> to vector<3x226xf32>
    %29 = vector.extract_strided_slice %13 {offsets = [0, 0], sizes = [3, 226], strides = [1, 1]} : vector<3x228xf32> to vector<3x226xf32>
    %30 = vector.extract_strided_slice %13 {offsets = [0, 1], sizes = [3, 226], strides = [1, 1]} : vector<3x228xf32> to vector<3x226xf32>
    %31 = vector.extract_strided_slice %13 {offsets = [0, 2], sizes = [3, 226], strides = [1, 1]} : vector<3x228xf32> to vector<3x226xf32>
    %32 = tpu.concatenate %23, %24, %25, %26, %27, %28, %29, %30, %31 in 0 : vector<3x226xf32>, vector<3x226xf32>, vector<3x226xf32>, vector<3x226xf32>, vector<3x226xf32>, vector<3x226xf32>, vector<3x226xf32>, vector<3x226xf32>, vector<3x226xf32> -> vector<27x226xf32>
    %cst = arith.constant dense<0.000000e+00> : vector<8x226xf32>
    %33 = tpu.matmul %22, %32, %cst {dimension_numbers = #tpu.dot_dimension_numbers<[1], [0], [0], [1], [0, 0, 1, 1], [], []>} : vector<8x27xf32>, vector<27x226xf32>, vector<8x226xf32> -> vector<8x226xf32>
    %34 = vector.extract_strided_slice %9 {offsets = [0, 0], sizes = [3, 226], strides = [1, 1]} : vector<3x228xf32> to vector<3x226xf32>
    %35 = vector.extract_strided_slice %9 {offsets = [0, 1], sizes = [3, 226], strides = [1, 1]} : vector<3x228xf32> to vector<3x226xf32>
    %36 = vector.extract_strided_slice %9 {offsets = [0, 2], sizes = [3, 226], strides = [1, 1]} : vector<3x228xf32> to vector<3x226xf32>
    %37 = vector.extract_strided_slice %13 {offsets = [0, 0], sizes = [3, 226], strides = [1, 1]} : vector<3x228xf32> to vector<3x226xf32>
    %38 = vector.extract_strided_slice %13 {offsets = [0, 1], sizes = [3, 226], strides = [1, 1]} : vector<3x228xf32> to vector<3x226xf32>
    %39 = vector.extract_strided_slice %13 {offsets = [0, 2], sizes = [3, 226], strides = [1, 1]} : vector<3x228xf32> to vector<3x226xf32>
    %40 = vector.extract_strided_slice %17 {offsets = [0, 0], sizes = [3, 226], strides = [1, 1]} : vector<3x228xf32> to vector<3x226xf32>
    %41 = vector.extract_strided_slice %17 {offsets = [0, 1], sizes = [3, 226], strides = [1, 1]} : vector<3x228xf32> to vector<3x226xf32>
    %42 = vector.extract_strided_slice %17 {offsets = [0, 2], sizes = [3, 226], strides = [1, 1]} : vector<3x228xf32> to vector<3x226xf32>
    %43 = tpu.concatenate %34, %35, %36, %37, %38, %39, %40, %41, %42 in 0 : vector<3x226xf32>, vector<3x226xf32>, vector<3x226xf32>, vector<3x226xf32>, vector<3x226xf32>, vector<3x226xf32>, vector<3x226xf32>, vector<3x226xf32>, vector<3x226xf32> -> vector<27x226xf32>
    %cst_4 = arith.constant dense<0.000000e+00> : vector<8x226xf32>
    %44 = tpu.matmul %22, %43, %cst_4 {dimension_numbers = #tpu.dot_dimension_numbers<[1], [0], [0], [1], [0, 0, 1, 1], [], []>} : vector<8x27xf32>, vector<27x226xf32>, vector<8x226xf32> -> vector<8x226xf32>
    %45 = vector.extract_strided_slice %13 {offsets = [0, 0], sizes = [3, 226], strides = [1, 1]} : vector<3x228xf32> to vector<3x226xf32>
    %46 = vector.extract_strided_slice %13 {offsets = [0, 1], sizes = [3, 226], strides = [1, 1]} : vector<3x228xf32> to vector<3x226xf32>
    %47 = vector.extract_strided_slice %13 {offsets = [0, 2], sizes = [3, 226], strides = [1, 1]} : vector<3x228xf32> to vector<3x226xf32>
    %48 = vector.extract_strided_slice %17 {offsets = [0, 0], sizes = [3, 226], strides = [1, 1]} : vector<3x228xf32> to vector<3x226xf32>
    %49 = vector.extract_strided_slice %17 {offsets = [0, 1], sizes = [3, 226], strides = [1, 1]} : vector<3x228xf32> to vector<3x226xf32>
    %50 = vector.extract_strided_slice %17 {offsets = [0, 2], sizes = [3, 226], strides = [1, 1]} : vector<3x228xf32> to vector<3x226xf32>
    %51 = vector.extract_strided_slice %21 {offsets = [0, 0], sizes = [3, 226], strides = [1, 1]} : vector<3x228xf32> to vector<3x226xf32>
    %52 = vector.extract_strided_slice %21 {offsets = [0, 1], sizes = [3, 226], strides = [1, 1]} : vector<3x228xf32> to vector<3x226xf32>
    %53 = vector.extract_strided_slice %21 {offsets = [0, 2], sizes = [3, 226], strides = [1, 1]} : vector<3x228xf32> to vector<3x226xf32>
    %54 = tpu.concatenate %45, %46, %47, %48, %49, %50, %51, %52, %53 in 0 : vector<3x226xf32>, vector<3x226xf32>, vector<3x226xf32>, vector<3x226xf32>, vector<3x226xf32>, vector<3x226xf32>, vector<3x226xf32>, vector<3x226xf32>, vector<3x226xf32> -> vector<27x226xf32>
    %cst_5 = arith.constant dense<0.000000e+00> : vector<8x226xf32>
    %55 = tpu.matmul %22, %54, %cst_5 {dimension_numbers = #tpu.dot_dimension_numbers<[1], [0], [0], [1], [0, 0, 1, 1], [], []>} : vector<8x27xf32>, vector<27x226xf32>, vector<8x226xf32> -> vector<8x226xf32>
    %c0_6 = arith.constant 0 : index
    %c0_7 = arith.constant 0 : index
    %56 = vector.load %arg3[%c0_6, %c0_7] : memref<8x1xf32, #tpu.memory_space<vmem>>, vector<8x1xf32>
    %57 = vector.broadcast %56 : vector<8x1xf32> to vector<8x226xf32>
    %58 = arith.mulf %33, %57 : vector<8x226xf32>
    %c0_8 = arith.constant 0 : index
    %c0_9 = arith.constant 0 : index
    %59 = vector.load %arg4[%c0_8, %c0_9] : memref<8x1xf32, #tpu.memory_space<vmem>>, vector<8x1xf32>
    %60 = vector.broadcast %59 : vector<8x1xf32> to vector<8x226xf32>
    %61 = arith.addf %58, %60 : vector<8x226xf32>
    %cst_10 = arith.constant 0.000000e+00 : f32
    %62 = vector.broadcast %cst_10 : f32 to vector<8x226xf32>
    %63 = arith.maximumf %61, %62 : vector<8x226xf32>
    %c0_11 = arith.constant 0 : index
    %c0_12 = arith.constant 0 : index
    %64 = vector.load %arg3[%c0_11, %c0_12] : memref<8x1xf32, #tpu.memory_space<vmem>>, vector<8x1xf32>
    %65 = vector.broadcast %64 : vector<8x1xf32> to vector<8x226xf32>
    %66 = arith.mulf %44, %65 : vector<8x226xf32>
    %c0_13 = arith.constant 0 : index
    %c0_14 = arith.constant 0 : index
    %67 = vector.load %arg4[%c0_13, %c0_14] : memref<8x1xf32, #tpu.memory_space<vmem>>, vector<8x1xf32>
    %68 = vector.broadcast %67 : vector<8x1xf32> to vector<8x226xf32>
    %69 = arith.addf %66, %68 : vector<8x226xf32>
    %cst_15 = arith.constant 0.000000e+00 : f32
    %70 = vector.broadcast %cst_15 : f32 to vector<8x226xf32>
    %71 = arith.maximumf %69, %70 : vector<8x226xf32>
    %c0_16 = arith.constant 0 : index
    %c0_17 = arith.constant 0 : index
    %72 = vector.load %arg3[%c0_16, %c0_17] : memref<8x1xf32, #tpu.memory_space<vmem>>, vector<8x1xf32>
    %73 = vector.broadcast %72 : vector<8x1xf32> to vector<8x226xf32>
    %74 = arith.mulf %55, %73 : vector<8x226xf32>
    %c0_18 = arith.constant 0 : index
    %c0_19 = arith.constant 0 : index
    %75 = vector.load %arg4[%c0_18, %c0_19] : memref<8x1xf32, #tpu.memory_space<vmem>>, vector<8x1xf32>
    %76 = vector.broadcast %75 : vector<8x1xf32> to vector<8x226xf32>
    %77 = arith.addf %74, %76 : vector<8x226xf32>
    %cst_20 = arith.constant 0.000000e+00 : f32
    %78 = vector.broadcast %cst_20 : f32 to vector<8x226xf32>
    %79 = arith.maximumf %77, %78 : vector<8x226xf32>
    %c0_21 = arith.constant 0 : index
    %c0_22 = arith.constant 0 : index
    %80 = vector.load %arg5[%c0_21, %c0_22] : memref<8x72xf32, #tpu.memory_space<vmem>>, vector<8x72xf32>
    %81 = vector.extract_strided_slice %63 {offsets = [0, 0], sizes = [8, 224], strides = [1, 1]} : vector<8x226xf32> to vector<8x224xf32>
    %82 = vector.extract_strided_slice %63 {offsets = [0, 1], sizes = [8, 224], strides = [1, 1]} : vector<8x226xf32> to vector<8x224xf32>
    %83 = vector.extract_strided_slice %63 {offsets = [0, 2], sizes = [8, 224], strides = [1, 1]} : vector<8x226xf32> to vector<8x224xf32>
    %84 = vector.extract_strided_slice %71 {offsets = [0, 0], sizes = [8, 224], strides = [1, 1]} : vector<8x226xf32> to vector<8x224xf32>
    %85 = vector.extract_strided_slice %71 {offsets = [0, 1], sizes = [8, 224], strides = [1, 1]} : vector<8x226xf32> to vector<8x224xf32>
    %86 = vector.extract_strided_slice %71 {offsets = [0, 2], sizes = [8, 224], strides = [1, 1]} : vector<8x226xf32> to vector<8x224xf32>
    %87 = vector.extract_strided_slice %79 {offsets = [0, 0], sizes = [8, 224], strides = [1, 1]} : vector<8x226xf32> to vector<8x224xf32>
    %88 = vector.extract_strided_slice %79 {offsets = [0, 1], sizes = [8, 224], strides = [1, 1]} : vector<8x226xf32> to vector<8x224xf32>
    %89 = vector.extract_strided_slice %79 {offsets = [0, 2], sizes = [8, 224], strides = [1, 1]} : vector<8x226xf32> to vector<8x224xf32>
    %90 = tpu.concatenate %81, %82, %83, %84, %85, %86, %87, %88, %89 in 0 : vector<8x224xf32>, vector<8x224xf32>, vector<8x224xf32>, vector<8x224xf32>, vector<8x224xf32>, vector<8x224xf32>, vector<8x224xf32>, vector<8x224xf32>, vector<8x224xf32> -> vector<72x224xf32>
    %cst_23 = arith.constant dense<0.000000e+00> : vector<8x224xf32>
    %91 = tpu.matmul %80, %90, %cst_23 {dimension_numbers = #tpu.dot_dimension_numbers<[1], [0], [0], [1], [0, 0, 1, 1], [], []>} : vector<8x72xf32>, vector<72x224xf32>, vector<8x224xf32> -> vector<8x224xf32>
    %c0_24 = arith.constant 0 : index
    %c0_25 = arith.constant 0 : index
    %92 = vector.load %arg6[%c0_24, %c0_25] : memref<8x1xf32, #tpu.memory_space<vmem>>, vector<8x1xf32>
    %93 = vector.broadcast %92 : vector<8x1xf32> to vector<8x224xf32>
    %94 = arith.mulf %91, %93 : vector<8x224xf32>
    %c0_26 = arith.constant 0 : index
    %c0_27 = arith.constant 0 : index
    %95 = vector.load %arg7[%c0_26, %c0_27] : memref<8x1xf32, #tpu.memory_space<vmem>>, vector<8x1xf32>
    %96 = vector.broadcast %95 : vector<8x1xf32> to vector<8x224xf32>
    %97 = arith.addf %94, %96 : vector<8x224xf32>
    %cst_28 = arith.constant 0.000000e+00 : f32
    %98 = vector.broadcast %cst_28 : f32 to vector<8x224xf32>
    %99 = arith.maximumf %97, %98 : vector<8x224xf32>
    %100 = tpu.iota {dimensions = array<i32: 0>} : vector<224x112xi32>
    %101 = tpu.iota {dimensions = array<i32: 1>} : vector<224x112xi32>
    %c2_i32 = arith.constant 2 : i32
    %102 = vector.broadcast %c2_i32 : i32 to vector<224x112xi32>
    %103 = arith.muli %102, %101 : vector<224x112xi32>
    %104 = arith.cmpi eq, %100, %103 : vector<224x112xi32>
    %105 = arith.extui %104 : vector<224x112xi1> to vector<224x112xi32>
    %106 = arith.sitofp %105 : vector<224x112xi32> to vector<224x112xf32>
    %c2_i32_29 = arith.constant 2 : i32
    %107 = vector.broadcast %c2_i32_29 : i32 to vector<224x112xi32>
    %108 = arith.muli %107, %101 : vector<224x112xi32>
    %c1_i32 = arith.constant 1 : i32
    %109 = vector.broadcast %c1_i32 : i32 to vector<224x112xi32>
    %110 = arith.addi %108, %109 : vector<224x112xi32>
    %111 = arith.cmpi eq, %100, %110 : vector<224x112xi32>
    %112 = arith.extui %111 : vector<224x112xi1> to vector<224x112xi32>
    %113 = arith.sitofp %112 : vector<224x112xi32> to vector<224x112xf32>
    %cst_30 = arith.constant dense<0.000000e+00> : vector<8x112xf32>
    %114 = tpu.matmul %99, %106, %cst_30 {dimension_numbers = #tpu.dot_dimension_numbers<[1], [0], [0], [1], [0, 0, 1, 1], [], []>} : vector<8x224xf32>, vector<224x112xf32>, vector<8x112xf32> -> vector<8x112xf32>
    %cst_31 = arith.constant dense<0.000000e+00> : vector<8x112xf32>
    %115 = tpu.matmul %99, %113, %cst_31 {dimension_numbers = #tpu.dot_dimension_numbers<[1], [0], [0], [1], [0, 0, 1, 1], [], []>} : vector<8x224xf32>, vector<224x112xf32>, vector<8x112xf32> -> vector<8x112xf32>
    %116 = arith.maximumf %114, %115 : vector<8x112xf32>
    %117 = vector.extract_strided_slice %116 {offsets = [0, 0], sizes = [8, 110], strides = [1, 1]} : vector<8x112xf32> to vector<8x110xf32>
    %118 = vector.extract_strided_slice %116 {offsets = [0, 1], sizes = [8, 110], strides = [1, 1]} : vector<8x112xf32> to vector<8x110xf32>
    %119 = vector.extract_strided_slice %116 {offsets = [0, 2], sizes = [8, 110], strides = [1, 1]} : vector<8x112xf32> to vector<8x110xf32>
    %120 = tpu.concatenate %117, %118, %119 in 0 : vector<8x110xf32>, vector<8x110xf32>, vector<8x110xf32> -> vector<24x110xf32>
    %c0_32 = arith.constant 0 : index
    %c0_33 = arith.constant 0 : index
    %121 = vector.load %arg8[%c0_32, %c0_33] : memref<8x24xf32, #tpu.memory_space<vmem>>, vector<8x24xf32>
    %cst_34 = arith.constant dense<0.000000e+00> : vector<8x110xf32>
    %122 = tpu.matmul %121, %120, %cst_34 {dimension_numbers = #tpu.dot_dimension_numbers<[1], [0], [0], [1], [0, 0, 1, 1], [], []>} : vector<8x24xf32>, vector<24x110xf32>, vector<8x110xf32> -> vector<8x110xf32>
    %c0_35 = arith.constant 0 : index
    %c0_36 = arith.constant 0 : index
    %123 = vector.load %arg9[%c0_35, %c0_36] : memref<8x1xf32, #tpu.memory_space<vmem>>, vector<8x1xf32>
    %124 = vector.broadcast %123 : vector<8x1xf32> to vector<8x110xf32>
    %125 = arith.mulf %122, %124 : vector<8x110xf32>
    %c0_37 = arith.constant 0 : index
    %c0_38 = arith.constant 0 : index
    %126 = vector.load %arg10[%c0_37, %c0_38] : memref<8x1xf32, #tpu.memory_space<vmem>>, vector<8x1xf32>
    %127 = vector.broadcast %126 : vector<8x1xf32> to vector<8x110xf32>
    %128 = arith.addf %125, %127 : vector<8x110xf32>
    %cst_39 = arith.constant 0.000000e+00 : f32
    %129 = vector.broadcast %cst_39 : f32 to vector<8x110xf32>
    %130 = arith.maximumf %128, %129 : vector<8x110xf32>
    %131 = vector.extract_strided_slice %130 {offsets = [0, 0], sizes = [8, 108], strides = [1, 1]} : vector<8x110xf32> to vector<8x108xf32>
    %132 = vector.extract_strided_slice %130 {offsets = [0, 1], sizes = [8, 108], strides = [1, 1]} : vector<8x110xf32> to vector<8x108xf32>
    %133 = vector.extract_strided_slice %130 {offsets = [0, 2], sizes = [8, 108], strides = [1, 1]} : vector<8x110xf32> to vector<8x108xf32>
    %134 = tpu.concatenate %131, %132, %133 in 0 : vector<8x108xf32>, vector<8x108xf32>, vector<8x108xf32> -> vector<24x108xf32>
    %c0_40 = arith.constant 0 : index
    %c0_41 = arith.constant 0 : index
    %135 = vector.load %arg11[%c0_40, %c0_41] : memref<8x24xf32, #tpu.memory_space<vmem>>, vector<8x24xf32>
    %cst_42 = arith.constant dense<0.000000e+00> : vector<8x108xf32>
    %136 = tpu.matmul %135, %134, %cst_42 {dimension_numbers = #tpu.dot_dimension_numbers<[1], [0], [0], [1], [0, 0, 1, 1], [], []>} : vector<8x24xf32>, vector<24x108xf32>, vector<8x108xf32> -> vector<8x108xf32>
    %c0_43 = arith.constant 0 : index
    %c0_44 = arith.constant 0 : index
    %137 = vector.load %arg12[%c0_43, %c0_44] : memref<8x1xf32, #tpu.memory_space<vmem>>, vector<8x1xf32>
    %138 = vector.broadcast %137 : vector<8x1xf32> to vector<8x108xf32>
    %139 = arith.mulf %136, %138 : vector<8x108xf32>
    %c0_45 = arith.constant 0 : index
    %c0_46 = arith.constant 0 : index
    %140 = vector.load %arg13[%c0_45, %c0_46] : memref<8x1xf32, #tpu.memory_space<vmem>>, vector<8x1xf32>
    %141 = vector.broadcast %140 : vector<8x1xf32> to vector<8x108xf32>
    %142 = arith.addf %139, %141 : vector<8x108xf32>
    %cst_47 = arith.constant 0.000000e+00 : f32
    %143 = vector.broadcast %cst_47 : f32 to vector<8x108xf32>
    %144 = arith.maximumf %142, %143 : vector<8x108xf32>
    %145 = tpu.iota {dimensions = array<i32: 0>} : vector<108x54xi32>
    %146 = tpu.iota {dimensions = array<i32: 1>} : vector<108x54xi32>
    %c2_i32_48 = arith.constant 2 : i32
    %147 = vector.broadcast %c2_i32_48 : i32 to vector<108x54xi32>
    %148 = arith.muli %147, %146 : vector<108x54xi32>
    %149 = arith.cmpi eq, %145, %148 : vector<108x54xi32>
    %150 = arith.extui %149 : vector<108x54xi1> to vector<108x54xi32>
    %151 = arith.sitofp %150 : vector<108x54xi32> to vector<108x54xf32>
    %c2_i32_49 = arith.constant 2 : i32
    %152 = vector.broadcast %c2_i32_49 : i32 to vector<108x54xi32>
    %153 = arith.muli %152, %146 : vector<108x54xi32>
    %c1_i32_50 = arith.constant 1 : i32
    %154 = vector.broadcast %c1_i32_50 : i32 to vector<108x54xi32>
    %155 = arith.addi %153, %154 : vector<108x54xi32>
    %156 = arith.cmpi eq, %145, %155 : vector<108x54xi32>
    %157 = arith.extui %156 : vector<108x54xi1> to vector<108x54xi32>
    %158 = arith.sitofp %157 : vector<108x54xi32> to vector<108x54xf32>
    %cst_51 = arith.constant dense<0.000000e+00> : vector<8x54xf32>
    %159 = tpu.matmul %144, %151, %cst_51 {dimension_numbers = #tpu.dot_dimension_numbers<[1], [0], [0], [1], [0, 0, 1, 1], [], []>} : vector<8x108xf32>, vector<108x54xf32>, vector<8x54xf32> -> vector<8x54xf32>
    %cst_52 = arith.constant dense<0.000000e+00> : vector<8x54xf32>
    %160 = tpu.matmul %144, %158, %cst_52 {dimension_numbers = #tpu.dot_dimension_numbers<[1], [0], [0], [1], [0, 0, 1, 1], [], []>} : vector<8x108xf32>, vector<108x54xf32>, vector<8x54xf32> -> vector<8x54xf32>
    %161 = arith.maximumf %159, %160 : vector<8x54xf32>
    %162 = vector.extract_strided_slice %161 {offsets = [0, 0], sizes = [8, 30], strides = [1, 1]} : vector<8x54xf32> to vector<8x30xf32>
    %163 = vector.extract_strided_slice %161 {offsets = [0, 1], sizes = [8, 30], strides = [1, 1]} : vector<8x54xf32> to vector<8x30xf32>
    %164 = vector.extract_strided_slice %161 {offsets = [0, 2], sizes = [8, 30], strides = [1, 1]} : vector<8x54xf32> to vector<8x30xf32>
    %165 = vector.extract_strided_slice %161 {offsets = [0, 3], sizes = [8, 30], strides = [1, 1]} : vector<8x54xf32> to vector<8x30xf32>
    %166 = vector.extract_strided_slice %161 {offsets = [0, 4], sizes = [8, 30], strides = [1, 1]} : vector<8x54xf32> to vector<8x30xf32>
    %167 = vector.extract_strided_slice %161 {offsets = [0, 5], sizes = [8, 30], strides = [1, 1]} : vector<8x54xf32> to vector<8x30xf32>
    %168 = vector.extract_strided_slice %161 {offsets = [0, 6], sizes = [8, 30], strides = [1, 1]} : vector<8x54xf32> to vector<8x30xf32>
    %169 = vector.extract_strided_slice %161 {offsets = [0, 7], sizes = [8, 30], strides = [1, 1]} : vector<8x54xf32> to vector<8x30xf32>
    %170 = vector.extract_strided_slice %161 {offsets = [0, 8], sizes = [8, 30], strides = [1, 1]} : vector<8x54xf32> to vector<8x30xf32>
    %171 = vector.extract_strided_slice %161 {offsets = [0, 9], sizes = [8, 30], strides = [1, 1]} : vector<8x54xf32> to vector<8x30xf32>
    %172 = vector.extract_strided_slice %161 {offsets = [0, 10], sizes = [8, 30], strides = [1, 1]} : vector<8x54xf32> to vector<8x30xf32>
    %173 = vector.extract_strided_slice %161 {offsets = [0, 11], sizes = [8, 30], strides = [1, 1]} : vector<8x54xf32> to vector<8x30xf32>
    %174 = vector.extract_strided_slice %161 {offsets = [0, 12], sizes = [8, 30], strides = [1, 1]} : vector<8x54xf32> to vector<8x30xf32>
    %175 = vector.extract_strided_slice %161 {offsets = [0, 13], sizes = [8, 30], strides = [1, 1]} : vector<8x54xf32> to vector<8x30xf32>
    %176 = vector.extract_strided_slice %161 {offsets = [0, 14], sizes = [8, 30], strides = [1, 1]} : vector<8x54xf32> to vector<8x30xf32>
    %177 = vector.extract_strided_slice %161 {offsets = [0, 15], sizes = [8, 30], strides = [1, 1]} : vector<8x54xf32> to vector<8x30xf32>
    %178 = vector.extract_strided_slice %161 {offsets = [0, 16], sizes = [8, 30], strides = [1, 1]} : vector<8x54xf32> to vector<8x30xf32>
    %179 = vector.extract_strided_slice %161 {offsets = [0, 17], sizes = [8, 30], strides = [1, 1]} : vector<8x54xf32> to vector<8x30xf32>
    %180 = vector.extract_strided_slice %161 {offsets = [0, 18], sizes = [8, 30], strides = [1, 1]} : vector<8x54xf32> to vector<8x30xf32>
    %181 = vector.extract_strided_slice %161 {offsets = [0, 19], sizes = [8, 30], strides = [1, 1]} : vector<8x54xf32> to vector<8x30xf32>
    %182 = vector.extract_strided_slice %161 {offsets = [0, 20], sizes = [8, 30], strides = [1, 1]} : vector<8x54xf32> to vector<8x30xf32>
    %183 = vector.extract_strided_slice %161 {offsets = [0, 21], sizes = [8, 30], strides = [1, 1]} : vector<8x54xf32> to vector<8x30xf32>
    %184 = vector.extract_strided_slice %161 {offsets = [0, 22], sizes = [8, 30], strides = [1, 1]} : vector<8x54xf32> to vector<8x30xf32>
    %185 = vector.extract_strided_slice %161 {offsets = [0, 23], sizes = [8, 30], strides = [1, 1]} : vector<8x54xf32> to vector<8x30xf32>
    %186 = vector.extract_strided_slice %161 {offsets = [0, 24], sizes = [8, 30], strides = [1, 1]} : vector<8x54xf32> to vector<8x30xf32>
    %187 = tpu.concatenate %162, %163, %164, %165, %166, %167, %168, %169, %170, %171, %172, %173, %174, %175, %176, %177 in 0 : vector<8x30xf32>, vector<8x30xf32>, vector<8x30xf32>, vector<8x30xf32>, vector<8x30xf32>, vector<8x30xf32>, vector<8x30xf32>, vector<8x30xf32>, vector<8x30xf32>, vector<8x30xf32>, vector<8x30xf32>, vector<8x30xf32>, vector<8x30xf32>, vector<8x30xf32>, vector<8x30xf32>, vector<8x30xf32> -> vector<128x30xf32>
    %188 = tpu.concatenate %178, %179, %180, %181, %182, %183, %184, %185, %186 in 0 : vector<8x30xf32>, vector<8x30xf32>, vector<8x30xf32>, vector<8x30xf32>, vector<8x30xf32>, vector<8x30xf32>, vector<8x30xf32>, vector<8x30xf32>, vector<8x30xf32> -> vector<72x30xf32>
    %189 = tpu.concatenate %187, %188 in 0 : vector<128x30xf32>, vector<72x30xf32> -> vector<200x30xf32>
    %c0_53 = arith.constant 0 : index
    %c0_54 = arith.constant 0 : index
    %190 = vector.load %arg14[%c0_53, %c0_54] : memref<16x200xf32, #tpu.memory_space<vmem>>, vector<16x200xf32>
    %cst_55 = arith.constant dense<0.000000e+00> : vector<16x30xf32>
    %191 = tpu.matmul %190, %189, %cst_55 {dimension_numbers = #tpu.dot_dimension_numbers<[1], [0], [0], [1], [0, 0, 1, 1], [], []>} : vector<16x200xf32>, vector<200x30xf32>, vector<16x30xf32> -> vector<16x30xf32>
    %c0_56 = arith.constant 0 : index
    %c0_57 = arith.constant 0 : index
    %192 = vector.load %arg15[%c0_56, %c0_57] : memref<16x1xf32, #tpu.memory_space<vmem>>, vector<16x1xf32>
    %193 = vector.broadcast %192 : vector<16x1xf32> to vector<16x30xf32>
    %194 = arith.mulf %191, %193 : vector<16x30xf32>
    %c0_58 = arith.constant 0 : index
    %c0_59 = arith.constant 0 : index
    %195 = vector.load %arg16[%c0_58, %c0_59] : memref<16x1xf32, #tpu.memory_space<vmem>>, vector<16x1xf32>
    %196 = vector.broadcast %195 : vector<16x1xf32> to vector<16x30xf32>
    %197 = arith.addf %194, %196 : vector<16x30xf32>
    %cst_60 = arith.constant 0.000000e+00 : f32
    %198 = vector.broadcast %cst_60 : f32 to vector<16x30xf32>
    %199 = arith.maximumf %197, %198 : vector<16x30xf32>
    %200 = vector.extract_strided_slice %199 {offsets = [0, 0], sizes = [16, 6], strides = [1, 1]} : vector<16x30xf32> to vector<16x6xf32>
    %201 = vector.extract_strided_slice %199 {offsets = [0, 1], sizes = [16, 6], strides = [1, 1]} : vector<16x30xf32> to vector<16x6xf32>
    %202 = vector.extract_strided_slice %199 {offsets = [0, 2], sizes = [16, 6], strides = [1, 1]} : vector<16x30xf32> to vector<16x6xf32>
    %203 = vector.extract_strided_slice %199 {offsets = [0, 3], sizes = [16, 6], strides = [1, 1]} : vector<16x30xf32> to vector<16x6xf32>
    %204 = vector.extract_strided_slice %199 {offsets = [0, 4], sizes = [16, 6], strides = [1, 1]} : vector<16x30xf32> to vector<16x6xf32>
    %205 = vector.extract_strided_slice %199 {offsets = [0, 5], sizes = [16, 6], strides = [1, 1]} : vector<16x30xf32> to vector<16x6xf32>
    %206 = vector.extract_strided_slice %199 {offsets = [0, 6], sizes = [16, 6], strides = [1, 1]} : vector<16x30xf32> to vector<16x6xf32>
    %207 = vector.extract_strided_slice %199 {offsets = [0, 7], sizes = [16, 6], strides = [1, 1]} : vector<16x30xf32> to vector<16x6xf32>
    %208 = vector.extract_strided_slice %199 {offsets = [0, 8], sizes = [16, 6], strides = [1, 1]} : vector<16x30xf32> to vector<16x6xf32>
    %209 = vector.extract_strided_slice %199 {offsets = [0, 9], sizes = [16, 6], strides = [1, 1]} : vector<16x30xf32> to vector<16x6xf32>
    %210 = vector.extract_strided_slice %199 {offsets = [0, 10], sizes = [16, 6], strides = [1, 1]} : vector<16x30xf32> to vector<16x6xf32>
    %211 = vector.extract_strided_slice %199 {offsets = [0, 11], sizes = [16, 6], strides = [1, 1]} : vector<16x30xf32> to vector<16x6xf32>
    %212 = vector.extract_strided_slice %199 {offsets = [0, 12], sizes = [16, 6], strides = [1, 1]} : vector<16x30xf32> to vector<16x6xf32>
    %213 = vector.extract_strided_slice %199 {offsets = [0, 13], sizes = [16, 6], strides = [1, 1]} : vector<16x30xf32> to vector<16x6xf32>
    %214 = vector.extract_strided_slice %199 {offsets = [0, 14], sizes = [16, 6], strides = [1, 1]} : vector<16x30xf32> to vector<16x6xf32>
    %215 = vector.extract_strided_slice %199 {offsets = [0, 15], sizes = [16, 6], strides = [1, 1]} : vector<16x30xf32> to vector<16x6xf32>
    %216 = vector.extract_strided_slice %199 {offsets = [0, 16], sizes = [16, 6], strides = [1, 1]} : vector<16x30xf32> to vector<16x6xf32>
    %217 = vector.extract_strided_slice %199 {offsets = [0, 17], sizes = [16, 6], strides = [1, 1]} : vector<16x30xf32> to vector<16x6xf32>
    %218 = vector.extract_strided_slice %199 {offsets = [0, 18], sizes = [16, 6], strides = [1, 1]} : vector<16x30xf32> to vector<16x6xf32>
    %219 = vector.extract_strided_slice %199 {offsets = [0, 19], sizes = [16, 6], strides = [1, 1]} : vector<16x30xf32> to vector<16x6xf32>
    %220 = vector.extract_strided_slice %199 {offsets = [0, 20], sizes = [16, 6], strides = [1, 1]} : vector<16x30xf32> to vector<16x6xf32>
    %221 = vector.extract_strided_slice %199 {offsets = [0, 21], sizes = [16, 6], strides = [1, 1]} : vector<16x30xf32> to vector<16x6xf32>
    %222 = vector.extract_strided_slice %199 {offsets = [0, 22], sizes = [16, 6], strides = [1, 1]} : vector<16x30xf32> to vector<16x6xf32>
    %223 = vector.extract_strided_slice %199 {offsets = [0, 23], sizes = [16, 6], strides = [1, 1]} : vector<16x30xf32> to vector<16x6xf32>
    %224 = vector.extract_strided_slice %199 {offsets = [0, 24], sizes = [16, 6], strides = [1, 1]} : vector<16x30xf32> to vector<16x6xf32>
    %225 = tpu.concatenate %200, %201, %202, %203, %204, %205, %206, %207, %208, %209, %210, %211, %212, %213, %214, %215 in 0 : vector<16x6xf32>, vector<16x6xf32>, vector<16x6xf32>, vector<16x6xf32>, vector<16x6xf32>, vector<16x6xf32>, vector<16x6xf32>, vector<16x6xf32>, vector<16x6xf32>, vector<16x6xf32>, vector<16x6xf32>, vector<16x6xf32>, vector<16x6xf32>, vector<16x6xf32>, vector<16x6xf32>, vector<16x6xf32> -> vector<256x6xf32>
    %226 = tpu.concatenate %216, %217, %218, %219, %220, %221, %222, %223, %224 in 0 : vector<16x6xf32>, vector<16x6xf32>, vector<16x6xf32>, vector<16x6xf32>, vector<16x6xf32>, vector<16x6xf32>, vector<16x6xf32>, vector<16x6xf32>, vector<16x6xf32> -> vector<144x6xf32>
    %227 = tpu.concatenate %225, %226 in 0 : vector<256x6xf32>, vector<144x6xf32> -> vector<400x6xf32>
    %c0_61 = arith.constant 0 : index
    %c0_62 = arith.constant 0 : index
    %228 = vector.load %arg17[%c0_61, %c0_62] : memref<32x400xf32, #tpu.memory_space<vmem>>, vector<32x400xf32>
    %cst_63 = arith.constant dense<0.000000e+00> : vector<32x6xf32>
    %229 = tpu.matmul %228, %227, %cst_63 {dimension_numbers = #tpu.dot_dimension_numbers<[1], [0], [0], [1], [0, 0, 1, 1], [], []>} : vector<32x400xf32>, vector<400x6xf32>, vector<32x6xf32> -> vector<32x6xf32>
    %c0_64 = arith.constant 0 : index
    %c0_65 = arith.constant 0 : index
    %230 = vector.load %arg18[%c0_64, %c0_65] : memref<32x1xf32, #tpu.memory_space<vmem>>, vector<32x1xf32>
    %231 = vector.broadcast %230 : vector<32x1xf32> to vector<32x6xf32>
    %232 = arith.mulf %229, %231 : vector<32x6xf32>
    %c0_66 = arith.constant 0 : index
    %c0_67 = arith.constant 0 : index
    %233 = vector.load %arg19[%c0_66, %c0_67] : memref<32x1xf32, #tpu.memory_space<vmem>>, vector<32x1xf32>
    %234 = vector.broadcast %233 : vector<32x1xf32> to vector<32x6xf32>
    %235 = arith.addf %232, %234 : vector<32x6xf32>
    %cst_68 = arith.constant 0.000000e+00 : f32
    %236 = vector.broadcast %cst_68 : f32 to vector<32x6xf32>
    %237 = arith.maximumf %235, %236 : vector<32x6xf32>
    %c0_69 = arith.constant 0 : index
    %c0_70 = arith.constant 0 : index
    %238 = vector.load %arg20[%c0_69, %c0_70] : memref<88x32xf32, #tpu.memory_space<vmem>>, vector<88x32xf32>
    %cst_71 = arith.constant dense<0.000000e+00> : vector<88x6xf32>
    %239 = tpu.matmul %238, %237, %cst_71 {dimension_numbers = #tpu.dot_dimension_numbers<[1], [0], [0], [1], [0, 0, 1, 1], [], []>} : vector<88x32xf32>, vector<32x6xf32>, vector<88x6xf32> -> vector<88x6xf32>
    %c0_72 = arith.constant 0 : index
    %c0_73 = arith.constant 0 : index
    %240 = vector.load %arg21[%c0_72, %c0_73] : memref<88x1xf32, #tpu.memory_space<vmem>>, vector<88x1xf32>
    %241 = vector.broadcast %240 : vector<88x1xf32> to vector<88x6xf32>
    %242 = arith.mulf %239, %241 : vector<88x6xf32>
    %c0_74 = arith.constant 0 : index
    %c0_75 = arith.constant 0 : index
    %243 = vector.load %arg22[%c0_74, %c0_75] : memref<88x1xf32, #tpu.memory_space<vmem>>, vector<88x1xf32>
    %244 = vector.broadcast %243 : vector<88x1xf32> to vector<88x6xf32>
    %245 = arith.addf %242, %244 : vector<88x6xf32>
    %cst_76 = arith.constant dense<0.000000e+00> : vector<88xf32>
    %246 = vector.multi_reduction <add>, %245, %cst_76 [1] : vector<88x6xf32> to vector<88xf32>
    %247 = vector.shape_cast %246 : vector<88xf32> to vector<88x1xf32>
    %cst_77 = arith.constant 6.000000e+00 : f32
    %248 = vector.broadcast %cst_77 : f32 to vector<88x1xf32>
    %249 = arith.divf %247, %248 : vector<88x1xf32>
    %250 = vector.shape_cast %249 : vector<88x1xf32> to vector<1x88x1xf32>
    %c0_78 = arith.constant 0 : index
    %c0_79 = arith.constant 0 : index
    %c0_80 = arith.constant 0 : index
    %251 = vector.load %arg23[%c0_78, %c0_79, %c0_80] : memref<1x88x1xf32, #tpu.memory_space<vmem>>, vector<1x88x1xf32>
    tpu.vector_store %arg23[%c0_78, %c0_79, %c0_80], %250 {strides = array<i32>} : memref<1x88x1xf32, #tpu.memory_space<vmem>>, vector<1x88x1xf32>,
    return
  }
  func.func @transform_0(%arg0: i32) -> (i32, i32, i32) {
    %c0_i32 = arith.constant 0 : i32
    %c0_i32_0 = arith.constant 0 : i32
    %c0_i32_1 = arith.constant 0 : i32
    return %arg0, %c0_i32, %c0_i32_0 : i32, i32, i32
  }
  func.func @transform_1(%arg0: i32) -> (i32, i32) {
    %c0_i32 = arith.constant 0 : i32
    %c0_i32_0 = arith.constant 0 : i32
    %c0_i32_1 = arith.constant 0 : i32
    return %c0_i32, %c0_i32_0 : i32, i32
  }
  func.func @transform_2(%arg0: i32) -> (i32, i32) {
    %c0_i32 = arith.constant 0 : i32
    %c0_i32_0 = arith.constant 0 : i32
    %c0_i32_1 = arith.constant 0 : i32
    return %c0_i32, %c0_i32_0 : i32, i32
  }
  func.func @transform_3(%arg0: i32) -> (i32, i32) {
    %c0_i32 = arith.constant 0 : i32
    %c0_i32_0 = arith.constant 0 : i32
    %c0_i32_1 = arith.constant 0 : i32
    return %c0_i32, %c0_i32_0 : i32, i32
  }
  func.func @transform_4(%arg0: i32) -> (i32, i32) {
    %c0_i32 = arith.constant 0 : i32
    %c0_i32_0 = arith.constant 0 : i32
    %c0_i32_1 = arith.constant 0 : i32
    return %c0_i32, %c0_i32_0 : i32, i32
  }
  func.func @transform_5(%arg0: i32) -> (i32, i32) {
    %c0_i32 = arith.constant 0 : i32
    %c0_i32_0 = arith.constant 0 : i32
    %c0_i32_1 = arith.constant 0 : i32
    return %c0_i32, %c0_i32_0 : i32, i32
  }
  func.func @transform_6(%arg0: i32) -> (i32, i32) {
    %c0_i32 = arith.constant 0 : i32
    %c0_i32_0 = arith.constant 0 : i32
    %c0_i32_1 = arith.constant 0 : i32
    return %c0_i32, %c0_i32_0 : i32, i32
  }
  func.func @transform_7(%arg0: i32) -> (i32, i32) {
    %c0_i32 = arith.constant 0 : i32
    %c0_i32_0 = arith.constant 0 : i32
    %c0_i32_1 = arith.constant 0 : i32
    return %c0_i32, %c0_i32_0 : i32, i32
  }
  func.func @transform_8(%arg0: i32) -> (i32, i32) {
    %c0_i32 = arith.constant 0 : i32
    %c0_i32_0 = arith.constant 0 : i32
    %c0_i32_1 = arith.constant 0 : i32
    return %c0_i32, %c0_i32_0 : i32, i32
  }
  func.func @transform_9(%arg0: i32) -> (i32, i32) {
    %c0_i32 = arith.constant 0 : i32
    %c0_i32_0 = arith.constant 0 : i32
    %c0_i32_1 = arith.constant 0 : i32
    return %c0_i32, %c0_i32_0 : i32, i32
  }
  func.func @transform_10(%arg0: i32) -> (i32, i32) {
    %c0_i32 = arith.constant 0 : i32
    %c0_i32_0 = arith.constant 0 : i32
    %c0_i32_1 = arith.constant 0 : i32
    return %c0_i32, %c0_i32_0 : i32, i32
  }
  func.func @transform_11(%arg0: i32) -> (i32, i32) {
    %c0_i32 = arith.constant 0 : i32
    %c0_i32_0 = arith.constant 0 : i32
    %c0_i32_1 = arith.constant 0 : i32
    return %c0_i32, %c0_i32_0 : i32, i32
  }
  func.func @transform_12(%arg0: i32) -> (i32, i32) {
    %c0_i32 = arith.constant 0 : i32
    %c0_i32_0 = arith.constant 0 : i32
    %c0_i32_1 = arith.constant 0 : i32
    return %c0_i32, %c0_i32_0 : i32, i32
  }
  func.func @transform_13(%arg0: i32) -> (i32, i32) {
    %c0_i32 = arith.constant 0 : i32
    %c0_i32_0 = arith.constant 0 : i32
    %c0_i32_1 = arith.constant 0 : i32
    return %c0_i32, %c0_i32_0 : i32, i32
  }
  func.func @transform_14(%arg0: i32) -> (i32, i32) {
    %c0_i32 = arith.constant 0 : i32
    %c0_i32_0 = arith.constant 0 : i32
    %c0_i32_1 = arith.constant 0 : i32
    return %c0_i32, %c0_i32_0 : i32, i32
  }
  func.func @transform_15(%arg0: i32) -> (i32, i32) {
    %c0_i32 = arith.constant 0 : i32
    %c0_i32_0 = arith.constant 0 : i32
    %c0_i32_1 = arith.constant 0 : i32
    return %c0_i32, %c0_i32_0 : i32, i32
  }
  func.func @transform_16(%arg0: i32) -> (i32, i32) {
    %c0_i32 = arith.constant 0 : i32
    %c0_i32_0 = arith.constant 0 : i32
    %c0_i32_1 = arith.constant 0 : i32
    return %c0_i32, %c0_i32_0 : i32, i32
  }
  func.func @transform_17(%arg0: i32) -> (i32, i32) {
    %c0_i32 = arith.constant 0 : i32
    %c0_i32_0 = arith.constant 0 : i32
    %c0_i32_1 = arith.constant 0 : i32
    return %c0_i32, %c0_i32_0 : i32, i32
  }
  func.func @transform_18(%arg0: i32) -> (i32, i32) {
    %c0_i32 = arith.constant 0 : i32
    %c0_i32_0 = arith.constant 0 : i32
    %c0_i32_1 = arith.constant 0 : i32
    return %c0_i32, %c0_i32_0 : i32, i32
  }
  func.func @transform_19(%arg0: i32) -> (i32, i32) {
    %c0_i32 = arith.constant 0 : i32
    %c0_i32_0 = arith.constant 0 : i32
    %c0_i32_1 = arith.constant 0 : i32
    return %c0_i32, %c0_i32_0 : i32, i32
  }
  func.func @transform_20(%arg0: i32) -> (i32, i32) {
    %c0_i32 = arith.constant 0 : i32
    %c0_i32_0 = arith.constant 0 : i32
    %c0_i32_1 = arith.constant 0 : i32
    return %c0_i32, %c0_i32_0 : i32, i32
  }
  func.func @transform_21(%arg0: i32) -> (i32, i32) {
    %c0_i32 = arith.constant 0 : i32
    %c0_i32_0 = arith.constant 0 : i32
    %c0_i32_1 = arith.constant 0 : i32
    return %c0_i32, %c0_i32_0 : i32, i32
  }
  func.func @transform_22(%arg0: i32) -> (i32, i32, i32) {
    %c0_i32 = arith.constant 0 : i32
    %c0_i32_0 = arith.constant 0 : i32
    %c0_i32_1 = arith.constant 0 : i32
    return %arg0, %c0_i32, %c0_i32_0 : i32, i32, i32
  }
}

</mosaic_0001>

<llo_original>
// kernel: all_conv_2016_forward.1
$region0: #{all_conv_2016_forward.1}
  #allocation0 [shape = 'u32[]', space=smem, size = 0x4, offset = 0x4, fixed_abs, tag = 'smem constant byte address 0x4 - core index']
  #allocation1 [shape = 'u32[144,128]{1,0:T(1,128)}', space=vmem, size = 0x12000, scoped, tag = 'internal scratch']
  %s0 = inlined_call_operand.vmem [shape: f32[2,5,324], index: 0, kind: input, shape index: {}]
  %s1 = inlined_call_operand.vmem [shape: f32[8,27], index: 1, kind: input, shape index: {}]
  %s2 = inlined_call_operand.vmem [shape: f32[8,1], index: 2, kind: input, shape index: {}]
  %s3 = inlined_call_operand.vmem [shape: f32[8,1], index: 3, kind: input, shape index: {}]
  %s4 = inlined_call_operand.vmem [shape: f32[8,72], index: 4, kind: input, shape index: {}]
  %s5 = inlined_call_operand.vmem [shape: f32[8,1], index: 5, kind: input, shape index: {}]
  %s6 = inlined_call_operand.vmem [shape: f32[8,1], index: 6, kind: input, shape index: {}]
  %s7 = inlined_call_operand.vmem [shape: f32[8,24], index: 7, kind: input, shape index: {}]
  %s8 = inlined_call_operand.vmem [shape: f32[8,1], index: 8, kind: input, shape index: {}]
  %s9 = inlined_call_operand.vmem [shape: f32[8,1], index: 9, kind: input, shape index: {}]
  %s10 = inlined_call_operand.vmem [shape: f32[8,24], index: 10, kind: input, shape index: {}]
  %s11 = inlined_call_operand.vmem [shape: f32[8,1], index: 11, kind: input, shape index: {}]
  %s12 = inlined_call_operand.vmem [shape: f32[8,1], index: 12, kind: input, shape index: {}]
  %s13 = inlined_call_operand.vmem [shape: f32[16,200], index: 13, kind: input, shape index: {}]
  %s14 = inlined_call_operand.vmem [shape: f32[16,1], index: 14, kind: input, shape index: {}]
  %s15 = inlined_call_operand.vmem [shape: f32[16,1], index: 15, kind: input, shape index: {}]
  %s16 = inlined_call_operand.vmem [shape: f32[32,400], index: 16, kind: input, shape index: {}]
  %s17 = inlined_call_operand.vmem [shape: f32[32,1], index: 17, kind: input, shape index: {}]
  %s18 = inlined_call_operand.vmem [shape: f32[32,1], index: 18, kind: input, shape index: {}]
  %s19 = inlined_call_operand.vmem [shape: f32[88,32], index: 19, kind: input, shape index: {}]
  %s20 = inlined_call_operand.vmem [shape: f32[88,1], index: 20, kind: input, shape index: {}]
  %s21 = inlined_call_operand.vmem [shape: f32[88,1], index: 21, kind: input, shape index: {}]
  %s22 = inlined_call_operand.vmem [shape: f32[2,88,1], index: 22, kind: output, shape index: {}]
  %s23 = sld [smem:[#allocation0]]
  $region121: #{all_conv_2016_forward.1} parent=0
    _
  %s25 = ssub.s32 1, %s23
  %s26 = scalar_select 0, %s25, %s23
  loop: start=0, step=1, limit=4
  $region2: #{all_conv_2016_forward.1} parent=0 // loop_pre_header
    _
  $region3: #{all_conv_2016_forward.1} parent=0 // loop_header
    %s28 = sphi 0, %s32
    %p29 = scmp.ge.s32.totalorder %s28, 4
    %s38 = sphi 0, %s40
    %s41 = sphi 0, %s38
    %s42 = sphi 0, %s41
    %s58 = sphi 0, %s42
    %s62 = sphi 0, %s62
    %s64 = sphi 0, %s62
    %s65 = sphi 0, %s64
    %s79 = sphi 0, %s65
    %s83 = sphi 0, %s83
    %s85 = sphi 0, %s83
    %s86 = sphi 0, %s85
    %s100 = sphi 0, %s86
    %s104 = sphi 0, %s104
    %s106 = sphi 0, %s104
    %s107 = sphi 0, %s106
    %s121 = sphi 0, %s107
    %s125 = sphi 0, %s125
    %s127 = sphi 0, %s125
    %s128 = sphi 0, %s127
    %s142 = sphi 0, %s128
    %s146 = sphi 0, %s146
    %s148 = sphi 0, %s146
    %s149 = sphi 0, %s148
    %s163 = sphi 0, %s149
    %s167 = sphi 0, %s167
    %s169 = sphi 0, %s167
    %s170 = sphi 0, %s169
    %s184 = sphi 0, %s170
    %s188 = sphi 0, %s188
    %s190 = sphi 0, %s188
    %s191 = sphi 0, %s190
    %s205 = sphi 0, %s191
    %s209 = sphi 0, %s209
    %s211 = sphi 0, %s209
    %s212 = sphi 0, %s211
    %s226 = sphi 0, %s212
    %s230 = sphi 0, %s230
    %s232 = sphi 0, %s230
    %s233 = sphi 0, %s232
    %s247 = sphi 0, %s233
    %s251 = sphi 0, %s251
    %s253 = sphi 0, %s251
    %s254 = sphi 0, %s253
    %s268 = sphi 0, %s254
    %s272 = sphi 0, %s272
    %s274 = sphi 0, %s272
    %s275 = sphi 0, %s274
    %s289 = sphi 0, %s275
    %s293 = sphi 0, %s293
    %s295 = sphi 0, %s293
    %s296 = sphi 0, %s295
    %s310 = sphi 0, %s296
    %s314 = sphi 0, %s314
    %s316 = sphi 0, %s314
    %s317 = sphi 0, %s316
    %s331 = sphi 0, %s317
    %s335 = sphi 0, %s335
    %s337 = sphi 0, %s335
    %s338 = sphi 0, %s337
    %s352 = sphi 0, %s338
    %s356 = sphi 0, %s356
    %s358 = sphi 0, %s356
    %s359 = sphi 0, %s358
    %s373 = sphi 0, %s359
    %s377 = sphi 0, %s377
    %s379 = sphi 0, %s377
    %s380 = sphi 0, %s379
    %s394 = sphi 0, %s380
    %s398 = sphi 0, %s398
    %s400 = sphi 0, %s398
    %s401 = sphi 0, %s400
    %s415 = sphi 0, %s401
    %s419 = sphi 0, %s419
    %s421 = sphi 0, %s419
    %s422 = sphi 0, %s421
    %s436 = sphi 0, %s422
    %s440 = sphi 0, %s440
    %s442 = sphi 0, %s440
    %s443 = sphi 0, %s442
    %s457 = sphi 0, %s443
    %s461 = sphi 0, %s461
    %s463 = sphi 0, %s461
    %s464 = sphi 0, %s463
    %s478 = sphi 0, %s464
    %s482 = sphi 0, %s482
    %s484 = sphi 0, %s482
    %s485 = sphi 0, %s484
    %s499 = sphi 0, %s485
    %s505 = sphi 0, %s507
    %s508 = sphi 0, %s505
    %s509 = sphi 0, %s508
    %s525 = sphi 0, %s509
  $region4: #{all_conv_2016_forward.1} parent=0 // loop_header_branch
    %31 = sbr.rel (%p29) target = $region8
  $region5: #{all_conv_2016_forward.1} parent=0 // loop_body
    %s33 = ssub.s32 %s28, 1
    %s34 = ssub.s32 %s28, 2
    %s35 = sadd.s32 %s28, 1
    %s36 = ssub.s32 %s28, %s35
    %p37 = scmp.eq.s32.totalorder %s36, 0
    %s39 = sadd.s32 %s38, 1
    %s40 = scalar_select %p37, %s38, %s39
    %p43 = pneg %p37
    %p44 = scmp.eq.s32.totalorder %s28, 1
    %p45 = por %p43, %p44
    %p46 = scmp.ne.s32.totalorder %s38, %s41
    %p47 = scmp.eq.s32.totalorder %s28, 0
    %p48 = por %p46, %p47
    %p49 = scmp.ne.s32.totalorder %s38, %s41
    %p50 = scmp.eq.s32.totalorder %s33, 1
    %p51 = por %p49, %p50
    %p52 = scmp.ne.s32.totalorder %s41, %s42
    %p53 = scmp.eq.s32.totalorder %s33, 0
    %p54 = por %p52, %p53
    %p55 = scmp.ne.s32.totalorder %s41, %s42
    %p56 = scmp.eq.s32.totalorder %s34, 1
    %p57 = por %p55, %p56
    %p59 = scmp.ne.s32.totalorder %s42, %s58
    %p60 = scmp.eq.s32.totalorder %s34, 0
    %p61 = por %p59, %p60
    %s63 = sadd.s32 %s62, 1
    %p66 = scmp.eq.s32.totalorder %s28, 1
    %p67 = scmp.ne.s32.totalorder %s62, %s64
    %p68 = scmp.eq.s32.totalorder %s28, 0
    %p69 = por %p67, %p68
    %p70 = scmp.ne.s32.totalorder %s62, %s64
    %p71 = scmp.eq.s32.totalorder %s33, 1
    %p72 = por %p70, %p71
    %p73 = scmp.ne.s32.totalorder %s64, %s65
    %p74 = scmp.eq.s32.totalorder %s33, 0
    %p75 = por %p73, %p74
    %p76 = scmp.ne.s32.totalorder %s64, %s65
    %p77 = scmp.eq.s32.totalorder %s34, 1
    %p78 = por %p76, %p77
    %p80 = scmp.ne.s32.totalorder %s65, %s79
    %p81 = scmp.eq.s32.totalorder %s34, 0
    %p82 = por %p80, %p81
    %s84 = sadd.s32 %s83, 1
    %p87 = scmp.eq.s32.totalorder %s28, 1
    %p88 = scmp.ne.s32.totalorder %s83, %s85
    %p89 = scmp.eq.s32.totalorder %s28, 0
    %p90 = por %p88, %p89
    %p91 = scmp.ne.s32.totalorder %s83, %s85
    %p92 = scmp.eq.s32.totalorder %s33, 1
    %p93 = por %p91, %p92
    %p94 = scmp.ne.s32.totalorder %s85, %s86
    %p95 = scmp.eq.s32.totalorder %s33, 0
    %p96 = por %p94, %p95
    %p97 = scmp.ne.s32.totalorder %s85, %s86
    %p98 = scmp.eq.s32.totalorder %s34, 1
    %p99 = por %p97, %p98
    %p101 = scmp.ne.s32.totalorder %s86, %s100
    %p102 = scmp.eq.s32.totalorder %s34, 0
    %p103 = por %p101, %p102
    %s105 = sadd.s32 %s104, 1
    %p108 = scmp.eq.s32.totalorder %s28, 1
    %p109 = scmp.ne.s32.totalorder %s104, %s106
    %p110 = scmp.eq.s32.totalorder %s28, 0
    %p111 = por %p109, %p110
    %p112 = scmp.ne.s32.totalorder %s104, %s106
    %p113 = scmp.eq.s32.totalorder %s33, 1
    %p114 = por %p112, %p113
    %p115 = scmp.ne.s32.totalorder %s106, %s107
    %p116 = scmp.eq.s32.totalorder %s33, 0
    %p117 = por %p115, %p116
    %p118 = scmp.ne.s32.totalorder %s106, %s107
    %p119 = scmp.eq.s32.totalorder %s34, 1
    %p120 = por %p118, %p119
    %p122 = scmp.ne.s32.totalorder %s107, %s121
    %p123 = scmp.eq.s32.totalorder %s34, 0
    %p124 = por %p122, %p123
    %s126 = sadd.s32 %s125, 1
    %p129 = scmp.eq.s32.totalorder %s28, 1
    %p130 = scmp.ne.s32.totalorder %s125, %s127
    %p131 = scmp.eq.s32.totalorder %s28, 0
    %p132 = por %p130, %p131
    %p133 = scmp.ne.s32.totalorder %s125, %s127
    %p134 = scmp.eq.s32.totalorder %s33, 1
    %p135 = por %p133, %p134
    %p136 = scmp.ne.s32.totalorder %s127, %s128
    %p137 = scmp.eq.s32.totalorder %s33, 0
    %p138 = por %p136, %p137
    %p139 = scmp.ne.s32.totalorder %s127, %s128
    %p140 = scmp.eq.s32.totalorder %s34, 1
    %p141 = por %p139, %p140
    %p143 = scmp.ne.s32.totalorder %s128, %s142
    %p144 = scmp.eq.s32.totalorder %s34, 0
    %p145 = por %p143, %p144
    %s147 = sadd.s32 %s146, 1
    %p150 = scmp.eq.s32.totalorder %s28, 1
    %p151 = scmp.ne.s32.totalorder %s146, %s148
    %p152 = scmp.eq.s32.totalorder %s28, 0
    %p153 = por %p151, %p152
    %p154 = scmp.ne.s32.totalorder %s146, %s148
    %p155 = scmp.eq.s32.totalorder %s33, 1
    %p156 = por %p154, %p155
    %p157 = scmp.ne.s32.totalorder %s148, %s149
    %p158 = scmp.eq.s32.totalorder %s33, 0
    %p159 = por %p157, %p158
    %p160 = scmp.ne.s32.totalorder %s148, %s149
    %p161 = scmp.eq.s32.totalorder %s34, 1
    %p162 = por %p160, %p161
    %p164 = scmp.ne.s32.totalorder %s149, %s163
    %p165 = scmp.eq.s32.totalorder %s34, 0
    %p166 = por %p164, %p165
    %s168 = sadd.s32 %s167, 1
    %p171 = scmp.eq.s32.totalorder %s28, 1
    %p172 = scmp.ne.s32.totalorder %s167, %s169
    %p173 = scmp.eq.s32.totalorder %s28, 0
    %p174 = por %p172, %p173
    %p175 = scmp.ne.s32.totalorder %s167, %s169
    %p176 = scmp.eq.s32.totalorder %s33, 1
    %p177 = por %p175, %p176
    %p178 = scmp.ne.s32.totalorder %s169, %s170
    %p179 = scmp.eq.s32.totalorder %s33, 0
    %p180 = por %p178, %p179
    %p181 = scmp.ne.s32.totalorder %s169, %s170
    %p182 = scmp.eq.s32.totalorder %s34, 1
    %p183 = por %p181, %p182
    %p185 = scmp.ne.s32.totalorder %s170, %s184
    %p186 = scmp.eq.s32.totalorder %s34, 0
    %p187 = por %p185, %p186
    %s189 = sadd.s32 %s188, 1
    %p192 = scmp.eq.s32.totalorder %s28, 1
    %p193 = scmp.ne.s32.totalorder %s188, %s190
    %p194 = scmp.eq.s32.totalorder %s28, 0
    %p195 = por %p193, %p194
    %p196 = scmp.ne.s32.totalorder %s188, %s190
    %p197 = scmp.eq.s32.totalorder %s33, 1
    %p198 = por %p196, %p197
    %p199 = scmp.ne.s32.totalorder %s190, %s191
    %p200 = scmp.eq.s32.totalorder %s33, 0
    %p201 = por %p199, %p200
    %p202 = scmp.ne.s32.totalorder %s190, %s191
    %p203 = scmp.eq.s32.totalorder %s34, 1
    %p204 = por %p202, %p203
    %p206 = scmp.ne.s32.totalorder %s191, %s205
    %p207 = scmp.eq.s32.totalorder %s34, 0
    %p208 = por %p206, %p207
    %s210 = sadd.s32 %s209, 1
    %p213 = scmp.eq.s32.totalorder %s28, 1
    %p214 = scmp.ne.s32.totalorder %s209, %s211
    %p215 = scmp.eq.s32.totalorder %s28, 0
    %p216 = por %p214, %p215
    %p217 = scmp.ne.s32.totalorder %s209, %s211
    %p218 = scmp.eq.s32.totalorder %s33, 1
    %p219 = por %p217, %p218
    %p220 = scmp.ne.s32.totalorder %s211, %s212
    %p221 = scmp.eq.s32.totalorder %s33, 0
    %p222 = por %p220, %p221
    %p223 = scmp.ne.s32.totalorder %s211, %s212
    %p224 = scmp.eq.s32.totalorder %s34, 1
    %p225 = por %p223, %p224
    %p227 = scmp.ne.s32.totalorder %s212, %s226
    %p228 = scmp.eq.s32.totalorder %s34, 0
    %p229 = por %p227, %p228
    %s231 = sadd.s32 %s230, 1
    %p234 = scmp.eq.s32.totalorder %s28, 1
    %p235 = scmp.ne.s32.totalorder %s230, %s232
    %p236 = scmp.eq.s32.totalorder %s28, 0
    %p237 = por %p235, %p236
    %p238 = scmp.ne.s32.totalorder %s230, %s232
    %p239 = scmp.eq.s32.totalorder %s33, 1
    %p240 = por %p238, %p239
    %p241 = scmp.ne.s32.totalorder %s232, %s233
    %p242 = scmp.eq.s32.totalorder %s33, 0
    %p243 = por %p241, %p242
    %p244 = scmp.ne.s32.totalorder %s232, %s233
    %p245 = scmp.eq.s32.totalorder %s34, 1
    %p246 = por %p244, %p245
    %p248 = scmp.ne.s32.totalorder %s233, %s247
    %p249 = scmp.eq.s32.totalorder %s34, 0
    %p250 = por %p248, %p249
    %s252 = sadd.s32 %s251, 1
    %p255 = scmp.eq.s32.totalorder %s28, 1
    %p256 = scmp.ne.s32.totalorder %s251, %s253
    %p257 = scmp.eq.s32.totalorder %s28, 0
    %p258 = por %p256, %p257
    %p259 = scmp.ne.s32.totalorder %s251, %s253
    %p260 = scmp.eq.s32.totalorder %s33, 1
    %p261 = por %p259, %p260
    %p262 = scmp.ne.s32.totalorder %s253, %s254
    %p263 = scmp.eq.s32.totalorder %s33, 0
    %p264 = por %p262, %p263
    %p265 = scmp.ne.s32.totalorder %s253, %s254
    %p266 = scmp.eq.s32.totalorder %s34, 1
    %p267 = por %p265, %p266
    %p269 = scmp.ne.s32.totalorder %s254, %s268
    %p270 = scmp.eq.s32.totalorder %s34, 0
    %p271 = por %p269, %p270
    %s273 = sadd.s32 %s272, 1
    %p276 = scmp.eq.s32.totalorder %s28, 1
    %p277 = scmp.ne.s32.totalorder %s272, %s274
    %p278 = scmp.eq.s32.totalorder %s28, 0
    %p279 = por %p277, %p278
    %p280 = scmp.ne.s32.totalorder %s272, %s274
    %p281 = scmp.eq.s32.totalorder %s33, 1
    %p282 = por %p280, %p281
    %p283 = scmp.ne.s32.totalorder %s274, %s275
    %p284 = scmp.eq.s32.totalorder %s33, 0
    %p285 = por %p283, %p284
    %p286 = scmp.ne.s32.totalorder %s274, %s275
    %p287 = scmp.eq.s32.totalorder %s34, 1
    %p288 = por %p286, %p287
    %p290 = scmp.ne.s32.totalorder %s275, %s289
    %p291 = scmp.eq.s32.totalorder %s34, 0
    %p292 = por %p290, %p291
    %s294 = sadd.s32 %s293, 1
    %p297 = scmp.eq.s32.totalorder %s28, 1
    %p298 = scmp.ne.s32.totalorder %s293, %s295
    %p299 = scmp.eq.s32.totalorder %s28, 0
    %p300 = por %p298, %p299
    %p301 = scmp.ne.s32.totalorder %s293, %s295
    %p302 = scmp.eq.s32.totalorder %s33, 1
    %p303 = por %p301, %p302
    %p304 = scmp.ne.s32.totalorder %s295, %s296
    %p305 = scmp.eq.s32.totalorder %s33, 0
    %p306 = por %p304, %p305
    %p307 = scmp.ne.s32.totalorder %s295, %s296
    %p308 = scmp.eq.s32.totalorder %s34, 1
    %p309 = por %p307, %p308
    %p311 = scmp.ne.s32.totalorder %s296, %s310
    %p312 = scmp.eq.s32.totalorder %s34, 0
    %p313 = por %p311, %p312
    %s315 = sadd.s32 %s314, 1
    %p318 = scmp.eq.s32.totalorder %s28, 1
    %p319 = scmp.ne.s32.totalorder %s314, %s316
    %p320 = scmp.eq.s32.totalorder %s28, 0
    %p321 = por %p319, %p320
    %p322 = scmp.ne.s32.totalorder %s314, %s316
    %p323 = scmp.eq.s32.totalorder %s33, 1
    %p324 = por %p322, %p323
    %p325 = scmp.ne.s32.totalorder %s316, %s317
    %p326 = scmp.eq.s32.totalorder %s33, 0
    %p327 = por %p325, %p326
    %p328 = scmp.ne.s32.totalorder %s316, %s317
    %p329 = scmp.eq.s32.totalorder %s34, 1
    %p330 = por %p328, %p329
    %p332 = scmp.ne.s32.totalorder %s317, %s331
    %p333 = scmp.eq.s32.totalorder %s34, 0
    %p334 = por %p332, %p333
    %s336 = sadd.s32 %s335, 1
    %p339 = scmp.eq.s32.totalorder %s28, 1
    %p340 = scmp.ne.s32.totalorder %s335, %s337
    %p341 = scmp.eq.s32.totalorder %s28, 0
    %p342 = por %p340, %p341
    %p343 = scmp.ne.s32.totalorder %s335, %s337
    %p344 = scmp.eq.s32.totalorder %s33, 1
    %p345 = por %p343, %p344
    %p346 = scmp.ne.s32.totalorder %s337, %s338
    %p347 = scmp.eq.s32.totalorder %s33, 0
    %p348 = por %p346, %p347
    %p349 = scmp.ne.s32.totalorder %s337, %s338
    %p350 = scmp.eq.s32.totalorder %s34, 1
    %p351 = por %p349, %p350
    %p353 = scmp.ne.s32.totalorder %s338, %s352
    %p354 = scmp.eq.s32.totalorder %s34, 0
    %p355 = por %p353, %p354
    %s357 = sadd.s32 %s356, 1
    %p360 = scmp.eq.s32.totalorder %s28, 1
    %p361 = scmp.ne.s32.totalorder %s356, %s358
    %p362 = scmp.eq.s32.totalorder %s28, 0
    %p363 = por %p361, %p362
    %p364 = scmp.ne.s32.totalorder %s356, %s358
    %p365 = scmp.eq.s32.totalorder %s33, 1
    %p366 = por %p364, %p365
    %p367 = scmp.ne.s32.totalorder %s358, %s359
    %p368 = scmp.eq.s32.totalorder %s33, 0
    %p369 = por %p367, %p368
    %p370 = scmp.ne.s32.totalorder %s358, %s359
    %p371 = scmp.eq.s32.totalorder %s34, 1
    %p372 = por %p370, %p371
    %p374 = scmp.ne.s32.totalorder %s359, %s373
    %p375 = scmp.eq.s32.totalorder %s34, 0
    %p376 = por %p374, %p375
    %s378 = sadd.s32 %s377, 1
    %p381 = scmp.eq.s32.totalorder %s28, 1
    %p382 = scmp.ne.s32.totalorder %s377, %s379
    %p383 = scmp.eq.s32.totalorder %s28, 0
    %p384 = por %p382, %p383
    %p385 = scmp.ne.s32.totalorder %s377, %s379
    %p386 = scmp.eq.s32.totalorder %s33, 1
    %p387 = por %p385, %p386
    %p388 = scmp.ne.s32.totalorder %s379, %s380
    %p389 = scmp.eq.s32.totalorder %s33, 0
    %p390 = por %p388, %p389
    %p391 = scmp.ne.s32.totalorder %s379, %s380
    %p392 = scmp.eq.s32.totalorder %s34, 1
    %p393 = por %p391, %p392
    %p395 = scmp.ne.s32.totalorder %s380, %s394
    %p396 = scmp.eq.s32.totalorder %s34, 0
    %p397 = por %p395, %p396
    %s399 = sadd.s32 %s398, 1
    %p402 = scmp.eq.s32.totalorder %s28, 1
    %p403 = scmp.ne.s32.totalorder %s398, %s400
    %p404 = scmp.eq.s32.totalorder %s28, 0
    %p405 = por %p403, %p404
    %p406 = scmp.ne.s32.totalorder %s398, %s400
    %p407 = scmp.eq.s32.totalorder %s33, 1
    %p408 = por %p406, %p407
    %p409 = scmp.ne.s32.totalorder %s400, %s401
    %p410 = scmp.eq.s32.totalorder %s33, 0
    %p411 = por %p409, %p410
    %p412 = scmp.ne.s32.totalorder %s400, %s401
    %p413 = scmp.eq.s32.totalorder %s34, 1
    %p414 = por %p412, %p413
    %p416 = scmp.ne.s32.totalorder %s401, %s415
    %p417 = scmp.eq.s32.totalorder %s34, 0
    %p418 = por %p416, %p417
    %s420 = sadd.s32 %s419, 1
    %p423 = scmp.eq.s32.totalorder %s28, 1
    %p424 = scmp.ne.s32.totalorder %s419, %s421
    %p425 = scmp.eq.s32.totalorder %s28, 0
    %p426 = por %p424, %p425
    %p427 = scmp.ne.s32.totalorder %s419, %s421
    %p428 = scmp.eq.s32.totalorder %s33, 1
    %p429 = por %p427, %p428
    %p430 = scmp.ne.s32.totalorder %s421, %s422
    %p431 = scmp.eq.s32.totalorder %s33, 0
    %p432 = por %p430, %p431
    %p433 = scmp.ne.s32.totalorder %s421, %s422
    %p434 = scmp.eq.s32.totalorder %s34, 1
    %p435 = por %p433, %p434
    %p437 = scmp.ne.s32.totalorder %s422, %s436
    %p438 = scmp.eq.s32.totalorder %s34, 0
    %p439 = por %p437, %p438
    %s441 = sadd.s32 %s440, 1
    %p444 = scmp.eq.s32.totalorder %s28, 1
    %p445 = scmp.ne.s32.totalorder %s440, %s442
    %p446 = scmp.eq.s32.totalorder %s28, 0
    %p447 = por %p445, %p446
    %p448 = scmp.ne.s32.totalorder %s440, %s442
    %p449 = scmp.eq.s32.totalorder %s33, 1
    %p450 = por %p448, %p449
    %p451 = scmp.ne.s32.totalorder %s442, %s443
    %p452 = scmp.eq.s32.totalorder %s33, 0
    %p453 = por %p451, %p452
    %p454 = scmp.ne.s32.totalorder %s442, %s443
    %p455 = scmp.eq.s32.totalorder %s34, 1
    %p456 = por %p454, %p455
    %p458 = scmp.ne.s32.totalorder %s443, %s457
    %p459 = scmp.eq.s32.totalorder %s34, 0
    %p460 = por %p458, %p459
    %s462 = sadd.s32 %s461, 1
    %p465 = scmp.eq.s32.totalorder %s28, 1
    %p466 = scmp.ne.s32.totalorder %s461, %s463
    %p467 = scmp.eq.s32.totalorder %s28, 0
    %p468 = por %p466, %p467
    %p469 = scmp.ne.s32.totalorder %s461, %s463
    %p470 = scmp.eq.s32.totalorder %s33, 1
    %p471 = por %p469, %p470
    %p472 = scmp.ne.s32.totalorder %s463, %s464
    %p473 = scmp.eq.s32.totalorder %s33, 0
    %p474 = por %p472, %p473
    %p475 = scmp.ne.s32.totalorder %s463, %s464
    %p476 = scmp.eq.s32.totalorder %s34, 1
    %p477 = por %p475, %p476
    %p479 = scmp.ne.s32.totalorder %s464, %s478
    %p480 = scmp.eq.s32.totalorder %s34, 0
    %p481 = por %p479, %p480
    %s483 = sadd.s32 %s482, 1
    %p486 = scmp.eq.s32.totalorder %s28, 1
    %p487 = scmp.ne.s32.totalorder %s482, %s484
    %p488 = scmp.eq.s32.totalorder %s28, 0
    %p489 = por %p487, %p488
    %p490 = scmp.ne.s32.totalorder %s482, %s484
    %p491 = scmp.eq.s32.totalorder %s33, 1
    %p492 = por %p490, %p491
    %p493 = scmp.ne.s32.totalorder %s484, %s485
    %p494 = scmp.eq.s32.totalorder %s33, 0
    %p495 = por %p493, %p494
    %p496 = scmp.ne.s32.totalorder %s484, %s485
    %p497 = scmp.eq.s32.totalorder %s34, 1
    %p498 = por %p496, %p497
    %p500 = scmp.ne.s32.totalorder %s485, %s499
    %p501 = scmp.eq.s32.totalorder %s34, 0
    %p502 = por %p500, %p501
    %s503 = ssub.s32 %s28, %s35
    %p504 = scmp.eq.s32.totalorder %s503, 0
    %s506 = sadd.s32 %s505, 1
    %s507 = scalar_select %p504, %s505, %s506
    %p510 = pneg %p504
    %p511 = scmp.eq.s32.totalorder %s28, 1
    %p512 = por %p510, %p511
    %p513 = scmp.ne.s32.totalorder %s505, %s508
    %p514 = scmp.eq.s32.totalorder %s28, 0
    %p515 = por %p513, %p514
    %p516 = scmp.ne.s32.totalorder %s505, %s508
    %p517 = scmp.eq.s32.totalorder %s33, 1
    %p518 = por %p516, %p517
    %p519 = scmp.ne.s32.totalorder %s508, %s509
    %p520 = scmp.eq.s32.totalorder %s33, 0
    %p521 = por %p519, %p520
    %p522 = scmp.ne.s32.totalorder %s508, %s509
    %p523 = scmp.eq.s32.totalorder %s34, 1
    %p524 = por %p522, %p523
    %p526 = scmp.ne.s32.totalorder %s509, %s525
    %p527 = scmp.eq.s32.totalorder %s34, 0
    %p528 = por %p526, %p527
    %p529 = scmp.le.s32.totalorder 1, %s28
    %p530 = scmp.lt.s32.totalorder %s28, 3
    %p531 = pnand %p529, %p530
    %p532 = pneg %p531
    // Predicated region
    $region9: #{all_conv_2016_forward.1} parent=5 // pred_check
      _
    $region10: #{all_conv_2016_forward.1} parent=5 // pred_check_branch
      %534 = sbr.rel (%p531) target = $region12
    $region11: #{all_conv_2016_forward.1} parent=5 // pred_region
      %s535 = ssub.s32 %s28, 1
      // Predicated region
      $region13: #{all_conv_2016_forward.1} parent=11 // pred_check
        %p536 = pneg %p75
      $region14: #{all_conv_2016_forward.1} parent=11 // pred_check_branch
        %538 = sbr.rel (%p536) target = $region16
      $region15: #{all_conv_2016_forward.1} parent=11 // pred_region
        _
      $region16: #{all_conv_2016_forward.1} parent=11 // pred_fallthru
        _
      // Predicated region
      $region17: #{all_conv_2016_forward.1} parent=11 // pred_check
        %p539 = pneg %p96
      $region18: #{all_conv_2016_forward.1} parent=11 // pred_check_branch
        %541 = sbr.rel (%p539) target = $region20
      $region19: #{all_conv_2016_forward.1} parent=11 // pred_region
        _
      $region20: #{all_conv_2016_forward.1} parent=11 // pred_fallthru
        _
      // Predicated region
      $region21: #{all_conv_2016_forward.1} parent=11 // pred_check
        %p542 = pneg %p117
      $region22: #{all_conv_2016_forward.1} parent=11 // pred_check_branch
        %544 = sbr.rel (%p542) target = $region24
      $region23: #{all_conv_2016_forward.1} parent=11 // pred_region
        _
      $region24: #{all_conv_2016_forward.1} parent=11 // pred_fallthru
        _
      // Predicated region
      $region25: #{all_conv_2016_forward.1} parent=11 // pred_check
        %p545 = pneg %p138
      $region26: #{all_conv_2016_forward.1} parent=11 // pred_check_branch
        %547 = sbr.rel (%p545) target = $region28
      $region27: #{all_conv_2016_forward.1} parent=11 // pred_region
        _
      $region28: #{all_conv_2016_forward.1} parent=11 // pred_fallthru
        _
      // Predicated region
      $region29: #{all_conv_2016_forward.1} parent=11 // pred_check
        %p548 = pneg %p159
      $region30: #{all_conv_2016_forward.1} parent=11 // pred_check_branch
        %550 = sbr.rel (%p548) target = $region32
      $region31: #{all_conv_2016_forward.1} parent=11 // pred_region
        _
      $region32: #{all_conv_2016_forward.1} parent=11 // pred_fallthru
        _
      // Predicated region
      $region33: #{all_conv_2016_forward.1} parent=11 // pred_check
        %p551 = pneg %p180
      $region34: #{all_conv_2016_forward.1} parent=11 // pred_check_branch
        %553 = sbr.rel (%p551) target = $region36
      $region35: #{all_conv_2016_forward.1} parent=11 // pred_region
        _
      $region36: #{all_conv_2016_forward.1} parent=11 // pred_fallthru
        _
      // Predicated region
      $region37: #{all_conv_2016_forward.1} parent=11 // pred_check
        %p554 = pneg %p201
      $region38: #{all_conv_2016_forward.1} parent=11 // pred_check_branch
        %556 = sbr.rel (%p554) target = $region40
      $region39: #{all_conv_2016_forward.1} parent=11 // pred_region
        _
      $region40: #{all_conv_2016_forward.1} parent=11 // pred_fallthru
        _
      // Predicated region
      $region41: #{all_conv_2016_forward.1} parent=11 // pred_check
        %p557 = pneg %p222
      $region42: #{all_conv_2016_forward.1} parent=11 // pred_check_branch
        %559 = sbr.rel (%p557) target = $region44
      $region43: #{all_conv_2016_forward.1} parent=11 // pred_region
        _
      $region44: #{all_conv_2016_forward.1} parent=11 // pred_fallthru
        _
      // Predicated region
      $region45: #{all_conv_2016_forward.1} parent=11 // pred_check
        %p560 = pneg %p243
      $region46: #{all_conv_2016_forward.1} parent=11 // pred_check_branch
        %562 = sbr.rel (%p560) target = $region48
      $region47: #{all_conv_2016_forward.1} parent=11 // pred_region
        _
      $region48: #{all_conv_2016_forward.1} parent=11 // pred_fallthru
        _
      // Predicated region
      $region49: #{all_conv_2016_forward.1} parent=11 // pred_check
        %p563 = pneg %p264
      $region50: #{all_conv_2016_forward.1} parent=11 // pred_check_branch
        %565 = sbr.rel (%p563) target = $region52
      $region51: #{all_conv_2016_forward.1} parent=11 // pred_region
        _
      $region52: #{all_conv_2016_forward.1} parent=11 // pred_fallthru
        _
      // Predicated region
      $region53: #{all_conv_2016_forward.1} parent=11 // pred_check
        %p566 = pneg %p285
      $region54: #{all_conv_2016_forward.1} parent=11 // pred_check_branch
        %568 = sbr.rel (%p566) target = $region56
      $region55: #{all_conv_2016_forward.1} parent=11 // pred_region
        _
      $region56: #{all_conv_2016_forward.1} parent=11 // pred_fallthru
        _
      // Predicated region
      $region57: #{all_conv_2016_forward.1} parent=11 // pred_check
        %p569 = pneg %p306
      $region58: #{all_conv_2016_forward.1} parent=11 // pred_check_branch
        %571 = sbr.rel (%p569) target = $region60
      $region59: #{all_conv_2016_forward.1} parent=11 // pred_region
        _
      $region60: #{all_conv_2016_forward.1} parent=11 // pred_fallthru
        _
      // Predicated region
      $region61: #{all_conv_2016_forward.1} parent=11 // pred_check
        %p572 = pneg %p327
      $region62: #{all_conv_2016_forward.1} parent=11 // pred_check_branch
        %574 = sbr.rel (%p572) target = $region64
      $region63: #{all_conv_2016_forward.1} parent=11 // pred_region
        _
      $region64: #{all_conv_2016_forward.1} parent=11 // pred_fallthru
        _
      // Predicated region
      $region65: #{all_conv_2016_forward.1} parent=11 // pred_check
        %p575 = pneg %p348
      $region66: #{all_conv_2016_forward.1} parent=11 // pred_check_branch
        %577 = sbr.rel (%p575) target = $region68
      $region67: #{all_conv_2016_forward.1} parent=11 // pred_region
        _
      $region68: #{all_conv_2016_forward.1} parent=11 // pred_fallthru
        _
      // Predicated region
      $region69: #{all_conv_2016_forward.1} parent=11 // pred_check
        %p578 = pneg %p369
      $region70: #{all_conv_2016_forward.1} parent=11 // pred_check_branch
        %580 = sbr.rel (%p578) target = $region72
      $region71: #{all_conv_2016_forward.1} parent=11 // pred_region
        _
      $region72: #{all_conv_2016_forward.1} parent=11 // pred_fallthru
        _
      // Predicated region
      $region73: #{all_conv_2016_forward.1} parent=11 // pred_check
        %p581 = pneg %p390
      $region74: #{all_conv_2016_forward.1} parent=11 // pred_check_branch
        %583 = sbr.rel (%p581) target = $region76
      $region75: #{all_conv_2016_forward.1} parent=11 // pred_region
        _
      $region76: #{all_conv_2016_forward.1} parent=11 // pred_fallthru
        _
      // Predicated region
      $region77: #{all_conv_2016_forward.1} parent=11 // pred_check
        %p584 = pneg %p411
      $region78: #{all_conv_2016_forward.1} parent=11 // pred_check_branch
        %586 = sbr.rel (%p584) target = $region80
      $region79: #{all_conv_2016_forward.1} parent=11 // pred_region
        _
      $region80: #{all_conv_2016_forward.1} parent=11 // pred_fallthru
        _
      // Predicated region
      $region81: #{all_conv_2016_forward.1} parent=11 // pred_check
        %p587 = pneg %p432
      $region82: #{all_conv_2016_forward.1} parent=11 // pred_check_branch
        %589 = sbr.rel (%p587) target = $region84
      $region83: #{all_conv_2016_forward.1} parent=11 // pred_region
        _
      $region84: #{all_conv_2016_forward.1} parent=11 // pred_fallthru
        _
      // Predicated region
      $region85: #{all_conv_2016_forward.1} parent=11 // pred_check
        %p590 = pneg %p453
      $region86: #{all_conv_2016_forward.1} parent=11 // pred_check_branch
        %592 = sbr.rel (%p590) target = $region88
      $region87: #{all_conv_2016_forward.1} parent=11 // pred_region
        _
      $region88: #{all_conv_2016_forward.1} parent=11 // pred_fallthru
        _
      // Predicated region
      $region89: #{all_conv_2016_forward.1} parent=11 // pred_check
        %p593 = pneg %p474
      $region90: #{all_conv_2016_forward.1} parent=11 // pred_check_branch
        %595 = sbr.rel (%p593) target = $region92
      $region91: #{all_conv_2016_forward.1} parent=11 // pred_region
        _
      $region92: #{all_conv_2016_forward.1} parent=11 // pred_fallthru
        _
      // Predicated region
      $region93: #{all_conv_2016_forward.1} parent=11 // pred_check
        %p596 = pneg %p495
      $region94: #{all_conv_2016_forward.1} parent=11 // pred_check_branch
        %598 = sbr.rel (%p596) target = $region96
      $region95: #{all_conv_2016_forward.1} parent=11 // pred_region
        _
      $region96: #{all_conv_2016_forward.1} parent=11 // pred_fallthru
        _
    $region12: #{all_conv_2016_forward.1} parent=5 // pred_fallthru
      _
    %p599 = scmp.lt.s32.totalorder %s28, 2
    // Predicated region
    $region97: #{all_conv_2016_forward.1} parent=5 // pred_check
      %p600 = pneg %p599
    $region98: #{all_conv_2016_forward.1} parent=5 // pred_check_branch
      %602 = sbr.rel (%p600) target = $region100
    $region99: #{all_conv_2016_forward.1} parent=5 // pred_region
      // Predicated region
      $region101: #{all_conv_2016_forward.1} parent=99 // pred_check
        %p603 = pneg %p48
      $region102: #{all_conv_2016_forward.1} parent=99 // pred_check_branch
        %605 = sbr.rel (%p603) target = $region104
      $region103: #{all_conv_2016_forward.1} parent=99 // pred_region
        %p606 = scmp.lt.s32.totalorder %s28, 1
        %s607 = scalar_select %p606, %s28, 1
        %s608 = smul.addr %s607, 3
        %s609 = smul.addr %s608, 8
        %s610 = scalar_lea.vmem %s0, %s609
      $region104: #{all_conv_2016_forward.1} parent=99 // pred_fallthru
        _
    $region100: #{all_conv_2016_forward.1} parent=5 // pred_fallthru
      _
    %p611 = scmp.le.s32.totalorder 1, %s28
    %p612 = scmp.lt.s32.totalorder %s28, 3
    %p613 = pnand %p611, %p612
    %p614 = pneg %p613
    // Predicated region
    $region105: #{all_conv_2016_forward.1} parent=5 // pred_check
      _
    $region106: #{all_conv_2016_forward.1} parent=5 // pred_check_branch
      %616 = sbr.rel (%p613) target = $region108
    $region107: #{all_conv_2016_forward.1} parent=5 // pred_region
      %s617 = ssub.s32 %s28, 1
      %p618 = scmp.lt.s32.totalorder %s33, 1
      %s619 = scalar_select %p618, %s33, 1
      %s620 = smul.addr %s619, 3
      %s621 = smul.addr %s620, 8
      %s622 = scalar_lea.vmem %s0, %s621
      %p623 = pneg %p54
      %p624 = pneg %p51
      %p625 = pneg %p75
      %p626 = pneg %p72
      %p627 = pneg %p96
      %p628 = pneg %p93
      %p629 = pneg %p117
      %p630 = pneg %p114
      %p631 = pneg %p138
      %p632 = pneg %p135
      %p633 = pneg %p159
      %p634 = pneg %p156
      %p635 = pneg %p180
      %p636 = pneg %p177
      %p637 = pneg %p201
      %p638 = pneg %p198
      %p639 = pneg %p222
      %p640 = pneg %p219
      %p641 = pneg %p243
      %p642 = pneg %p240
      %p643 = pneg %p264
      %p644 = pneg %p261
      %p645 = pneg %p285
      %p646 = pneg %p282
      %p647 = pneg %p306
      %p648 = pneg %p303
      %p649 = pneg %p327
      %p650 = pneg %p324
      %p651 = pneg %p348
      %p652 = pneg %p345
      %p653 = pneg %p369
      %p654 = pneg %p366
      %p655 = pneg %p390
      %p656 = pneg %p387
      %p657 = pneg %p411
      %p658 = pneg %p408
      %p659 = pneg %p432
      %p660 = pneg %p429
      %p661 = pneg %p453
      %p662 = pneg %p450
      %p663 = pneg %p474
      %p664 = pneg %p471
      %p665 = pneg %p495
      %p666 = pneg %p492
      %p667 = pneg %p521
      %p668 = pneg %p518
      %p669 = scmp.lt.s32.totalorder %s33, 1
      %s670 = scalar_select %p669, %s33, 1
      %s671 = smul.addr %s670, 11
      %s672 = smul.addr %s671, 8
      %s673 = scalar_lea.vmem %s22, %s672
      %p674 = scmp.lt.s32.totalorder %s33, 1
      %s675 = scalar_select %p674, %s33, 1
      %s676 = smul.addr %s675, 3
      %s677 = smul.addr %s676, 8
      %s678 = scalar_lea.vmem %s0, %s677
      %p679 = scmp.lt.s32.totalorder %s33, 1
      %s680 = scalar_select %p679, %s33, 1
      %s681 = smul.addr %s680, 11
      %s682 = smul.addr %s681, 8
      %s683 = scalar_lea.vmem %s22, %s682
      %v684 = vld [vmem:[%s678] sm:$0x1f]
      %v685 = vld [vmem:[%s678 + $0x8] sm:$0x1f]
      %v686 = vld [vmem:[%s678 + $0x10] sm:$0x1f]
      %v690 = vrot.slane %v684, 7
      %v691 = vrot.slane %v685, 7
      %v692 = vrot.slane %v686, 7
      %693 = vrot.lane.b32.xlu0 %v690, 80
      %v694 = vpop.permute.xlu0 %693
      %695 = vrot.lane.b32.xlu0 %v691, 80
      %v696 = vpop.permute.xlu0 %695
      %697 = vrot.lane.b32.xlu0 %v692, 80
      %v698 = vpop.permute.xlu0 %697
      %vm699 = vcmask 654336
      %v700 = vsel %vm699, %v694, %v696
      %v701 = vsel %vm699, %v696, %v698
      %v704 = vrot.slane %v684, 6
      %v705 = vrot.slane %v685, 6
      %v706 = vrot.slane %v686, 6
      %707 = vrot.lane.b32.xlu0 %v704, 32
      %v708 = vpop.permute.xlu0 %707
      %709 = vrot.lane.b32.xlu0 %v705, 32
      %v710 = vpop.permute.xlu0 %709
      %711 = vrot.lane.b32.xlu0 %v706, 32
      %v712 = vpop.permute.xlu0 %711
      %vm713 = vcmask 261120
      %v714 = vsel %vm713, %v708, %v710
      %v715 = vsel %vm713, %v710, %v712
      %vm718 = vcmask 1040384
      %v719 = vsel %vm718, %v684, %v700
      %v720 = vsel %vm718, %v685, %v701
      %vm721 = vcmask 1041408
      %v722 = vsel %vm721, %v719, %v714
      %v723 = vsel %vm721, %v720, %v715
      %v724 = vrot.slane %v684, 1
      %v725 = vrot.slane %v685, 1
      %728 = vrot.lane.b32.xlu0 %v684, 80
      %v729 = vpop.permute.xlu0 %728
      %730 = vrot.lane.b32.xlu0 %v685, 80
      %v731 = vpop.permute.xlu0 %730
      %732 = vrot.lane.b32.xlu0 %v686, 80
      %v733 = vpop.permute.xlu0 %732
      %v734 = vsel %vm699, %v729, %v731
      %v735 = vsel %vm699, %v731, %v733
      %738 = vrot.lane.b32.xlu0 %v690, 32
      %v739 = vpop.permute.xlu0 %738
      %740 = vrot.lane.b32.xlu0 %v691, 32
      %v741 = vpop.permute.xlu0 %740
      %742 = vrot.lane.b32.xlu0 %v692, 32
      %v743 = vpop.permute.xlu0 %742
      %v744 = vsel %vm713, %v739, %v741
      %v745 = vsel %vm713, %v741, %v743
      %v748 = vsel %vm718, %v724, %v734
      %v749 = vsel %vm718, %v725, %v735
      %v750 = vsel %vm721, %v748, %v744
      %v751 = vsel %vm721, %v749, %v745
      %v752 = vrot.slane %v684, 2
      %v753 = vrot.slane %v685, 2
      %v756 = vrot.slane %v686, 1
      %757 = vrot.lane.b32.xlu0 %v724, 80
      %v758 = vpop.permute.xlu0 %757
      %759 = vrot.lane.b32.xlu0 %v725, 80
      %v760 = vpop.permute.xlu0 %759
      %761 = vrot.lane.b32.xlu0 %v756, 80
      %v762 = vpop.permute.xlu0 %761
      %v763 = vsel %vm699, %v758, %v760
      %v764 = vsel %vm699, %v760, %v762
      %767 = vrot.lane.b32.xlu0 %v684, 32
      %v768 = vpop.permute.xlu0 %767
      %769 = vrot.lane.b32.xlu0 %v685, 32
      %v770 = vpop.permute.xlu0 %769
      %771 = vrot.lane.b32.xlu0 %v686, 32
      %v772 = vpop.permute.xlu0 %771
      %v773 = vsel %vm713, %v768, %v770
      %v774 = vsel %vm713, %v770, %v772
      %v777 = vsel %vm718, %v752, %v763
      %v778 = vsel %vm718, %v753, %v764
      %v779 = vsel %vm721, %v777, %v773
      %v780 = vsel %vm721, %v778, %v774
      %v781 = vrot.slane %v684, 3
      %v782 = vrot.slane %v685, 3
      %v785 = vrot.slane %v686, 2
      %786 = vrot.lane.b32.xlu0 %v752, 80
      %v787 = vpop.permute.xlu0 %786
      %788 = vrot.lane.b32.xlu0 %v753, 80
      %v789 = vpop.permute.xlu0 %788
      %790 = vrot.lane.b32.xlu0 %v785, 80
      %v791 = vpop.permute.xlu0 %790
      %v792 = vsel %vm699, %v787, %v789
      %v793 = vsel %vm699, %v789, %v791
      %796 = vrot.lane.b32.xlu0 %v724, 32
      %v797 = vpop.permute.xlu0 %796
      %798 = vrot.lane.b32.xlu0 %v725, 32
      %v799 = vpop.permute.xlu0 %798
      %800 = vrot.lane.b32.xlu0 %v756, 32
      %v801 = vpop.permute.xlu0 %800
      %v802 = vsel %vm713, %v797, %v799
      %v803 = vsel %vm713, %v799, %v801
      %v806 = vsel %vm718, %v781, %v792
      %v807 = vsel %vm718, %v782, %v793
      %v808 = vsel %vm721, %v806, %v802
      %v809 = vsel %vm721, %v807, %v803
      %v810 = vrot.slane %v684, 4
      %v811 = vrot.slane %v685, 4
      %v814 = vrot.slane %v686, 3
      %815 = vrot.lane.b32.xlu0 %v781, 80
      %v816 = vpop.permute.xlu0 %815
      %817 = vrot.lane.b32.xlu0 %v782, 80
      %v818 = vpop.permute.xlu0 %817
      %819 = vrot.lane.b32.xlu0 %v814, 80
      %v820 = vpop.permute.xlu0 %819
      %v821 = vsel %vm699, %v816, %v818
      %v822 = vsel %vm699, %v818, %v820
      %825 = vrot.lane.b32.xlu0 %v752, 32
      %v826 = vpop.permute.xlu0 %825
      %827 = vrot.lane.b32.xlu0 %v753, 32
      %v828 = vpop.permute.xlu0 %827
      %829 = vrot.lane.b32.xlu0 %v785, 32
      %v830 = vpop.permute.xlu0 %829
      %v831 = vsel %vm713, %v826, %v828
      %v832 = vsel %vm713, %v828, %v830
      %v835 = vsel %vm718, %v810, %v821
      %v836 = vsel %vm718, %v811, %v822
      %v837 = vsel %vm721, %v835, %v831
      %v838 = vsel %vm721, %v836, %v832
      %v839 = vld [vmem:[%s1] sm:$0xff]
      %v842 = vrot.slane %v722, 5
      %v843 = vrot.slane %v723, 5
      %844 = vrot.lane.b32.xlu0 %v842, 127
      %v845 = vpop.permute.xlu0 %844
      %846 = vrot.lane.b32.xlu0 %v843, 127
      %v847 = vpop.permute.xlu0 %846
      %vm848 = vcmask 1039360
      %v849 = vsel %vm848, %v845, %v847
      %v852 = vrot.slane %v722, 2
      %v853 = vrot.slane %v723, 2
      %854 = vrot.lane.b32.xlu0 %v852, 126
      %v855 = vpop.permute.xlu0 %854
      %856 = vrot.lane.b32.xlu0 %v853, 126
      %v857 = vpop.permute.xlu0 %856
      %vm858 = vcmask 1031168
      %v859 = vsel %vm858, %v855, %v857
      %v864 = vrot.slane %v750, 7
      %v865 = vrot.slane %v751, 7
      %v868 = vrot.slane %v750, 4
      %v869 = vrot.slane %v751, 4
      %870 = vrot.lane.b32.xlu0 %v868, 127
      %v871 = vpop.permute.xlu0 %870
      %872 = vrot.lane.b32.xlu0 %v869, 127
      %v873 = vpop.permute.xlu0 %872
      %v874 = vsel %vm848, %v871, %v873
      %v877 = vrot.slane %v750, 1
      %v878 = vrot.slane %v751, 1
      %879 = vrot.lane.b32.xlu0 %v877, 126
      %v880 = vpop.permute.xlu0 %879
      %881 = vrot.lane.b32.xlu0 %v878, 126
      %v882 = vpop.permute.xlu0 %881
      %v883 = vsel %vm858, %v880, %v882
      %v888 = vrot.slane %v779, 6
      %v889 = vrot.slane %v780, 6
      %v892 = vrot.slane %v779, 3
      %v893 = vrot.slane %v780, 3
      %894 = vrot.lane.b32.xlu0 %v892, 127
      %v895 = vpop.permute.xlu0 %894
      %896 = vrot.lane.b32.xlu0 %v893, 127
      %v897 = vpop.permute.xlu0 %896
      %v898 = vsel %vm848, %v895, %v897
      %901 = vrot.lane.b32.xlu0 %v779, 126
      %v902 = vpop.permute.xlu0 %901
      %903 = vrot.lane.b32.xlu0 %v780, 126
      %v904 = vpop.permute.xlu0 %903
      %v905 = vsel %vm858, %v902, %v904
      %vm906 = vcmask 1042432
      %v907 = vsel %vm906, %v722, %v849
      %v908 = vsel %vm906, %v723, %v847
      %vm909 = vcmask 1045504
      %v910 = vsel %vm909, %v907, %v859
      %v911 = vsel %vm909, %v908, %v857
      %v912 = vsel %vm718, %v859, %v864
      %v913 = vsel %vm718, %v857, %v865
      %vm914 = vcmask 1043456
      %v915 = vsel %vm914, %v912, %v874
      %v916 = vsel %vm914, %v913, %v873
      %vm917 = vcmask 1046528
      %v918 = vsel %vm917, %v915, %v883
      %v919 = vsel %vm917, %v916, %v882
      %v920 = vsel %vm721, %v883, %v888
      %v921 = vsel %vm721, %v882, %v889
      %vm922 = vcmask 1044480
      %v923 = vsel %vm922, %v920, %v898
      %v924 = vsel %vm922, %v921, %v897
      %vm925 = vcmask 220160
      %v927 = vsel %vm925, %v839, 0
      %v929 = vsel %vm906, %v905, 0
      %v931 = vsel %vm906, %v904, 0
      %933 = vmatprep.subr.mxu0 %v911
      %934 = vmatpush1.msra.mxu0 %v910
      %935 = vmatprep.subr.mxu0 %v919
      %936 = vmatpush1.msra.mxu0 %v918
      %937 = vmatprep.subr.mxu0 %v924
      %938 = vmatpush1.msra.mxu0 %v923
      %939 = vmatprep.subr.mxu0 %v931
      %940 = vmatpush1.msra.mxu0 %v929
      %941 = vmatprep.subr.mxu0 0.0
      %942 = vmatpush1.msra.mxu0 0.0
      %943 = vmatprep.subr.mxu0 0.0
      %944 = vmatpush1.msra.mxu0 0.0
      %945 = vmatprep.subr.mxu0 0.0
      %946 = vmatpush1.msra.mxu0 0.0
      %947 = vmatprep.subr.mxu0 0.0
      %948 = vmatpush1.msra.mxu0 0.0
      %949 = vmatprep.subr.mxu0 0.0
      %950 = vmatpush1.msra.mxu0 0.0
      %951 = vmatprep.subr.mxu0 0.0
      %952 = vmatpush1.msra.mxu0 0.0
      %953 = vmatprep.subr.mxu0 0.0
      %954 = vmatpush1.msra.mxu0 0.0
      %955 = vmatprep.subr.mxu0 0.0
      %956 = vmatpush1.msra.mxu0 0.0
      %957 = vmatprep.subr.mxu0 0.0
      %958 = vmatpush1.msra.mxu0 0.0
      %959 = vmatprep.subr.mxu0 0.0
      %960 = vmatpush1.msra.mxu0 0.0
      %961 = vmatprep.subr.mxu0 0.0
      %962 = vmatpush1.msra.mxu0 0.0
      %963 = vmatprep.subr.mxu0 0.0
      %964 = vmatpush1.msra.mxu0 0.0
      %965 = vmatprep.subr.mxu0 0.0
      %966 = vmatpush1.msra.mxu0 0.0
      %967 = vmatprep.subr.mxu0 0.0
      %968 = vmatpush1.msra.mxu0 0.0
      %969 = vmatprep.subr.mxu0 0.0
      %970 = vmatpush1.msra.mxu0 0.0
      %971 = vmatprep.subr.mxu0 0.0
      %972 = vmatpush1.msra.mxu0 0.0
      %973 = vmatprep.subr.mxu0 0.0
      %974 = vmatpush1.msra.mxu0 0.0
      %975 = vmatprep.subr.mxu0 0.0
      %976 = vmatpush1.msra.mxu0 0.0
      %977 = vmatprep.subr.mxu0 0.0
      %978 = vmatpush1.msra.mxu0 0.0
      %979 = vmatprep.subr.mxu0 0.0
      %980 = vmatpush1.msra.mxu0 0.0
      %981 = vmatprep.subr.mxu0 0.0
      %982 = vmatpush1.msra.mxu0 0.0
      %983 = vmatprep.subr.mxu0 0.0
      %984 = vmatpush1.msra.mxu0 0.0
      %985 = vmatprep.subr.mxu0 0.0
      %986 = vmatpush1.msra.mxu0 0.0
      %987 = vmatprep.subr.mxu0 0.0
      %988 = vmatpush1.msra.mxu0 0.0
      %989 = vmatprep.subr.mxu0 0.0
      %990 = vmatpush1.msra.mxu0 0.0
      %991 = vmatprep.subr.mxu0 0.0
      %992 = vmatpush1.msra.mxu0 0.0
      %993 = vmatprep.subr.mxu0 0.0
      %994 = vmatpush1.msra.mxu0 0.0
      %995 = vmatprep.subr.mxu0 0.0
      %996 = vmatpush1.msra.mxu0 0.0
      %997 = vmatprep.mubr.f32.mxu0 0.0
      %998 = vmatmul.mubr.f32.gmra.mrb[0].mxu0 %v927
      %v999 = vpop.f32.mrb[0].mxu0
      %v1000 = vadd.f32 0.0, %v999
      %v1001 = vpop.f32.mrb[0].mxu0
      %v1002 = vadd.f32 0.0, %v1001
      %1003 = vdwg.mxu0
      %v1004 = vrot.slane %v750, 5
      %v1005 = vrot.slane %v751, 5
      %1006 = vrot.lane.b32.xlu0 %v1004, 127
      %v1007 = vpop.permute.xlu0 %1006
      %1008 = vrot.lane.b32.xlu0 %v1005, 127
      %v1009 = vpop.permute.xlu0 %1008
      %v1010 = vsel %vm848, %v1007, %v1009
      %v1013 = vrot.slane %v750, 2
      %v1014 = vrot.slane %v751, 2
      %1015 = vrot.lane.b32.xlu0 %v1013, 126
      %v1016 = vpop.permute.xlu0 %1015
      %1017 = vrot.lane.b32.xlu0 %v1014, 126
      %v1018 = vpop.permute.xlu0 %1017
      %v1019 = vsel %vm858, %v1016, %v1018
      %v1022 = vrot.slane %v779, 7
      %v1023 = vrot.slane %v780, 7
      %v1026 = vrot.slane %v779, 4
      %v1027 = vrot.slane %v780, 4
      %1028 = vrot.lane.b32.xlu0 %v1026, 127
      %v1029 = vpop.permute.xlu0 %1028
      %1030 = vrot.lane.b32.xlu0 %v1027, 127
      %v1031 = vpop.permute.xlu0 %1030
      %v1032 = vsel %vm848, %v1029, %v1031
      %v1035 = vrot.slane %v779, 1
      %v1036 = vrot.slane %v780, 1
      %1037 = vrot.lane.b32.xlu0 %v1035, 126
      %v1038 = vpop.permute.xlu0 %1037
      %1039 = vrot.lane.b32.xlu0 %v1036, 126
      %v1040 = vpop.permute.xlu0 %1039
      %v1041 = vsel %vm858, %v1038, %v1040
      %v1046 = vrot.slane %v808, 6
      %v1047 = vrot.slane %v809, 6
      %v1050 = vrot.slane %v808, 3
      %v1051 = vrot.slane %v809, 3
      %1052 = vrot.lane.b32.xlu0 %v1050, 127
      %v1053 = vpop.permute.xlu0 %1052
      %1054 = vrot.lane.b32.xlu0 %v1051, 127
      %v1055 = vpop.permute.xlu0 %1054
      %v1056 = vsel %vm848, %v1053, %v1055
      %1059 = vrot.lane.b32.xlu0 %v808, 126
      %v1060 = vpop.permute.xlu0 %1059
      %1061 = vrot.lane.b32.xlu0 %v809, 126
      %v1062 = vpop.permute.xlu0 %1061
      %v1063 = vsel %vm858, %v1060, %v1062
      %v1064 = vsel %vm906, %v750, %v1010
      %v1065 = vsel %vm906, %v751, %v1009
      %v1066 = vsel %vm909, %v1064, %v1019
      %v1067 = vsel %vm909, %v1065, %v1018
      %v1068 = vsel %vm718, %v1019, %v1022
      %v1069 = vsel %vm718, %v1018, %v1023
      %v1070 = vsel %vm914, %v1068, %v1032
      %v1071 = vsel %vm914, %v1069, %v1031
      %v1072 = vsel %vm917, %v1070, %v1041
      %v1073 = vsel %vm917, %v1071, %v1040
      %v1074 = vsel %vm721, %v1041, %v1046
      %v1075 = vsel %vm721, %v1040, %v1047
      %v1076 = vsel %vm922, %v1074, %v1056
      %v1077 = vsel %vm922, %v1075, %v1055
      %v1078 = vsel %vm906, %v1063, 0
      %v1080 = vsel %vm906, %v1062, 0
      %1082 = vmatprep.subr.mxu0 %v1067
      %1083 = vmatpush1.msra.mxu0 %v1066
      %1084 = vmatprep.subr.mxu0 %v1073
      %1085 = vmatpush1.msra.mxu0 %v1072
      %1086 = vmatprep.subr.mxu0 %v1077
      %1087 = vmatpush1.msra.mxu0 %v1076
      %1088 = vmatprep.subr.mxu0 %v1080
      %1089 = vmatpush1.msra.mxu0 %v1078
      %1090 = vmatprep.subr.mxu0 0.0
      %1091 = vmatpush1.msra.mxu0 0.0
      %1092 = vmatprep.subr.mxu0 0.0
      %1093 = vmatpush1.msra.mxu0 0.0
      %1094 = vmatprep.subr.mxu0 0.0
      %1095 = vmatpush1.msra.mxu0 0.0
      %1096 = vmatprep.subr.mxu0 0.0
      %1097 = vmatpush1.msra.mxu0 0.0
      %1098 = vmatprep.subr.mxu0 0.0
      %1099 = vmatpush1.msra.mxu0 0.0
      %1100 = vmatprep.subr.mxu0 0.0
      %1101 = vmatpush1.msra.mxu0 0.0
      %1102 = vmatprep.subr.mxu0 0.0
      %1103 = vmatpush1.msra.mxu0 0.0
      %1104 = vmatprep.subr.mxu0 0.0
      %1105 = vmatpush1.msra.mxu0 0.0
      %1106 = vmatprep.subr.mxu0 0.0
      %1107 = vmatpush1.msra.mxu0 0.0
      %1108 = vmatprep.subr.mxu0 0.0
      %1109 = vmatpush1.msra.mxu0 0.0
      %1110 = vmatprep.subr.mxu0 0.0
      %1111 = vmatpush1.msra.mxu0 0.0
      %1112 = vmatprep.subr.mxu0 0.0
      %1113 = vmatpush1.msra.mxu0 0.0
      %1114 = vmatprep.subr.mxu0 0.0
      %1115 = vmatpush1.msra.mxu0 0.0
      %1116 = vmatprep.subr.mxu0 0.0
      %1117 = vmatpush1.msra.mxu0 0.0
      %1118 = vmatprep.subr.mxu0 0.0
      %1119 = vmatpush1.msra.mxu0 0.0
      %1120 = vmatprep.subr.mxu0 0.0
      %1121 = vmatpush1.msra.mxu0 0.0
      %1122 = vmatprep.subr.mxu0 0.0
      %1123 = vmatpush1.msra.mxu0 0.0
      %1124 = vmatprep.subr.mxu0 0.0
      %1125 = vmatpush1.msra.mxu0 0.0
      %1126 = vmatprep.subr.mxu0 0.0
      %1127 = vmatpush1.msra.mxu0 0.0
      %1128 = vmatprep.subr.mxu0 0.0
      %1129 = vmatpush1.msra.mxu0 0.0
      %1130 = vmatprep.subr.mxu0 0.0
      %1131 = vmatpush1.msra.mxu0 0.0
      %1132 = vmatprep.subr.mxu0 0.0
      %1133 = vmatpush1.msra.mxu0 0.0
      %1134 = vmatprep.subr.mxu0 0.0
      %1135 = vmatpush1.msra.mxu0 0.0
      %1136 = vmatprep.subr.mxu0 0.0
      %1137 = vmatpush1.msra.mxu0 0.0
      %1138 = vmatprep.subr.mxu0 0.0
      %1139 = vmatpush1.msra.mxu0 0.0
      %1140 = vmatprep.subr.mxu0 0.0
      %1141 = vmatpush1.msra.mxu0 0.0
      %1142 = vmatprep.subr.mxu0 0.0
      %1143 = vmatpush1.msra.mxu0 0.0
      %1144 = vmatprep.subr.mxu0 0.0
      %1145 = vmatpush1.msra.mxu0 0.0
      %1146 = vmatprep.mubr.f32.mxu0 0.0
      %1147 = vmatmul.mubr.f32.gmra.mrb[0].mxu0 %v927
      %v1148 = vpop.f32.mrb[0].mxu0
      %v1149 = vadd.f32 0.0, %v1148
      %v1150 = vpop.f32.mrb[0].mxu0
      %v1151 = vadd.f32 0.0, %v1150
      %1152 = vdwg.mxu0
      %v1153 = vrot.slane %v779, 5
      %v1154 = vrot.slane %v780, 5
      %1155 = vrot.lane.b32.xlu0 %v1153, 127
      %v1156 = vpop.permute.xlu0 %1155
      %1157 = vrot.lane.b32.xlu0 %v1154, 127
      %v1158 = vpop.permute.xlu0 %1157
      %v1159 = vsel %vm848, %v1156, %v1158
      %v1162 = vrot.slane %v779, 2
      %v1163 = vrot.slane %v780, 2
      %1164 = vrot.lane.b32.xlu0 %v1162, 126
      %v1165 = vpop.permute.xlu0 %1164
      %1166 = vrot.lane.b32.xlu0 %v1163, 126
      %v1167 = vpop.permute.xlu0 %1166
      %v1168 = vsel %vm858, %v1165, %v1167
      %v1171 = vrot.slane %v808, 7
      %v1172 = vrot.slane %v809, 7
      %v1175 = vrot.slane %v808, 4
      %v1176 = vrot.slane %v809, 4
      %1177 = vrot.lane.b32.xlu0 %v1175, 127
      %v1178 = vpop.permute.xlu0 %1177
      %1179 = vrot.lane.b32.xlu0 %v1176, 127
      %v1180 = vpop.permute.xlu0 %1179
      %v1181 = vsel %vm848, %v1178, %v1180
      %v1184 = vrot.slane %v808, 1
      %v1185 = vrot.slane %v809, 1
      %1186 = vrot.lane.b32.xlu0 %v1184, 126
      %v1187 = vpop.permute.xlu0 %1186
      %1188 = vrot.lane.b32.xlu0 %v1185, 126
      %v1189 = vpop.permute.xlu0 %1188
      %v1190 = vsel %vm858, %v1187, %v1189
      %v1195 = vrot.slane %v837, 6
      %v1196 = vrot.slane %v838, 6
      %v1199 = vrot.slane %v837, 3
      %v1200 = vrot.slane %v838, 3
      %1201 = vrot.lane.b32.xlu0 %v1199, 127
      %v1202 = vpop.permute.xlu0 %1201
      %1203 = vrot.lane.b32.xlu0 %v1200, 127
      %v1204 = vpop.permute.xlu0 %1203
      %v1205 = vsel %vm848, %v1202, %v1204
      %1208 = vrot.lane.b32.xlu0 %v837, 126
      %v1209 = vpop.permute.xlu0 %1208
      %1210 = vrot.lane.b32.xlu0 %v838, 126
      %v1211 = vpop.permute.xlu0 %1210
      %v1212 = vsel %vm858, %v1209, %v1211
      %v1213 = vsel %vm906, %v779, %v1159
      %v1214 = vsel %vm906, %v780, %v1158
      %v1215 = vsel %vm909, %v1213, %v1168
      %v1216 = vsel %vm909, %v1214, %v1167
      %v1217 = vsel %vm718, %v1168, %v1171
      %v1218 = vsel %vm718, %v1167, %v1172
      %v1219 = vsel %vm914, %v1217, %v1181
      %v1220 = vsel %vm914, %v1218, %v1180
      %v1221 = vsel %vm917, %v1219, %v1190
      %v1222 = vsel %vm917, %v1220, %v1189
      %v1223 = vsel %vm721, %v1190, %v1195
      %v1224 = vsel %vm721, %v1189, %v1196
      %v1225 = vsel %vm922, %v1223, %v1205
      %v1226 = vsel %vm922, %v1224, %v1204
      %v1227 = vsel %vm906, %v1212, 0
      %v1229 = vsel %vm906, %v1211, 0
      %1231 = vmatprep.subr.mxu0 %v1216
      %1232 = vmatpush1.msra.mxu0 %v1215
      %1233 = vmatprep.subr.mxu0 %v1222
      %1234 = vmatpush1.msra.mxu0 %v1221
      %1235 = vmatprep.subr.mxu0 %v1226
      %1236 = vmatpush1.msra.mxu0 %v1225
      %1237 = vmatprep.subr.mxu0 %v1229
      %1238 = vmatpush1.msra.mxu0 %v1227
      %1239 = vmatprep.subr.mxu0 0.0
      %1240 = vmatpush1.msra.mxu0 0.0
      %1241 = vmatprep.subr.mxu0 0.0
      %1242 = vmatpush1.msra.mxu0 0.0
      %1243 = vmatprep.subr.mxu0 0.0
      %1244 = vmatpush1.msra.mxu0 0.0
      %1245 = vmatprep.subr.mxu0 0.0
      %1246 = vmatpush1.msra.mxu0 0.0
      %1247 = vmatprep.subr.mxu0 0.0
      %1248 = vmatpush1.msra.mxu0 0.0
      %1249 = vmatprep.subr.mxu0 0.0
      %1250 = vmatpush1.msra.mxu0 0.0
      %1251 = vmatprep.subr.mxu0 0.0
      %1252 = vmatpush1.msra.mxu0 0.0
      %1253 = vmatprep.subr.mxu0 0.0
      %1254 = vmatpush1.msra.mxu0 0.0
      %1255 = vmatprep.subr.mxu0 0.0
      %1256 = vmatpush1.msra.mxu0 0.0
      %1257 = vmatprep.subr.mxu0 0.0
      %1258 = vmatpush1.msra.mxu0 0.0
      %1259 = vmatprep.subr.mxu0 0.0
      %1260 = vmatpush1.msra.mxu0 0.0
      %1261 = vmatprep.subr.mxu0 0.0
      %1262 = vmatpush1.msra.mxu0 0.0
      %1263 = vmatprep.subr.mxu0 0.0
      %1264 = vmatpush1.msra.mxu0 0.0
      %1265 = vmatprep.subr.mxu0 0.0
      %1266 = vmatpush1.msra.mxu0 0.0
      %1267 = vmatprep.subr.mxu0 0.0
      %1268 = vmatpush1.msra.mxu0 0.0
      %1269 = vmatprep.subr.mxu0 0.0
      %1270 = vmatpush1.msra.mxu0 0.0
      %1271 = vmatprep.subr.mxu0 0.0
      %1272 = vmatpush1.msra.mxu0 0.0
      %1273 = vmatprep.subr.mxu0 0.0
      %1274 = vmatpush1.msra.mxu0 0.0
      %1275 = vmatprep.subr.mxu0 0.0
      %1276 = vmatpush1.msra.mxu0 0.0
      %1277 = vmatprep.subr.mxu0 0.0
      %1278 = vmatpush1.msra.mxu0 0.0
      %1279 = vmatprep.subr.mxu0 0.0
      %1280 = vmatpush1.msra.mxu0 0.0
      %1281 = vmatprep.subr.mxu0 0.0
      %1282 = vmatpush1.msra.mxu0 0.0
      %1283 = vmatprep.subr.mxu0 0.0
      %1284 = vmatpush1.msra.mxu0 0.0
      %1285 = vmatprep.subr.mxu0 0.0
      %1286 = vmatpush1.msra.mxu0 0.0
      %1287 = vmatprep.subr.mxu0 0.0
      %1288 = vmatpush1.msra.mxu0 0.0
      %1289 = vmatprep.subr.mxu0 0.0
      %1290 = vmatpush1.msra.mxu0 0.0
      %1291 = vmatprep.subr.mxu0 0.0
      %1292 = vmatpush1.msra.mxu0 0.0
      %1293 = vmatprep.subr.mxu0 0.0
      %1294 = vmatpush1.msra.mxu0 0.0
      %1295 = vmatprep.mubr.f32.mxu0 0.0
      %1296 = vmatmul.mubr.f32.gmra.mrb[0].mxu0 %v927
      %v1297 = vpop.f32.mrb[0].mxu0
      %v1298 = vadd.f32 0.0, %v1297
      %v1299 = vpop.f32.mrb[0].mxu0
      %v1300 = vadd.f32 0.0, %v1299
      %1301 = vdwg.mxu0
      %v1302 = vld [vmem:[%s2] sm:$0xff]
      %1304 = vset.pattern.permute.xlu0 0
      %1305 = vperm.xlu0 %1304, %v1302
      %v1306 = vpop.permute.xlu0 %1305
      %v1308 = vmul.f32 %v1000, %v1306
      %v1309 = vmul.f32 %v1002, %v1306
      %v1310 = vld [vmem:[%s3] sm:$0xff]
      %1312 = vset.pattern.permute.xlu0 0
      %1313 = vperm.xlu0 %1312, %v1310
      %v1314 = vpop.permute.xlu0 %1313
      %v1316 = vadd.f32 %v1308, %v1314
      %v1317 = vadd.f32 %v1309, %v1314
      %v1318 = vmax.f32 %v1316, 0.0
      %v1319 = vmax.f32 %v1317, 0.0
      %v1320 = vmul.f32 %v1149, %v1306
      %v1321 = vmul.f32 %v1151, %v1306
      %v1322 = vadd.f32 %v1320, %v1314
      %v1323 = vadd.f32 %v1321, %v1314
      %v1324 = vmax.f32 %v1322, 0.0
      %v1325 = vmax.f32 %v1323, 0.0
      %v1326 = vmul.f32 %v1298, %v1306
      %v1327 = vmul.f32 %v1300, %v1306
      %v1328 = vadd.f32 %v1326, %v1314
      %v1329 = vadd.f32 %v1327, %v1314
      %v1330 = vmax.f32 %v1328, 0.0
      %v1331 = vmax.f32 %v1329, 0.0
      %v1332 = vld [vmem:[%s4] sm:$0xff]
      %1335 = vrot.lane.b32.xlu0 %v1318, 127
      %v1336 = vpop.permute.xlu0 %1335
      %1337 = vrot.lane.b32.xlu0 %v1319, 127
      %v1338 = vpop.permute.xlu0 %1337
      %v1339 = vsel %vm848, %v1336, %v1338
      %1342 = vrot.lane.b32.xlu0 %v1318, 126
      %v1343 = vpop.permute.xlu0 %1342
      %1344 = vrot.lane.b32.xlu0 %v1319, 126
      %v1345 = vpop.permute.xlu0 %1344
      %v1346 = vsel %vm858, %v1343, %v1345
      %1351 = vrot.lane.b32.xlu0 %v1324, 127
      %v1352 = vpop.permute.xlu0 %1351
      %1353 = vrot.lane.b32.xlu0 %v1325, 127
      %v1354 = vpop.permute.xlu0 %1353
      %v1355 = vsel %vm848, %v1352, %v1354
      %1358 = vrot.lane.b32.xlu0 %v1324, 126
      %v1359 = vpop.permute.xlu0 %1358
      %1360 = vrot.lane.b32.xlu0 %v1325, 126
      %v1361 = vpop.permute.xlu0 %1360
      %v1362 = vsel %vm858, %v1359, %v1361
      %1367 = vrot.lane.b32.xlu0 %v1330, 127
      %v1368 = vpop.permute.xlu0 %1367
      %1369 = vrot.lane.b32.xlu0 %v1331, 127
      %v1370 = vpop.permute.xlu0 %1369
      %v1371 = vsel %vm848, %v1368, %v1370
      %1374 = vrot.lane.b32.xlu0 %v1330, 126
      %v1375 = vpop.permute.xlu0 %1374
      %1376 = vrot.lane.b32.xlu0 %v1331, 126
      %v1377 = vpop.permute.xlu0 %1376
      %v1378 = vsel %vm858, %v1375, %v1377
      %vm1381 = vcmask 588800
      %v1383 = vsel %vm1381, %v1332, 0
      %1385 = vmatprep.subr.mxu0 %v1319
      %1386 = vmatpush1.msra.mxu0 %v1318
      %1387 = vmatprep.subr.mxu0 %v1338
      %1388 = vmatpush1.msra.mxu0 %v1339
      %1389 = vmatprep.subr.mxu0 %v1345
      %1390 = vmatpush1.msra.mxu0 %v1346
      %1391 = vmatprep.subr.mxu0 %v1325
      %1392 = vmatpush1.msra.mxu0 %v1324
      %1393 = vmatprep.subr.mxu0 %v1354
      %1394 = vmatpush1.msra.mxu0 %v1355
      %1395 = vmatprep.subr.mxu0 %v1361
      %1396 = vmatpush1.msra.mxu0 %v1362
      %1397 = vmatprep.subr.mxu0 %v1331
      %1398 = vmatpush1.msra.mxu0 %v1330
      %1399 = vmatprep.subr.mxu0 %v1370
      %1400 = vmatpush1.msra.mxu0 %v1371
      %1401 = vmatprep.subr.mxu0 %v1377
      %1402 = vmatpush1.msra.mxu0 %v1378
      %1403 = vmatprep.subr.mxu0 0.0
      %1404 = vmatpush1.msra.mxu0 0.0
      %1405 = vmatprep.subr.mxu0 0.0
      %1406 = vmatpush1.msra.mxu0 0.0
      %1407 = vmatprep.subr.mxu0 0.0
      %1408 = vmatpush1.msra.mxu0 0.0
      %1409 = vmatprep.subr.mxu0 0.0
      %1410 = vmatpush1.msra.mxu0 0.0
      %1411 = vmatprep.subr.mxu0 0.0
      %1412 = vmatpush1.msra.mxu0 0.0
      %1413 = vmatprep.subr.mxu0 0.0
      %1414 = vmatpush1.msra.mxu0 0.0
      %1415 = vmatprep.subr.mxu0 0.0
      %1416 = vmatpush1.msra.mxu0 0.0
      %1417 = vmatprep.subr.mxu0 0.0
      %1418 = vmatpush1.msra.mxu0 0.0
      %1419 = vmatprep.subr.mxu0 0.0
      %1420 = vmatpush1.msra.mxu0 0.0
      %1421 = vmatprep.subr.mxu0 0.0
      %1422 = vmatpush1.msra.mxu0 0.0
      %1423 = vmatprep.subr.mxu0 0.0
      %1424 = vmatpush1.msra.mxu0 0.0
      %1425 = vmatprep.subr.mxu0 0.0
      %1426 = vmatpush1.msra.mxu0 0.0
      %1427 = vmatprep.subr.mxu0 0.0
      %1428 = vmatpush1.msra.mxu0 0.0
      %1429 = vmatprep.subr.mxu0 0.0
      %1430 = vmatpush1.msra.mxu0 0.0
      %1431 = vmatprep.subr.mxu0 0.0
      %1432 = vmatpush1.msra.mxu0 0.0
      %1433 = vmatprep.subr.mxu0 0.0
      %1434 = vmatpush1.msra.mxu0 0.0
      %1435 = vmatprep.subr.mxu0 0.0
      %1436 = vmatpush1.msra.mxu0 0.0
      %1437 = vmatprep.subr.mxu0 0.0
      %1438 = vmatpush1.msra.mxu0 0.0
      %1439 = vmatprep.subr.mxu0 0.0
      %1440 = vmatpush1.msra.mxu0 0.0
      %1441 = vmatprep.subr.mxu0 0.0
      %1442 = vmatpush1.msra.mxu0 0.0
      %1443 = vmatprep.subr.mxu0 0.0
      %1444 = vmatpush1.msra.mxu0 0.0
      %1445 = vmatprep.subr.mxu0 0.0
      %1446 = vmatpush1.msra.mxu0 0.0
      %1447 = vmatprep.subr.mxu0 0.0
      %1448 = vmatpush1.msra.mxu0 0.0
      %1449 = vmatprep.mubr.f32.mxu0 0.0
      %1450 = vmatmul.mubr.f32.gmra.mrb[0].mxu0 %v1383
      %v1451 = vpop.f32.mrb[0].mxu0
      %v1452 = vadd.f32 0.0, %v1451
      %v1453 = vpop.f32.mrb[0].mxu0
      %v1454 = vadd.f32 0.0, %v1453
      %1455 = vdwg.mxu0
      %v1456 = vld [vmem:[%s5] sm:$0xff]
      %1458 = vset.pattern.permute.xlu0 0
      %1459 = vperm.xlu0 %1458, %v1456
      %v1460 = vpop.permute.xlu0 %1459
      %v1462 = vmul.f32 %v1452, %v1460
      %v1463 = vmul.f32 %v1454, %v1460
      %v1464 = vld [vmem:[%s6] sm:$0xff]
      %1466 = vset.pattern.permute.xlu0 0
      %1467 = vperm.xlu0 %1466, %v1464
      %v1468 = vpop.permute.xlu0 %1467
      %v1470 = vadd.f32 %v1462, %v1468
      %v1471 = vadd.f32 %v1463, %v1468
      %v1472 = vmax.f32 %v1470, 0.0
      %v1473 = vmax.f32 %v1471, 0.0
      %v1474 = vlaneseq
      %v1475 = vshrl.u32 %v1474, 7
      %v1476 = vadd.s32 %v1475, 8
      %v1477 = vadd.s32 %v1475, 16
      %v1478 = vadd.s32 %v1475, 24
      %v1479 = vadd.s32 %v1475, 32
      %v1480 = vadd.s32 %v1475, 40
      %v1481 = vadd.s32 %v1475, 48
      %v1482 = vadd.s32 %v1475, 56
      %v1483 = vadd.s32 %v1475, 64
      %v1484 = vadd.s32 %v1475, 72
      %v1485 = vadd.s32 %v1475, 80
      %v1486 = vadd.s32 %v1475, 88
      %v1487 = vadd.s32 %v1475, 96
      %v1488 = vadd.s32 %v1475, 104
      %v1489 = vadd.s32 %v1475, 112
      %v1490 = vadd.s32 %v1475, 120
      %v1491 = vadd.s32 %v1475, 128
      %v1492 = vadd.s32 %v1475, 136
      %v1493 = vadd.s32 %v1475, 144
      %v1494 = vadd.s32 %v1475, 152
      %v1495 = vadd.s32 %v1475, 160
      %v1496 = vadd.s32 %v1475, 168
      %v1497 = vadd.s32 %v1475, 176
      %v1498 = vadd.s32 %v1475, 184
      %v1499 = vadd.s32 %v1475, 192
      %v1500 = vadd.s32 %v1475, 200
      %v1501 = vadd.s32 %v1475, 208
      %v1502 = vadd.s32 %v1475, 216
      %v1503 = vlaneseq
      %v1504 = vand.u32 %v1503, 127
      %v1505 = vmul.u32 %v1504, 2
      %vm1506 = vcmp.eq.s32.totalorder %v1475, %v1505
      %vm1507 = vcmp.eq.s32.totalorder %v1476, %v1505
      %vm1508 = vcmp.eq.s32.totalorder %v1477, %v1505
      %vm1509 = vcmp.eq.s32.totalorder %v1478, %v1505
      %vm1510 = vcmp.eq.s32.totalorder %v1479, %v1505
      %vm1511 = vcmp.eq.s32.totalorder %v1480, %v1505
      %vm1512 = vcmp.eq.s32.totalorder %v1481, %v1505
      %vm1513 = vcmp.eq.s32.totalorder %v1482, %v1505
      %vm1514 = vcmp.eq.s32.totalorder %v1483, %v1505
      %vm1515 = vcmp.eq.s32.totalorder %v1484, %v1505
      %vm1516 = vcmp.eq.s32.totalorder %v1485, %v1505
      %vm1517 = vcmp.eq.s32.totalorder %v1486, %v1505
      %vm1518 = vcmp.eq.s32.totalorder %v1487, %v1505
      %vm1519 = vcmp.eq.s32.totalorder %v1488, %v1505
      %vm1520 = vcmp.eq.s32.totalorder %v1489, %v1505
      %vm1521 = vcmp.eq.s32.totalorder %v1490, %v1505
      %vm1522 = vcmp.eq.s32.totalorder %v1491, %v1505
      %vm1523 = vcmp.eq.s32.totalorder %v1492, %v1505
      %vm1524 = vcmp.eq.s32.totalorder %v1493, %v1505
      %vm1525 = vcmp.eq.s32.totalorder %v1494, %v1505
      %vm1526 = vcmp.eq.s32.totalorder %v1495, %v1505
      %vm1527 = vcmp.eq.s32.totalorder %v1496, %v1505
      %vm1528 = vcmp.eq.s32.totalorder %v1497, %v1505
      %vm1529 = vcmp.eq.s32.totalorder %v1498, %v1505
      %vm1530 = vcmp.eq.s32.totalorder %v1499, %v1505
      %vm1531 = vcmp.eq.s32.totalorder %v1500, %v1505
      %vm1532 = vcmp.eq.s32.totalorder %v1501, %v1505
      %vm1533 = vcmp.eq.s32.totalorder %v1502, %v1505
      %v1534 = vsel %vm1506, 1, 0
      %v1535 = vsel %vm1507, 1, 0
      %v1536 = vsel %vm1508, 1, 0
      %v1537 = vsel %vm1509, 1, 0
      %v1538 = vsel %vm1510, 1, 0
      %v1539 = vsel %vm1511, 1, 0
      %v1540 = vsel %vm1512, 1, 0
      %v1541 = vsel %vm1513, 1, 0
      %v1542 = vsel %vm1514, 1, 0
      %v1543 = vsel %vm1515, 1, 0
      %v1544 = vsel %vm1516, 1, 0
      %v1545 = vsel %vm1517, 1, 0
      %v1546 = vsel %vm1518, 1, 0
      %v1547 = vsel %vm1519, 1, 0
      %v1548 = vsel %vm1520, 1, 0
      %v1549 = vsel %vm1521, 1, 0
      %v1550 = vsel %vm1522, 1, 0
      %v1551 = vsel %vm1523, 1, 0
      %v1552 = vsel %vm1524, 1, 0
      %v1553 = vsel %vm1525, 1, 0
      %v1554 = vsel %vm1526, 1, 0
      %v1555 = vsel %vm1527, 1, 0
      %v1556 = vsel %vm1528, 1, 0
      %v1557 = vsel %vm1529, 1, 0
      %v1558 = vsel %vm1530, 1, 0
      %v1559 = vsel %vm1531, 1, 0
      %v1560 = vsel %vm1532, 1, 0
      %v1561 = vsel %vm1533, 1, 0
      %v1562 = vcvt.s32.f32 %v1534
      %v1563 = vcvt.s32.f32 %v1535
      %v1564 = vcvt.s32.f32 %v1536
      %v1565 = vcvt.s32.f32 %v1537
      %v1566 = vcvt.s32.f32 %v1538
      %v1567 = vcvt.s32.f32 %v1539
      %v1568 = vcvt.s32.f32 %v1540
      %v1569 = vcvt.s32.f32 %v1541
      %v1570 = vcvt.s32.f32 %v1542
      %v1571 = vcvt.s32.f32 %v1543
      %v1572 = vcvt.s32.f32 %v1544
      %v1573 = vcvt.s32.f32 %v1545
      %v1574 = vcvt.s32.f32 %v1546
      %v1575 = vcvt.s32.f32 %v1547
      %v1576 = vcvt.s32.f32 %v1548
      %v1577 = vcvt.s32.f32 %v1549
      %v1578 = vcvt.s32.f32 %v1550
      %v1579 = vcvt.s32.f32 %v1551
      %v1580 = vcvt.s32.f32 %v1552
      %v1581 = vcvt.s32.f32 %v1553
      %v1582 = vcvt.s32.f32 %v1554
      %v1583 = vcvt.s32.f32 %v1555
      %v1584 = vcvt.s32.f32 %v1556
      %v1585 = vcvt.s32.f32 %v1557
      %v1586 = vcvt.s32.f32 %v1558
      %v1587 = vcvt.s32.f32 %v1559
      %v1588 = vcvt.s32.f32 %v1560
      %v1589 = vcvt.s32.f32 %v1561
      %v1590 = vadd.s32 %v1505, 1
      %vm1591 = vcmp.eq.s32.totalorder %v1475, %v1590
      %vm1592 = vcmp.eq.s32.totalorder %v1476, %v1590
      %vm1593 = vcmp.eq.s32.totalorder %v1477, %v1590
      %vm1594 = vcmp.eq.s32.totalorder %v1478, %v1590
      %vm1595 = vcmp.eq.s32.totalorder %v1479, %v1590
      %vm1596 = vcmp.eq.s32.totalorder %v1480, %v1590
      %vm1597 = vcmp.eq.s32.totalorder %v1481, %v1590
      %vm1598 = vcmp.eq.s32.totalorder %v1482, %v1590
      %vm1599 = vcmp.eq.s32.totalorder %v1483, %v1590
      %vm1600 = vcmp.eq.s32.totalorder %v1484, %v1590
      %vm1601 = vcmp.eq.s32.totalorder %v1485, %v1590
      %vm1602 = vcmp.eq.s32.totalorder %v1486, %v1590
      %vm1603 = vcmp.eq.s32.totalorder %v1487, %v1590
      %vm1604 = vcmp.eq.s32.totalorder %v1488, %v1590
      %vm1605 = vcmp.eq.s32.totalorder %v1489, %v1590
      %vm1606 = vcmp.eq.s32.totalorder %v1490, %v1590
      %vm1607 = vcmp.eq.s32.totalorder %v1491, %v1590
      %vm1608 = vcmp.eq.s32.totalorder %v1492, %v1590
      %vm1609 = vcmp.eq.s32.totalorder %v1493, %v1590
      %vm1610 = vcmp.eq.s32.totalorder %v1494, %v1590
      %vm1611 = vcmp.eq.s32.totalorder %v1495, %v1590
      %vm1612 = vcmp.eq.s32.totalorder %v1496, %v1590
      %vm1613 = vcmp.eq.s32.totalorder %v1497, %v1590
      %vm1614 = vcmp.eq.s32.totalorder %v1498, %v1590
      %vm1615 = vcmp.eq.s32.totalorder %v1499, %v1590
      %vm1616 = vcmp.eq.s32.totalorder %v1500, %v1590
      %vm1617 = vcmp.eq.s32.totalorder %v1501, %v1590
      %vm1618 = vcmp.eq.s32.totalorder %v1502, %v1590
      %v1619 = vsel %vm1591, 1, 0
      %v1620 = vsel %vm1592, 1, 0
      %v1621 = vsel %vm1593, 1, 0
      %v1622 = vsel %vm1594, 1, 0
      %v1623 = vsel %vm1595, 1, 0
      %v1624 = vsel %vm1596, 1, 0
      %v1625 = vsel %vm1597, 1, 0
      %v1626 = vsel %vm1598, 1, 0
      %v1627 = vsel %vm1599, 1, 0
      %v1628 = vsel %vm1600, 1, 0
      %v1629 = vsel %vm1601, 1, 0
      %v1630 = vsel %vm1602, 1, 0
      %v1631 = vsel %vm1603, 1, 0
      %v1632 = vsel %vm1604, 1, 0
      %v1633 = vsel %vm1605, 1, 0
      %v1634 = vsel %vm1606, 1, 0
      %v1635 = vsel %vm1607, 1, 0
      %v1636 = vsel %vm1608, 1, 0
      %v1637 = vsel %vm1609, 1, 0
      %v1638 = vsel %vm1610, 1, 0
      %v1639 = vsel %vm1611, 1, 0
      %v1640 = vsel %vm1612, 1, 0
      %v1641 = vsel %vm1613, 1, 0
      %v1642 = vsel %vm1614, 1, 0
      %v1643 = vsel %vm1615, 1, 0
      %v1644 = vsel %vm1616, 1, 0
      %v1645 = vsel %vm1617, 1, 0
      %v1646 = vsel %vm1618, 1, 0
      %v1647 = vcvt.s32.f32 %v1619
      %v1648 = vcvt.s32.f32 %v1620
      %v1649 = vcvt.s32.f32 %v1621
      %v1650 = vcvt.s32.f32 %v1622
      %v1651 = vcvt.s32.f32 %v1623
      %v1652 = vcvt.s32.f32 %v1624
      %v1653 = vcvt.s32.f32 %v1625
      %v1654 = vcvt.s32.f32 %v1626
      %v1655 = vcvt.s32.f32 %v1627
      %v1656 = vcvt.s32.f32 %v1628
      %v1657 = vcvt.s32.f32 %v1629
      %v1658 = vcvt.s32.f32 %v1630
      %v1659 = vcvt.s32.f32 %v1631
      %v1660 = vcvt.s32.f32 %v1632
      %v1661 = vcvt.s32.f32 %v1633
      %v1662 = vcvt.s32.f32 %v1634
      %v1663 = vcvt.s32.f32 %v1635
      %v1664 = vcvt.s32.f32 %v1636
      %v1665 = vcvt.s32.f32 %v1637
      %v1666 = vcvt.s32.f32 %v1638
      %v1667 = vcvt.s32.f32 %v1639
      %v1668 = vcvt.s32.f32 %v1640
      %v1669 = vcvt.s32.f32 %v1641
      %v1670 = vcvt.s32.f32 %v1642
      %v1671 = vcvt.s32.f32 %v1643
      %v1672 = vcvt.s32.f32 %v1644
      %v1673 = vcvt.s32.f32 %v1645
      %v1674 = vcvt.s32.f32 %v1646
      %vm1675 = vcmask 785408
      %v1677 = vsel %vm1675, %v1473, 0
      %1679 = vmatprep.subr.mxu0 0.0
      %1680 = vmatpush1.msra.mxu0 %v1562
      %1681 = vmatprep.subr.mxu0 0.0
      %1682 = vmatpush1.msra.mxu0 %v1563
      %1683 = vmatprep.subr.mxu0 0.0
      %1684 = vmatpush1.msra.mxu0 %v1564
      %1685 = vmatprep.subr.mxu0 0.0
      %1686 = vmatpush1.msra.mxu0 %v1565
      %1687 = vmatprep.subr.mxu0 0.0
      %1688 = vmatpush1.msra.mxu0 %v1566
      %1689 = vmatprep.subr.mxu0 0.0
      %1690 = vmatpush1.msra.mxu0 %v1567
      %1691 = vmatprep.subr.mxu0 0.0
      %1692 = vmatpush1.msra.mxu0 %v1568
      %1693 = vmatprep.subr.mxu0 0.0
      %1694 = vmatpush1.msra.mxu0 %v1569
      %1695 = vmatprep.subr.mxu0 0.0
      %1696 = vmatpush1.msra.mxu0 %v1570
      %1697 = vmatprep.subr.mxu0 0.0
      %1698 = vmatpush1.msra.mxu0 %v1571
      %1699 = vmatprep.subr.mxu0 0.0
      %1700 = vmatpush1.msra.mxu0 %v1572
      %1701 = vmatprep.subr.mxu0 0.0
      %1702 = vmatpush1.msra.mxu0 %v1573
      %1703 = vmatprep.subr.mxu0 0.0
      %1704 = vmatpush1.msra.mxu0 %v1574
      %1705 = vmatprep.subr.mxu0 0.0
      %1706 = vmatpush1.msra.mxu0 %v1575
      %1707 = vmatprep.subr.mxu0 0.0
      %1708 = vmatpush1.msra.mxu0 %v1576
      %1709 = vmatprep.subr.mxu0 0.0
      %1710 = vmatpush1.msra.mxu0 %v1577
      %1711 = vmatprep.subr.mxu0 0.0
      %1712 = vmatpush1.msra.mxu0 %v1578
      %1713 = vmatprep.subr.mxu0 0.0
      %1714 = vmatpush1.msra.mxu0 %v1579
      %1715 = vmatprep.subr.mxu0 0.0
      %1716 = vmatpush1.msra.mxu0 %v1580
      %1717 = vmatprep.subr.mxu0 0.0
      %1718 = vmatpush1.msra.mxu0 %v1581
      %1719 = vmatprep.subr.mxu0 0.0
      %1720 = vmatpush1.msra.mxu0 %v1582
      %1721 = vmatprep.subr.mxu0 0.0
      %1722 = vmatpush1.msra.mxu0 %v1583
      %1723 = vmatprep.subr.mxu0 0.0
      %1724 = vmatpush1.msra.mxu0 %v1584
      %1725 = vmatprep.subr.mxu0 0.0
      %1726 = vmatpush1.msra.mxu0 %v1585
      %1727 = vmatprep.subr.mxu0 0.0
      %1728 = vmatpush1.msra.mxu0 %v1586
      %1729 = vmatprep.subr.mxu0 0.0
      %1730 = vmatpush1.msra.mxu0 %v1587
      %1731 = vmatprep.subr.mxu0 0.0
      %1732 = vmatpush1.msra.mxu0 %v1588
      %1733 = vmatprep.subr.mxu0 0.0
      %1734 = vmatpush1.msra.mxu0 %v1589
      %1735 = vmatprep.subr.mxu0 0.0
      %1736 = vmatpush1.msra.mxu0 0.0
      %1737 = vmatprep.subr.mxu0 0.0
      %1738 = vmatpush1.msra.mxu0 0.0
      %1739 = vmatprep.subr.mxu0 0.0
      %1740 = vmatpush1.msra.mxu0 0.0
      %1741 = vmatprep.subr.mxu0 0.0
      %1742 = vmatpush1.msra.mxu0 0.0
      %1743 = vmatprep.mubr.f32.mxu0 %v1677
      %1744 = vmatmul.mubr.f32.gmra.mrb[0].mxu0 %v1472
      %v1745 = vpop.f32.mrb[0].mxu0
      %v1746 = vadd.f32 0.0, %v1745
      %v1747 = vpop.f32.mrb[0].mxu0
      %1748 = vdwg.mxu0
      %1749 = vmatprep.subr.mxu0 0.0
      %1750 = vmatpush1.msra.mxu0 %v1647
      %1751 = vmatprep.subr.mxu0 0.0
      %1752 = vmatpush1.msra.mxu0 %v1648
      %1753 = vmatprep.subr.mxu0 0.0
      %1754 = vmatpush1.msra.mxu0 %v1649
      %1755 = vmatprep.subr.mxu0 0.0
      %1756 = vmatpush1.msra.mxu0 %v1650
      %1757 = vmatprep.subr.mxu0 0.0
      %1758 = vmatpush1.msra.mxu0 %v1651
      %1759 = vmatprep.subr.mxu0 0.0
      %1760 = vmatpush1.msra.mxu0 %v1652
      %1761 = vmatprep.subr.mxu0 0.0
      %1762 = vmatpush1.msra.mxu0 %v1653
      %1763 = vmatprep.subr.mxu0 0.0
      %1764 = vmatpush1.msra.mxu0 %v1654
      %1765 = vmatprep.subr.mxu0 0.0
      %1766 = vmatpush1.msra.mxu0 %v1655
      %1767 = vmatprep.subr.mxu0 0.0
      %1768 = vmatpush1.msra.mxu0 %v1656
      %1769 = vmatprep.subr.mxu0 0.0
      %1770 = vmatpush1.msra.mxu0 %v1657
      %1771 = vmatprep.subr.mxu0 0.0
      %1772 = vmatpush1.msra.mxu0 %v1658
      %1773 = vmatprep.subr.mxu0 0.0
      %1774 = vmatpush1.msra.mxu0 %v1659
      %1775 = vmatprep.subr.mxu0 0.0
      %1776 = vmatpush1.msra.mxu0 %v1660
      %1777 = vmatprep.subr.mxu0 0.0
      %1778 = vmatpush1.msra.mxu0 %v1661
      %1779 = vmatprep.subr.mxu0 0.0
      %1780 = vmatpush1.msra.mxu0 %v1662
      %1781 = vmatprep.subr.mxu0 0.0
      %1782 = vmatpush1.msra.mxu0 %v1663
      %1783 = vmatprep.subr.mxu0 0.0
      %1784 = vmatpush1.msra.mxu0 %v1664
      %1785 = vmatprep.subr.mxu0 0.0
      %1786 = vmatpush1.msra.mxu0 %v1665
      %1787 = vmatprep.subr.mxu0 0.0
      %1788 = vmatpush1.msra.mxu0 %v1666
      %1789 = vmatprep.subr.mxu0 0.0
      %1790 = vmatpush1.msra.mxu0 %v1667
      %1791 = vmatprep.subr.mxu0 0.0
      %1792 = vmatpush1.msra.mxu0 %v1668
      %1793 = vmatprep.subr.mxu0 0.0
      %1794 = vmatpush1.msra.mxu0 %v1669
      %1795 = vmatprep.subr.mxu0 0.0
      %1796 = vmatpush1.msra.mxu0 %v1670
      %1797 = vmatprep.subr.mxu0 0.0
      %1798 = vmatpush1.msra.mxu0 %v1671
      %1799 = vmatprep.subr.mxu0 0.0
      %1800 = vmatpush1.msra.mxu0 %v1672
      %1801 = vmatprep.subr.mxu0 0.0
      %1802 = vmatpush1.msra.mxu0 %v1673
      %1803 = vmatprep.subr.mxu0 0.0
      %1804 = vmatpush1.msra.mxu0 %v1674
      %1805 = vmatprep.subr.mxu0 0.0
      %1806 = vmatpush1.msra.mxu0 0.0
      %1807 = vmatprep.subr.mxu0 0.0
      %1808 = vmatpush1.msra.mxu0 0.0
      %1809 = vmatprep.subr.mxu0 0.0
      %1810 = vmatpush1.msra.mxu0 0.0
      %1811 = vmatprep.subr.mxu0 0.0
      %1812 = vmatpush1.msra.mxu0 0.0
      %1813 = vmatprep.mubr.f32.mxu0 %v1677
      %1814 = vmatmul.mubr.f32.gmra.mrb[0].mxu0 %v1472
      %v1815 = vpop.f32.mrb[0].mxu0
      %v1816 = vadd.f32 0.0, %v1815
      %v1817 = vpop.f32.mrb[0].mxu0
      %1818 = vdwg.mxu0
      %v1819 = vmax.f32 %v1746, %v1816
      %1821 = vrot.lane.b32.xlu0 %v1819, 127
      %v1822 = vpop.permute.xlu0 %1821
      %1824 = vrot.lane.b32.xlu0 %v1819, 126
      %v1825 = vpop.permute.xlu0 %1824
      %v1827 = vld [vmem:[%s7] sm:$0xff]
      %vm1828 = vcmask 195584
      %v1830 = vsel %vm1828, %v1827, 0
      %1832 = vmatprep.subr.mxu0 0.0
      %1833 = vmatpush1.msra.mxu0 %v1819
      %1834 = vmatprep.subr.mxu0 0.0
      %1835 = vmatpush1.msra.mxu0 %v1822
      %1836 = vmatprep.subr.mxu0 0.0
      %1837 = vmatpush1.msra.mxu0 %v1825
      %1838 = vmatprep.subr.mxu0 0.0
      %1839 = vmatpush1.msra.mxu0 0.0
      %1840 = vmatprep.subr.mxu0 0.0
      %1841 = vmatpush1.msra.mxu0 0.0
      %1842 = vmatprep.subr.mxu0 0.0
      %1843 = vmatpush1.msra.mxu0 0.0
      %1844 = vmatprep.subr.mxu0 0.0
      %1845 = vmatpush1.msra.mxu0 0.0
      %1846 = vmatprep.subr.mxu0 0.0
      %1847 = vmatpush1.msra.mxu0 0.0
      %1848 = vmatprep.subr.mxu0 0.0
      %1849 = vmatpush1.msra.mxu0 0.0
      %1850 = vmatprep.subr.mxu0 0.0
      %1851 = vmatpush1.msra.mxu0 0.0
      %1852 = vmatprep.subr.mxu0 0.0
      %1853 = vmatpush1.msra.mxu0 0.0
      %1854 = vmatprep.subr.mxu0 0.0
      %1855 = vmatpush1.msra.mxu0 0.0
      %1856 = vmatprep.subr.mxu0 0.0
      %1857 = vmatpush1.msra.mxu0 0.0
      %1858 = vmatprep.subr.mxu0 0.0
      %1859 = vmatpush1.msra.mxu0 0.0
      %1860 = vmatprep.subr.mxu0 0.0
      %1861 = vmatpush1.msra.mxu0 0.0
      %1862 = vmatprep.subr.mxu0 0.0
      %1863 = vmatpush1.msra.mxu0 0.0
      %1864 = vmatprep.subr.mxu0 0.0
      %1865 = vmatpush1.msra.mxu0 0.0
      %1866 = vmatprep.subr.mxu0 0.0
      %1867 = vmatpush1.msra.mxu0 0.0
      %1868 = vmatprep.subr.mxu0 0.0
      %1869 = vmatpush1.msra.mxu0 0.0
      %1870 = vmatprep.subr.mxu0 0.0
      %1871 = vmatpush1.msra.mxu0 0.0
      %1872 = vmatprep.subr.mxu0 0.0
      %1873 = vmatpush1.msra.mxu0 0.0
      %1874 = vmatprep.subr.mxu0 0.0
      %1875 = vmatpush1.msra.mxu0 0.0
      %1876 = vmatprep.subr.mxu0 0.0
      %1877 = vmatpush1.msra.mxu0 0.0
      %1878 = vmatprep.subr.mxu0 0.0
      %1879 = vmatpush1.msra.mxu0 0.0
      %1880 = vmatprep.subr.mxu0 0.0
      %1881 = vmatpush1.msra.mxu0 0.0
      %1882 = vmatprep.subr.mxu0 0.0
      %1883 = vmatpush1.msra.mxu0 0.0
      %1884 = vmatprep.subr.mxu0 0.0
      %1885 = vmatpush1.msra.mxu0 0.0
      %1886 = vmatprep.subr.mxu0 0.0
      %1887 = vmatpush1.msra.mxu0 0.0
      %1888 = vmatprep.subr.mxu0 0.0
      %1889 = vmatpush1.msra.mxu0 0.0
      %1890 = vmatprep.subr.mxu0 0.0
      %1891 = vmatpush1.msra.mxu0 0.0
      %1892 = vmatprep.subr.mxu0 0.0
      %1893 = vmatpush1.msra.mxu0 0.0
      %1894 = vmatprep.subr.mxu0 0.0
      %1895 = vmatpush1.msra.mxu0 0.0
      %1896 = vmatprep.mubr.f32.mxu0 0.0
      %1897 = vmatmul.mubr.f32.gmra.mrb[0].mxu0 %v1830
      %v1898 = vpop.f32.mrb[0].mxu0
      %v1899 = vadd.f32 0.0, %v1898
      %v1900 = vpop.f32.mrb[0].mxu0
      %1901 = vdwg.mxu0
      %v1902 = vld [vmem:[%s8] sm:$0xff]
      %1904 = vset.pattern.permute.xlu0 0
      %1905 = vperm.xlu0 %1904, %v1902
      %v1906 = vpop.permute.xlu0 %1905
      %v1908 = vmul.f32 %v1899, %v1906
      %v1909 = vld [vmem:[%s9] sm:$0xff]
      %1911 = vset.pattern.permute.xlu0 0
      %1912 = vperm.xlu0 %1911, %v1909
      %v1913 = vpop.permute.xlu0 %1912
      %v1915 = vadd.f32 %v1908, %v1913
      %v1916 = vmax.f32 %v1915, 0.0
      %1918 = vrot.lane.b32.xlu0 %v1916, 127
      %v1919 = vpop.permute.xlu0 %1918
      %1921 = vrot.lane.b32.xlu0 %v1916, 126
      %v1922 = vpop.permute.xlu0 %1921
      %v1924 = vld [vmem:[%s10] sm:$0xff]
      %v1926 = vsel %vm1828, %v1924, 0
      %1928 = vmatprep.subr.mxu0 0.0
      %1929 = vmatpush1.msra.mxu0 %v1916
      %1930 = vmatprep.subr.mxu0 0.0
      %1931 = vmatpush1.msra.mxu0 %v1919
      %1932 = vmatprep.subr.mxu0 0.0
      %1933 = vmatpush1.msra.mxu0 %v1922
      %1934 = vmatprep.subr.mxu0 0.0
      %1935 = vmatpush1.msra.mxu0 0.0
      %1936 = vmatprep.subr.mxu0 0.0
      %1937 = vmatpush1.msra.mxu0 0.0
      %1938 = vmatprep.subr.mxu0 0.0
      %1939 = vmatpush1.msra.mxu0 0.0
      %1940 = vmatprep.subr.mxu0 0.0
      %1941 = vmatpush1.msra.mxu0 0.0
      %1942 = vmatprep.subr.mxu0 0.0
      %1943 = vmatpush1.msra.mxu0 0.0
      %1944 = vmatprep.subr.mxu0 0.0
      %1945 = vmatpush1.msra.mxu0 0.0
      %1946 = vmatprep.subr.mxu0 0.0
      %1947 = vmatpush1.msra.mxu0 0.0
      %1948 = vmatprep.subr.mxu0 0.0
      %1949 = vmatpush1.msra.mxu0 0.0
      %1950 = vmatprep.subr.mxu0 0.0
      %1951 = vmatpush1.msra.mxu0 0.0
      %1952 = vmatprep.subr.mxu0 0.0
      %1953 = vmatpush1.msra.mxu0 0.0
      %1954 = vmatprep.subr.mxu0 0.0
      %1955 = vmatpush1.msra.mxu0 0.0
      %1956 = vmatprep.subr.mxu0 0.0
      %1957 = vmatpush1.msra.mxu0 0.0
      %1958 = vmatprep.subr.mxu0 0.0
      %1959 = vmatpush1.msra.mxu0 0.0
      %1960 = vmatprep.subr.mxu0 0.0
      %1961 = vmatpush1.msra.mxu0 0.0
      %1962 = vmatprep.subr.mxu0 0.0
      %1963 = vmatpush1.msra.mxu0 0.0
      %1964 = vmatprep.subr.mxu0 0.0
      %1965 = vmatpush1.msra.mxu0 0.0
      %1966 = vmatprep.subr.mxu0 0.0
      %1967 = vmatpush1.msra.mxu0 0.0
      %1968 = vmatprep.subr.mxu0 0.0
      %1969 = vmatpush1.msra.mxu0 0.0
      %1970 = vmatprep.subr.mxu0 0.0
      %1971 = vmatpush1.msra.mxu0 0.0
      %1972 = vmatprep.subr.mxu0 0.0
      %1973 = vmatpush1.msra.mxu0 0.0
      %1974 = vmatprep.subr.mxu0 0.0
      %1975 = vmatpush1.msra.mxu0 0.0
      %1976 = vmatprep.subr.mxu0 0.0
      %1977 = vmatpush1.msra.mxu0 0.0
      %1978 = vmatprep.subr.mxu0 0.0
      %1979 = vmatpush1.msra.mxu0 0.0
      %1980 = vmatprep.subr.mxu0 0.0
      %1981 = vmatpush1.msra.mxu0 0.0
      %1982 = vmatprep.subr.mxu0 0.0
      %1983 = vmatpush1.msra.mxu0 0.0
      %1984 = vmatprep.subr.mxu0 0.0
      %1985 = vmatpush1.msra.mxu0 0.0
      %1986 = vmatprep.subr.mxu0 0.0
      %1987 = vmatpush1.msra.mxu0 0.0
      %1988 = vmatprep.subr.mxu0 0.0
      %1989 = vmatpush1.msra.mxu0 0.0
      %1990 = vmatprep.subr.mxu0 0.0
      %1991 = vmatpush1.msra.mxu0 0.0
      %1992 = vmatprep.mubr.f32.mxu0 0.0
      %1993 = vmatmul.mubr.f32.gmra.mrb[0].mxu0 %v1926
      %v1994 = vpop.f32.mrb[0].mxu0
      %v1995 = vadd.f32 0.0, %v1994
      %v1996 = vpop.f32.mrb[0].mxu0
      %1997 = vdwg.mxu0
      %v1998 = vld [vmem:[%s11] sm:$0xff]
      %2000 = vset.pattern.permute.xlu0 0
      %2001 = vperm.xlu0 %2000, %v1998
      %v2002 = vpop.permute.xlu0 %2001
      %v2004 = vmul.f32 %v1995, %v2002
      %v2005 = vld [vmem:[%s12] sm:$0xff]
      %2007 = vset.pattern.permute.xlu0 0
      %2008 = vperm.xlu0 %2007, %v2005
      %v2009 = vpop.permute.xlu0 %2008
      %v2011 = vadd.f32 %v2004, %v2009
      %v2012 = vmax.f32 %v2011, 0.0
      %vm2013 = vcmask 883712
      %v2015 = vsel %vm2013, %v2012, 0
      %v2018 = vsel %vm914, %v1575, 0
      %2020 = vmatprep.subr.mxu0 0.0
      %2021 = vmatpush1.msra.mxu0 %v1562
      %2022 = vmatprep.subr.mxu0 0.0
      %2023 = vmatpush1.msra.mxu0 %v1563
      %2024 = vmatprep.subr.mxu0 0.0
      %2025 = vmatpush1.msra.mxu0 %v1564
      %2026 = vmatprep.subr.mxu0 0.0
      %2027 = vmatpush1.msra.mxu0 %v1565
      %2028 = vmatprep.subr.mxu0 0.0
      %2029 = vmatpush1.msra.mxu0 %v1566
      %2030 = vmatprep.subr.mxu0 0.0
      %2031 = vmatpush1.msra.mxu0 %v1567
      %2032 = vmatprep.subr.mxu0 0.0
      %2033 = vmatpush1.msra.mxu0 %v1568
      %2034 = vmatprep.subr.mxu0 0.0
      %2035 = vmatpush1.msra.mxu0 %v1569
      %2036 = vmatprep.subr.mxu0 0.0
      %2037 = vmatpush1.msra.mxu0 %v1570
      %2038 = vmatprep.subr.mxu0 0.0
      %2039 = vmatpush1.msra.mxu0 %v1571
      %2040 = vmatprep.subr.mxu0 0.0
      %2041 = vmatpush1.msra.mxu0 %v1572
      %2042 = vmatprep.subr.mxu0 0.0
      %2043 = vmatpush1.msra.mxu0 %v1573
      %2044 = vmatprep.subr.mxu0 0.0
      %2045 = vmatpush1.msra.mxu0 %v1574
      %2046 = vmatprep.subr.mxu0 0.0
      %2047 = vmatpush1.msra.mxu0 %v2018
      %2048 = vmatprep.subr.mxu0 0.0
      %2049 = vmatpush1.msra.mxu0 0.0
      %2050 = vmatprep.subr.mxu0 0.0
      %2051 = vmatpush1.msra.mxu0 0.0
      %2052 = vmatprep.subr.mxu0 0.0
      %2053 = vmatpush1.msra.mxu0 0.0
      %2054 = vmatprep.subr.mxu0 0.0
      %2055 = vmatpush1.msra.mxu0 0.0
      %2056 = vmatprep.subr.mxu0 0.0
      %2057 = vmatpush1.msra.mxu0 0.0
      %2058 = vmatprep.subr.mxu0 0.0
      %2059 = vmatpush1.msra.mxu0 0.0
      %2060 = vmatprep.subr.mxu0 0.0
      %2061 = vmatpush1.msra.mxu0 0.0
      %2062 = vmatprep.subr.mxu0 0.0
      %2063 = vmatpush1.msra.mxu0 0.0
      %2064 = vmatprep.subr.mxu0 0.0
      %2065 = vmatpush1.msra.mxu0 0.0
      %2066 = vmatprep.subr.mxu0 0.0
      %2067 = vmatpush1.msra.mxu0 0.0
      %2068 = vmatprep.subr.mxu0 0.0
      %2069 = vmatpush1.msra.mxu0 0.0
      %2070 = vmatprep.subr.mxu0 0.0
      %2071 = vmatpush1.msra.mxu0 0.0
      %2072 = vmatprep.subr.mxu0 0.0
      %2073 = vmatpush1.msra.mxu0 0.0
      %2074 = vmatprep.subr.mxu0 0.0
      %2075 = vmatpush1.msra.mxu0 0.0
      %2076 = vmatprep.subr.mxu0 0.0
      %2077 = vmatpush1.msra.mxu0 0.0
      %2078 = vmatprep.subr.mxu0 0.0
      %2079 = vmatpush1.msra.mxu0 0.0
      %2080 = vmatprep.subr.mxu0 0.0
      %2081 = vmatpush1.msra.mxu0 0.0
      %2082 = vmatprep.subr.mxu0 0.0
      %2083 = vmatpush1.msra.mxu0 0.0
      %2084 = vmatprep.mubr.f32.mxu0 0.0
      %2085 = vmatmul.mubr.f32.gmra.mrb[0].mxu0 %v2015
      %v2086 = vpop.f32.mrb[0].mxu0
      %v2087 = vadd.f32 0.0, %v2086
      %v2088 = vpop.f32.mrb[0].mxu0
      %2089 = vdwg.mxu0
      %v2091 = vsel %vm914, %v1660, 0
      %2093 = vmatprep.subr.mxu0 0.0
      %2094 = vmatpush1.msra.mxu0 %v1647
      %2095 = vmatprep.subr.mxu0 0.0
      %2096 = vmatpush1.msra.mxu0 %v1648
      %2097 = vmatprep.subr.mxu0 0.0
      %2098 = vmatpush1.msra.mxu0 %v1649
      %2099 = vmatprep.subr.mxu0 0.0
      %2100 = vmatpush1.msra.mxu0 %v1650
      %2101 = vmatprep.subr.mxu0 0.0
      %2102 = vmatpush1.msra.mxu0 %v1651
      %2103 = vmatprep.subr.mxu0 0.0
      %2104 = vmatpush1.msra.mxu0 %v1652
      %2105 = vmatprep.subr.mxu0 0.0
      %2106 = vmatpush1.msra.mxu0 %v1653
      %2107 = vmatprep.subr.mxu0 0.0
      %2108 = vmatpush1.msra.mxu0 %v1654
      %2109 = vmatprep.subr.mxu0 0.0
      %2110 = vmatpush1.msra.mxu0 %v1655
      %2111 = vmatprep.subr.mxu0 0.0
      %2112 = vmatpush1.msra.mxu0 %v1656
      %2113 = vmatprep.subr.mxu0 0.0
      %2114 = vmatpush1.msra.mxu0 %v1657
      %2115 = vmatprep.subr.mxu0 0.0
      %2116 = vmatpush1.msra.mxu0 %v1658
      %2117 = vmatprep.subr.mxu0 0.0
      %2118 = vmatpush1.msra.mxu0 %v1659
      %2119 = vmatprep.subr.mxu0 0.0
      %2120 = vmatpush1.msra.mxu0 %v2091
      %2121 = vmatprep.subr.mxu0 0.0
      %2122 = vmatpush1.msra.mxu0 0.0
      %2123 = vmatprep.subr.mxu0 0.0
      %2124 = vmatpush1.msra.mxu0 0.0
      %2125 = vmatprep.subr.mxu0 0.0
      %2126 = vmatpush1.msra.mxu0 0.0
      %2127 = vmatprep.subr.mxu0 0.0
      %2128 = vmatpush1.msra.mxu0 0.0
      %2129 = vmatprep.subr.mxu0 0.0
      %2130 = vmatpush1.msra.mxu0 0.0
      %2131 = vmatprep.subr.mxu0 0.0
      %2132 = vmatpush1.msra.mxu0 0.0
      %2133 = vmatprep.subr.mxu0 0.0
      %2134 = vmatpush1.msra.mxu0 0.0
      %2135 = vmatprep.subr.mxu0 0.0
      %2136 = vmatpush1.msra.mxu0 0.0
      %2137 = vmatprep.subr.mxu0 0.0
      %2138 = vmatpush1.msra.mxu0 0.0
      %2139 = vmatprep.subr.mxu0 0.0
      %2140 = vmatpush1.msra.mxu0 0.0
      %2141 = vmatprep.subr.mxu0 0.0
      %2142 = vmatpush1.msra.mxu0 0.0
      %2143 = vmatprep.subr.mxu0 0.0
      %2144 = vmatpush1.msra.mxu0 0.0
      %2145 = vmatprep.subr.mxu0 0.0
      %2146 = vmatpush1.msra.mxu0 0.0
      %2147 = vmatprep.subr.mxu0 0.0
      %2148 = vmatpush1.msra.mxu0 0.0
      %2149 = vmatprep.subr.mxu0 0.0
      %2150 = vmatpush1.msra.mxu0 0.0
      %2151 = vmatprep.subr.mxu0 0.0
      %2152 = vmatpush1.msra.mxu0 0.0
      %2153 = vmatprep.subr.mxu0 0.0
      %2154 = vmatpush1.msra.mxu0 0.0
      %2155 = vmatprep.subr.mxu0 0.0
      %2156 = vmatpush1.msra.mxu0 0.0
      %2157 = vmatprep.mubr.f32.mxu0 0.0
      %2158 = vmatmul.mubr.f32.gmra.mrb[0].mxu0 %v2015
      %v2159 = vpop.f32.mrb[0].mxu0
      %v2160 = vadd.f32 0.0, %v2159
      %v2161 = vpop.f32.mrb[0].mxu0
      %2162 = vdwg.mxu0
      %v2163 = vmax.f32 %v2087, %v2160
      %2165 = vrot.lane.b32.xlu0 %v2163, 127
      %v2166 = vpop.permute.xlu0 %2165
      %2168 = vrot.lane.b32.xlu0 %v2163, 126
      %v2169 = vpop.permute.xlu0 %2168
      %2171 = vrot.lane.b32.xlu0 %v2163, 125
      %v2172 = vpop.permute.xlu0 %2171
      %2174 = vrot.lane.b32.xlu0 %v2163, 124
      %v2175 = vpop.permute.xlu0 %2174
      %2177 = vrot.lane.b32.xlu0 %v2163, 123
      %v2178 = vpop.permute.xlu0 %2177
      %2180 = vrot.lane.b32.xlu0 %v2163, 122
      %v2181 = vpop.permute.xlu0 %2180
      %2183 = vrot.lane.b32.xlu0 %v2163, 121
      %v2184 = vpop.permute.xlu0 %2183
      %2186 = vrot.lane.b32.xlu0 %v2163, 120
      %v2187 = vpop.permute.xlu0 %2186
      %2189 = vrot.lane.b32.xlu0 %v2163, 119
      %v2190 = vpop.permute.xlu0 %2189
      %2192 = vrot.lane.b32.xlu0 %v2163, 118
      %v2193 = vpop.permute.xlu0 %2192
      %2195 = vrot.lane.b32.xlu0 %v2163, 117
      %v2196 = vpop.permute.xlu0 %2195
      %2198 = vrot.lane.b32.xlu0 %v2163, 116
      %v2199 = vpop.permute.xlu0 %2198
      %2201 = vrot.lane.b32.xlu0 %v2163, 115
      %v2202 = vpop.permute.xlu0 %2201
      %2204 = vrot.lane.b32.xlu0 %v2163, 114
      %v2205 = vpop.permute.xlu0 %2204
      %2207 = vrot.lane.b32.xlu0 %v2163, 113
      %v2208 = vpop.permute.xlu0 %2207
      %2210 = vrot.lane.b32.xlu0 %v2163, 112
      %v2211 = vpop.permute.xlu0 %2210
      %2212 = vrot.lane.b32.xlu0 %v2166, 112
      %v2213 = vpop.permute.xlu0 %2212
      %2214 = vrot.lane.b32.xlu0 %v2169, 112
      %v2215 = vpop.permute.xlu0 %2214
      %2216 = vrot.lane.b32.xlu0 %v2172, 112
      %v2217 = vpop.permute.xlu0 %2216
      %2218 = vrot.lane.b32.xlu0 %v2175, 112
      %v2219 = vpop.permute.xlu0 %2218
      %2220 = vrot.lane.b32.xlu0 %v2178, 112
      %v2221 = vpop.permute.xlu0 %2220
      %2222 = vrot.lane.b32.xlu0 %v2181, 112
      %v2223 = vpop.permute.xlu0 %2222
      %2224 = vrot.lane.b32.xlu0 %v2184, 112
      %v2225 = vpop.permute.xlu0 %2224
      %2226 = vrot.lane.b32.xlu0 %v2187, 112
      %v2227 = vpop.permute.xlu0 %2226
      %v2237 = vld [vmem:[%s13] sm:$0xff]
      %v2238 = vld [vmem:[%s13 + $0x8] sm:$0xff]
      %v2239 = vld [vmem:[%s13 + $0x10] sm:$0xff]
      %v2240 = vld [vmem:[%s13 + $0x18] sm:$0xff]
      %v2242 = vsel %vm1381, %v2238, 0
      %v2245 = vsel %vm1381, %v2240, 0
      %2247 = vmatprep.subr.mxu0 0.0
      %2248 = vmatpush1.msra.mxu0 %v2163
      %2249 = vmatprep.subr.mxu0 0.0
      %2250 = vmatpush1.msra.mxu0 %v2166
      %2251 = vmatprep.subr.mxu0 0.0
      %2252 = vmatpush1.msra.mxu0 %v2169
      %2253 = vmatprep.subr.mxu0 0.0
      %2254 = vmatpush1.msra.mxu0 %v2172
      %2255 = vmatprep.subr.mxu0 0.0
      %2256 = vmatpush1.msra.mxu0 %v2175
      %2257 = vmatprep.subr.mxu0 0.0
      %2258 = vmatpush1.msra.mxu0 %v2178
      %2259 = vmatprep.subr.mxu0 0.0
      %2260 = vmatpush1.msra.mxu0 %v2181
      %2261 = vmatprep.subr.mxu0 0.0
      %2262 = vmatpush1.msra.mxu0 %v2184
      %2263 = vmatprep.subr.mxu0 0.0
      %2264 = vmatpush1.msra.mxu0 %v2187
      %2265 = vmatprep.subr.mxu0 0.0
      %2266 = vmatpush1.msra.mxu0 %v2190
      %2267 = vmatprep.subr.mxu0 0.0
      %2268 = vmatpush1.msra.mxu0 %v2193
      %2269 = vmatprep.subr.mxu0 0.0
      %2270 = vmatpush1.msra.mxu0 %v2196
      %2271 = vmatprep.subr.mxu0 0.0
      %2272 = vmatpush1.msra.mxu0 %v2199
      %2273 = vmatprep.subr.mxu0 0.0
      %2274 = vmatpush1.msra.mxu0 %v2202
      %2275 = vmatprep.subr.mxu0 0.0
      %2276 = vmatpush1.msra.mxu0 %v2205
      %2277 = vmatprep.subr.mxu0 0.0
      %2278 = vmatpush1.msra.mxu0 %v2208
      %2279 = vmatprep.subr.mxu0 0.0
      %2280 = vmatpush1.msra.mxu0 %v2211
      %2281 = vmatprep.subr.mxu0 0.0
      %2282 = vmatpush1.msra.mxu0 %v2213
      %2283 = vmatprep.subr.mxu0 0.0
      %2284 = vmatpush1.msra.mxu0 %v2215
      %2285 = vmatprep.subr.mxu0 0.0
      %2286 = vmatpush1.msra.mxu0 %v2217
      %2287 = vmatprep.subr.mxu0 0.0
      %2288 = vmatpush1.msra.mxu0 %v2219
      %2289 = vmatprep.subr.mxu0 0.0
      %2290 = vmatpush1.msra.mxu0 %v2221
      %2291 = vmatprep.subr.mxu0 0.0
      %2292 = vmatpush1.msra.mxu0 %v2223
      %2293 = vmatprep.subr.mxu0 0.0
      %2294 = vmatpush1.msra.mxu0 %v2225
      %2295 = vmatprep.subr.mxu0 0.0
      %2296 = vmatpush1.msra.mxu0 %v2227
      %2297 = vmatprep.subr.mxu0 0.0
      %2298 = vmatpush1.msra.mxu0 0.0
      %2299 = vmatprep.subr.mxu0 0.0
      %2300 = vmatpush1.msra.mxu0 0.0
      %2301 = vmatprep.subr.mxu0 0.0
      %2302 = vmatpush1.msra.mxu0 0.0
      %2303 = vmatprep.subr.mxu0 0.0
      %2304 = vmatpush1.msra.mxu0 0.0
      %2305 = vmatprep.subr.mxu0 0.0
      %2306 = vmatpush1.msra.mxu0 0.0
      %2307 = vmatprep.subr.mxu0 0.0
      %2308 = vmatpush1.msra.mxu0 0.0
      %2309 = vmatprep.subr.mxu0 0.0
      %2310 = vmatpush1.msra.mxu0 0.0
      %2311 = vmatprep.mubr.f32.mxu0 %v2242
      %2312 = vmatmul.mubr.f32.gmra.mrb[0].mxu0 %v2237
      %v2313 = vpop.f32.mrb[0].mxu0
      %v2314 = vadd.f32 0.0, %v2313
      %v2315 = vpop.f32.mrb[0].mxu0
      %2316 = vmatprep.mubr.f32.mxu0 %v2245
      %2317 = vmatmul.mubr.f32.gmra.mrb[0].mxu0 %v2239
      %v2318 = vpop.f32.mrb[0].mxu0
      %v2319 = vadd.f32 0.0, %v2318
      %v2320 = vpop.f32.mrb[0].mxu0
      %2321 = vdwg.mxu0
      %v2322 = vld [vmem:[%s14] sm:$0xff]
      %v2323 = vld [vmem:[%s14 + $0x8] sm:$0xff]
      %2325 = vset.pattern.permute.xlu0 0
      %2326 = vperm.xlu0 %2325, %v2322
      %v2327 = vpop.permute.xlu0 %2326
      %2330 = vset.pattern.permute.xlu0 0
      %2331 = vperm.xlu0 %2330, %v2323
      %v2332 = vpop.permute.xlu0 %2331
      %v2334 = vmul.f32 %v2314, %v2327
      %v2335 = vmul.f32 %v2319, %v2332
      %v2336 = vld [vmem:[%s15] sm:$0xff]
      %v2337 = vld [vmem:[%s15 + $0x8] sm:$0xff]
      %2339 = vset.pattern.permute.xlu0 0
      %2340 = vperm.xlu0 %2339, %v2336
      %v2341 = vpop.permute.xlu0 %2340
      %2344 = vset.pattern.permute.xlu0 0
      %2345 = vperm.xlu0 %2344, %v2337
      %v2346 = vpop.permute.xlu0 %2345
      %v2348 = vadd.f32 %v2334, %v2341
      %v2349 = vadd.f32 %v2335, %v2346
      %v2350 = vmax.f32 %v2348, 0.0
      %v2351 = vmax.f32 %v2349, 0.0
      %2354 = vrot.lane.b32.xlu0 %v2350, 127
      %v2355 = vpop.permute.xlu0 %2354
      %2356 = vrot.lane.b32.xlu0 %v2351, 127
      %v2357 = vpop.permute.xlu0 %2356
      %2360 = vrot.lane.b32.xlu0 %v2350, 126
      %v2361 = vpop.permute.xlu0 %2360
      %2362 = vrot.lane.b32.xlu0 %v2351, 126
      %v2363 = vpop.permute.xlu0 %2362
      %2366 = vrot.lane.b32.xlu0 %v2350, 125
      %v2367 = vpop.permute.xlu0 %2366
      %2368 = vrot.lane.b32.xlu0 %v2351, 125
      %v2369 = vpop.permute.xlu0 %2368
      %2372 = vrot.lane.b32.xlu0 %v2350, 124
      %v2373 = vpop.permute.xlu0 %2372
      %2374 = vrot.lane.b32.xlu0 %v2351, 124
      %v2375 = vpop.permute.xlu0 %2374
      %2378 = vrot.lane.b32.xlu0 %v2350, 123
      %v2379 = vpop.permute.xlu0 %2378
      %2380 = vrot.lane.b32.xlu0 %v2351, 123
      %v2381 = vpop.permute.xlu0 %2380
      %2384 = vrot.lane.b32.xlu0 %v2350, 122
      %v2385 = vpop.permute.xlu0 %2384
      %2386 = vrot.lane.b32.xlu0 %v2351, 122
      %v2387 = vpop.permute.xlu0 %2386
      %2390 = vrot.lane.b32.xlu0 %v2350, 121
      %v2391 = vpop.permute.xlu0 %2390
      %2392 = vrot.lane.b32.xlu0 %v2351, 121
      %v2393 = vpop.permute.xlu0 %2392
      %2396 = vrot.lane.b32.xlu0 %v2350, 120
      %v2397 = vpop.permute.xlu0 %2396
      %2398 = vrot.lane.b32.xlu0 %v2351, 120
      %v2399 = vpop.permute.xlu0 %2398
      %2402 = vrot.lane.b32.xlu0 %v2350, 119
      %v2403 = vpop.permute.xlu0 %2402
      %2404 = vrot.lane.b32.xlu0 %v2351, 119
      %v2405 = vpop.permute.xlu0 %2404
      %2408 = vrot.lane.b32.xlu0 %v2350, 118
      %v2409 = vpop.permute.xlu0 %2408
      %2410 = vrot.lane.b32.xlu0 %v2351, 118
      %v2411 = vpop.permute.xlu0 %2410
      %2414 = vrot.lane.b32.xlu0 %v2350, 117
      %v2415 = vpop.permute.xlu0 %2414
      %2416 = vrot.lane.b32.xlu0 %v2351, 117
      %v2417 = vpop.permute.xlu0 %2416
      %2420 = vrot.lane.b32.xlu0 %v2350, 116
      %v2421 = vpop.permute.xlu0 %2420
      %2422 = vrot.lane.b32.xlu0 %v2351, 116
      %v2423 = vpop.permute.xlu0 %2422
      %2426 = vrot.lane.b32.xlu0 %v2350, 115
      %v2427 = vpop.permute.xlu0 %2426
      %2428 = vrot.lane.b32.xlu0 %v2351, 115
      %v2429 = vpop.permute.xlu0 %2428
      %2432 = vrot.lane.b32.xlu0 %v2350, 114
      %v2433 = vpop.permute.xlu0 %2432
      %2434 = vrot.lane.b32.xlu0 %v2351, 114
      %v2435 = vpop.permute.xlu0 %2434
      %2438 = vrot.lane.b32.xlu0 %v2350, 113
      %v2439 = vpop.permute.xlu0 %2438
      %2440 = vrot.lane.b32.xlu0 %v2351, 113
      %v2441 = vpop.permute.xlu0 %2440
      %2444 = vrot.lane.b32.xlu0 %v2350, 112
      %v2445 = vpop.permute.xlu0 %2444
      %2446 = vrot.lane.b32.xlu0 %v2351, 112
      %v2447 = vpop.permute.xlu0 %2446
      %2448 = vrot.lane.b32.xlu0 %v2355, 112
      %v2449 = vpop.permute.xlu0 %2448
      %2450 = vrot.lane.b32.xlu0 %v2357, 112
      %v2451 = vpop.permute.xlu0 %2450
      %2452 = vrot.lane.b32.xlu0 %v2361, 112
      %v2453 = vpop.permute.xlu0 %2452
      %2454 = vrot.lane.b32.xlu0 %v2363, 112
      %v2455 = vpop.permute.xlu0 %2454
      %2456 = vrot.lane.b32.xlu0 %v2367, 112
      %v2457 = vpop.permute.xlu0 %2456
      %2458 = vrot.lane.b32.xlu0 %v2369, 112
      %v2459 = vpop.permute.xlu0 %2458
      %2460 = vrot.lane.b32.xlu0 %v2373, 112
      %v2461 = vpop.permute.xlu0 %2460
      %2462 = vrot.lane.b32.xlu0 %v2375, 112
      %v2463 = vpop.permute.xlu0 %2462
      %2464 = vrot.lane.b32.xlu0 %v2379, 112
      %v2465 = vpop.permute.xlu0 %2464
      %2466 = vrot.lane.b32.xlu0 %v2381, 112
      %v2467 = vpop.permute.xlu0 %2466
      %2468 = vrot.lane.b32.xlu0 %v2385, 112
      %v2469 = vpop.permute.xlu0 %2468
      %2470 = vrot.lane.b32.xlu0 %v2387, 112
      %v2471 = vpop.permute.xlu0 %2470
      %2472 = vrot.lane.b32.xlu0 %v2391, 112
      %v2473 = vpop.permute.xlu0 %2472
      %2474 = vrot.lane.b32.xlu0 %v2393, 112
      %v2475 = vpop.permute.xlu0 %2474
      %2476 = vrot.lane.b32.xlu0 %v2397, 112
      %v2477 = vpop.permute.xlu0 %2476
      %2478 = vrot.lane.b32.xlu0 %v2399, 112
      %v2479 = vpop.permute.xlu0 %2478
      %v2498 = vld [vmem:[%s16] sm:$0xff]
      %v2499 = vld [vmem:[%s16 + $0x8] sm:$0xff]
      %v2500 = vld [vmem:[%s16 + $0x10] sm:$0xff]
      %v2501 = vld [vmem:[%s16 + $0x18] sm:$0xff]
      %v2502 = vld [vmem:[%s16 + $0x20] sm:$0xff]
      %v2503 = vld [vmem:[%s16 + $0x28] sm:$0xff]
      %v2504 = vld [vmem:[%s16 + $0x30] sm:$0xff]
      %v2505 = vld [vmem:[%s16 + $0x38] sm:$0xff]
      %v2506 = vld [vmem:[%s16 + $0x40] sm:$0xff]
      %v2507 = vld [vmem:[%s16 + $0x48] sm:$0xff]
      %v2508 = vld [vmem:[%s16 + $0x50] sm:$0xff]
      %v2509 = vld [vmem:[%s16 + $0x58] sm:$0xff]
      %v2510 = vld [vmem:[%s16 + $0x60] sm:$0xff]
      %v2511 = vld [vmem:[%s16 + $0x68] sm:$0xff]
      %v2512 = vld [vmem:[%s16 + $0x70] sm:$0xff]
      %v2513 = vld [vmem:[%s16 + $0x78] sm:$0xff]
      %vm2514 = vcmask 130048
      %v2516 = vsel %vm2514, %v2501, 0
      %v2519 = vsel %vm2514, %v2505, 0
      %v2522 = vsel %vm2514, %v2509, 0
      %v2525 = vsel %vm2514, %v2513, 0
      %2527 = vmatprep.subr.mxu0 0.0
      %2528 = vmatpush1.msra.mxu0 %v2350
      %2529 = vmatprep.subr.mxu0 0.0
      %2530 = vmatpush1.msra.mxu0 %v2351
      %2531 = vmatprep.subr.mxu0 0.0
      %2532 = vmatpush1.msra.mxu0 %v2355
      %2533 = vmatprep.subr.mxu0 0.0
      %2534 = vmatpush1.msra.mxu0 %v2357
      %2535 = vmatprep.subr.mxu0 0.0
      %2536 = vmatpush1.msra.mxu0 %v2361
      %2537 = vmatprep.subr.mxu0 0.0
      %2538 = vmatpush1.msra.mxu0 %v2363
      %2539 = vmatprep.subr.mxu0 0.0
      %2540 = vmatpush1.msra.mxu0 %v2367
      %2541 = vmatprep.subr.mxu0 0.0
      %2542 = vmatpush1.msra.mxu0 %v2369
      %2543 = vmatprep.subr.mxu0 0.0
      %2544 = vmatpush1.msra.mxu0 %v2373
      %2545 = vmatprep.subr.mxu0 0.0
      %2546 = vmatpush1.msra.mxu0 %v2375
      %2547 = vmatprep.subr.mxu0 0.0
      %2548 = vmatpush1.msra.mxu0 %v2379
      %2549 = vmatprep.subr.mxu0 0.0
      %2550 = vmatpush1.msra.mxu0 %v2381
      %2551 = vmatprep.subr.mxu0 0.0
      %2552 = vmatpush1.msra.mxu0 %v2385
      %2553 = vmatprep.subr.mxu0 0.0
      %2554 = vmatpush1.msra.mxu0 %v2387
      %2555 = vmatprep.subr.mxu0 0.0
      %2556 = vmatpush1.msra.mxu0 %v2391
      %2557 = vmatprep.subr.mxu0 0.0
      %2558 = vmatpush1.msra.mxu0 %v2393
      %2559 = vmatprep.subr.mxu0 0.0
      %2560 = vmatpush1.msra.mxu0 %v2397
      %2561 = vmatprep.subr.mxu0 0.0
      %2562 = vmatpush1.msra.mxu0 %v2399
      %2563 = vmatprep.subr.mxu0 0.0
      %2564 = vmatpush1.msra.mxu0 %v2403
      %2565 = vmatprep.subr.mxu0 0.0
      %2566 = vmatpush1.msra.mxu0 %v2405
      %2567 = vmatprep.subr.mxu0 0.0
      %2568 = vmatpush1.msra.mxu0 %v2409
      %2569 = vmatprep.subr.mxu0 0.0
      %2570 = vmatpush1.msra.mxu0 %v2411
      %2571 = vmatprep.subr.mxu0 0.0
      %2572 = vmatpush1.msra.mxu0 %v2415
      %2573 = vmatprep.subr.mxu0 0.0
      %2574 = vmatpush1.msra.mxu0 %v2417
      %2575 = vmatprep.subr.mxu0 0.0
      %2576 = vmatpush1.msra.mxu0 %v2421
      %2577 = vmatprep.subr.mxu0 0.0
      %2578 = vmatpush1.msra.mxu0 %v2423
      %2579 = vmatprep.subr.mxu0 0.0
      %2580 = vmatpush1.msra.mxu0 %v2427
      %2581 = vmatprep.subr.mxu0 0.0
      %2582 = vmatpush1.msra.mxu0 %v2429
      %2583 = vmatprep.subr.mxu0 0.0
      %2584 = vmatpush1.msra.mxu0 %v2433
      %2585 = vmatprep.subr.mxu0 0.0
      %2586 = vmatpush1.msra.mxu0 %v2435
      %2587 = vmatprep.subr.mxu0 0.0
      %2588 = vmatpush1.msra.mxu0 %v2439
      %2589 = vmatprep.subr.mxu0 0.0
      %2590 = vmatpush1.msra.mxu0 %v2441
      %2591 = vmatprep.mubr.f32.mxu0 %v2499
      %2592 = vmatmul.mubr.f32.gmra.mrb[0].mxu0 %v2498
      %v2593 = vpop.f32.mrb[0].mxu0
      %v2594 = vadd.f32 0.0, %v2593
      %v2595 = vpop.f32.mrb[0].mxu0
      %2596 = vmatprep.mubr.f32.mxu0 %v2503
      %2597 = vmatmul.mubr.f32.gmra.mrb[0].mxu0 %v2502
      %v2598 = vpop.f32.mrb[0].mxu0
      %v2599 = vadd.f32 0.0, %v2598
      %v2600 = vpop.f32.mrb[0].mxu0
      %2601 = vmatprep.mubr.f32.mxu0 %v2507
      %2602 = vmatmul.mubr.f32.gmra.mrb[0].mxu0 %v2506
      %v2603 = vpop.f32.mrb[0].mxu0
      %v2604 = vadd.f32 0.0, %v2603
      %v2605 = vpop.f32.mrb[0].mxu0
      %2606 = vmatprep.mubr.f32.mxu0 %v2511
      %2607 = vmatmul.mubr.f32.gmra.mrb[0].mxu0 %v2510
      %v2608 = vpop.f32.mrb[0].mxu0
      %v2609 = vadd.f32 0.0, %v2608
      %v2610 = vpop.f32.mrb[0].mxu0
      %2611 = vdwg.mxu0
      %2612 = vmatprep.subr.mxu0 0.0
      %2613 = vmatpush1.msra.mxu0 %v2445
      %2614 = vmatprep.subr.mxu0 0.0
      %2615 = vmatpush1.msra.mxu0 %v2447
      %2616 = vmatprep.subr.mxu0 0.0
      %2617 = vmatpush1.msra.mxu0 %v2449
      %2618 = vmatprep.subr.mxu0 0.0
      %2619 = vmatpush1.msra.mxu0 %v2451
      %2620 = vmatprep.subr.mxu0 0.0
      %2621 = vmatpush1.msra.mxu0 %v2453
      %2622 = vmatprep.subr.mxu0 0.0
      %2623 = vmatpush1.msra.mxu0 %v2455
      %2624 = vmatprep.subr.mxu0 0.0
      %2625 = vmatpush1.msra.mxu0 %v2457
      %2626 = vmatprep.subr.mxu0 0.0
      %2627 = vmatpush1.msra.mxu0 %v2459
      %2628 = vmatprep.subr.mxu0 0.0
      %2629 = vmatpush1.msra.mxu0 %v2461
      %2630 = vmatprep.subr.mxu0 0.0
      %2631 = vmatpush1.msra.mxu0 %v2463
      %2632 = vmatprep.subr.mxu0 0.0
      %2633 = vmatpush1.msra.mxu0 %v2465
      %2634 = vmatprep.subr.mxu0 0.0
      %2635 = vmatpush1.msra.mxu0 %v2467
      %2636 = vmatprep.subr.mxu0 0.0
      %2637 = vmatpush1.msra.mxu0 %v2469
      %2638 = vmatprep.subr.mxu0 0.0
      %2639 = vmatpush1.msra.mxu0 %v2471
      %2640 = vmatprep.subr.mxu0 0.0
      %2641 = vmatpush1.msra.mxu0 %v2473
      %2642 = vmatprep.subr.mxu0 0.0
      %2643 = vmatpush1.msra.mxu0 %v2475
      %2644 = vmatprep.subr.mxu0 0.0
      %2645 = vmatpush1.msra.mxu0 %v2477
      %2646 = vmatprep.subr.mxu0 0.0
      %2647 = vmatpush1.msra.mxu0 %v2479
      %2648 = vmatprep.subr.mxu0 0.0
      %2649 = vmatpush1.msra.mxu0 0.0
      %2650 = vmatprep.subr.mxu0 0.0
      %2651 = vmatpush1.msra.mxu0 0.0
      %2652 = vmatprep.subr.mxu0 0.0
      %2653 = vmatpush1.msra.mxu0 0.0
      %2654 = vmatprep.subr.mxu0 0.0
      %2655 = vmatpush1.msra.mxu0 0.0
      %2656 = vmatprep.subr.mxu0 0.0
      %2657 = vmatpush1.msra.mxu0 0.0
      %2658 = vmatprep.subr.mxu0 0.0
      %2659 = vmatpush1.msra.mxu0 0.0
      %2660 = vmatprep.subr.mxu0 0.0
      %2661 = vmatpush1.msra.mxu0 0.0
      %2662 = vmatprep.subr.mxu0 0.0
      %2663 = vmatpush1.msra.mxu0 0.0
      %2664 = vmatprep.subr.mxu0 0.0
      %2665 = vmatpush1.msra.mxu0 0.0
      %2666 = vmatprep.subr.mxu0 0.0
      %2667 = vmatpush1.msra.mxu0 0.0
      %2668 = vmatprep.subr.mxu0 0.0
      %2669 = vmatpush1.msra.mxu0 0.0
      %2670 = vmatprep.subr.mxu0 0.0
      %2671 = vmatpush1.msra.mxu0 0.0
      %2672 = vmatprep.subr.mxu0 0.0
      %2673 = vmatpush1.msra.mxu0 0.0
      %2674 = vmatprep.subr.mxu0 0.0
      %2675 = vmatpush1.msra.mxu0 0.0
      %2676 = vmatprep.mubr.f32.mxu0 %v2516
      %2677 = vmatmul.mubr.f32.gmra.mrb[0].mxu0 %v2500
      %v2678 = vpop.f32.mrb[0].mxu0
      %v2679 = vadd.f32 %v2594, %v2678
      %v2680 = vpop.f32.mrb[0].mxu0
      %2681 = vmatprep.mubr.f32.mxu0 %v2519
      %2682 = vmatmul.mubr.f32.gmra.mrb[0].mxu0 %v2504
      %v2683 = vpop.f32.mrb[0].mxu0
      %v2684 = vadd.f32 %v2599, %v2683
      %v2685 = vpop.f32.mrb[0].mxu0
      %2686 = vmatprep.mubr.f32.mxu0 %v2522
      %2687 = vmatmul.mubr.f32.gmra.mrb[0].mxu0 %v2508
      %v2688 = vpop.f32.mrb[0].mxu0
      %v2689 = vadd.f32 %v2604, %v2688
      %v2690 = vpop.f32.mrb[0].mxu0
      %2691 = vmatprep.mubr.f32.mxu0 %v2525
      %2692 = vmatmul.mubr.f32.gmra.mrb[0].mxu0 %v2512
      %v2693 = vpop.f32.mrb[0].mxu0
      %v2694 = vadd.f32 %v2609, %v2693
      %v2695 = vpop.f32.mrb[0].mxu0
      %2696 = vdwg.mxu0
      %v2697 = vld [vmem:[%s17] sm:$0xff]
      %v2698 = vld [vmem:[%s17 + $0x8] sm:$0xff]
      %v2699 = vld [vmem:[%s17 + $0x10] sm:$0xff]
      %v2700 = vld [vmem:[%s17 + $0x18] sm:$0xff]
      %2702 = vset.pattern.permute.xlu0 0
      %2703 = vperm.xlu0 %2702, %v2697
      %v2704 = vpop.permute.xlu0 %2703
      %2707 = vset.pattern.permute.xlu0 0
      %2708 = vperm.xlu0 %2707, %v2698
      %v2709 = vpop.permute.xlu0 %2708
      %2712 = vset.pattern.permute.xlu0 0
      %2713 = vperm.xlu0 %2712, %v2699
      %v2714 = vpop.permute.xlu0 %2713
      %2717 = vset.pattern.permute.xlu0 0
      %2718 = vperm.xlu0 %2717, %v2700
      %v2719 = vpop.permute.xlu0 %2718
      %v2721 = vmul.f32 %v2679, %v2704
      %v2722 = vmul.f32 %v2684, %v2709
      %v2723 = vmul.f32 %v2689, %v2714
      %v2724 = vmul.f32 %v2694, %v2719
      %v2725 = vld [vmem:[%s18] sm:$0xff]
      %v2726 = vld [vmem:[%s18 + $0x8] sm:$0xff]
      %v2727 = vld [vmem:[%s18 + $0x10] sm:$0xff]
      %v2728 = vld [vmem:[%s18 + $0x18] sm:$0xff]
      %2730 = vset.pattern.permute.xlu0 0
      %2731 = vperm.xlu0 %2730, %v2725
      %v2732 = vpop.permute.xlu0 %2731
      %2735 = vset.pattern.permute.xlu0 0
      %2736 = vperm.xlu0 %2735, %v2726
      %v2737 = vpop.permute.xlu0 %2736
      %2740 = vset.pattern.permute.xlu0 0
      %2741 = vperm.xlu0 %2740, %v2727
      %v2742 = vpop.permute.xlu0 %2741
      %2745 = vset.pattern.permute.xlu0 0
      %2746 = vperm.xlu0 %2745, %v2728
      %v2747 = vpop.permute.xlu0 %2746
      %v2749 = vadd.f32 %v2721, %v2732
      %v2750 = vadd.f32 %v2722, %v2737
      %v2751 = vadd.f32 %v2723, %v2742
      %v2752 = vadd.f32 %v2724, %v2747
      %v2753 = vmax.f32 %v2749, 0.0
      %v2754 = vmax.f32 %v2750, 0.0
      %v2755 = vmax.f32 %v2751, 0.0
      %v2756 = vmax.f32 %v2752, 0.0
      %v2757 = vld [vmem:[%s19] sm:$0xff]
      %v2758 = vld [vmem:[%s19 + $0x8] sm:$0xff]
      %v2759 = vld [vmem:[%s19 + $0x10] sm:$0xff]
      %v2760 = vld [vmem:[%s19 + $0x18] sm:$0xff]
      %v2761 = vld [vmem:[%s19 + $0x20] sm:$0xff]
      %v2762 = vld [vmem:[%s19 + $0x28] sm:$0xff]
      %v2763 = vld [vmem:[%s19 + $0x30] sm:$0xff]
      %v2764 = vld [vmem:[%s19 + $0x38] sm:$0xff]
      %v2765 = vld [vmem:[%s19 + $0x40] sm:$0xff]
      %v2766 = vld [vmem:[%s19 + $0x48] sm:$0xff]
      %v2767 = vld [vmem:[%s19 + $0x50] sm:$0xff]
      %v2769 = vsel %vm713, %v2757, 0
      %v2772 = vsel %vm713, %v2758, 0
      %v2775 = vsel %vm713, %v2759, 0
      %v2778 = vsel %vm713, %v2760, 0
      %v2781 = vsel %vm713, %v2761, 0
      %v2784 = vsel %vm713, %v2762, 0
      %v2787 = vsel %vm713, %v2763, 0
      %v2790 = vsel %vm713, %v2764, 0
      %v2793 = vsel %vm713, %v2765, 0
      %v2796 = vsel %vm713, %v2766, 0
      %v2799 = vsel %vm713, %v2767, 0
      %2801 = vmatprep.subr.mxu0 0.0
      %2802 = vmatpush1.msra.mxu0 %v2753
      %2803 = vmatprep.subr.mxu0 0.0
      %2804 = vmatpush1.msra.mxu0 %v2754
      %2805 = vmatprep.subr.mxu0 0.0
      %2806 = vmatpush1.msra.mxu0 %v2755
      %2807 = vmatprep.subr.mxu0 0.0
      %2808 = vmatpush1.msra.mxu0 %v2756
      %2809 = vmatprep.subr.mxu0 0.0
      %2810 = vmatpush1.msra.mxu0 0.0
      %2811 = vmatprep.subr.mxu0 0.0
      %2812 = vmatpush1.msra.mxu0 0.0
      %2813 = vmatprep.subr.mxu0 0.0
      %2814 = vmatpush1.msra.mxu0 0.0
      %2815 = vmatprep.subr.mxu0 0.0
      %2816 = vmatpush1.msra.mxu0 0.0
      %2817 = vmatprep.subr.mxu0 0.0
      %2818 = vmatpush1.msra.mxu0 0.0
      %2819 = vmatprep.subr.mxu0 0.0
      %2820 = vmatpush1.msra.mxu0 0.0
      %2821 = vmatprep.subr.mxu0 0.0
      %2822 = vmatpush1.msra.mxu0 0.0
      %2823 = vmatprep.subr.mxu0 0.0
      %2824 = vmatpush1.msra.mxu0 0.0
      %2825 = vmatprep.subr.mxu0 0.0
      %2826 = vmatpush1.msra.mxu0 0.0
      %2827 = vmatprep.subr.mxu0 0.0
      %2828 = vmatpush1.msra.mxu0 0.0
      %2829 = vmatprep.subr.mxu0 0.0
      %2830 = vmatpush1.msra.mxu0 0.0
      %2831 = vmatprep.subr.mxu0 0.0
      %2832 = vmatpush1.msra.mxu0 0.0
      %2833 = vmatprep.subr.mxu0 0.0
      %2834 = vmatpush1.msra.mxu0 0.0
      %2835 = vmatprep.subr.mxu0 0.0
      %2836 = vmatpush1.msra.mxu0 0.0
      %2837 = vmatprep.subr.mxu0 0.0
      %2838 = vmatpush1.msra.mxu0 0.0
      %2839 = vmatprep.subr.mxu0 0.0
      %2840 = vmatpush1.msra.mxu0 0.0
      %2841 = vmatprep.subr.mxu0 0.0
      %2842 = vmatpush1.msra.mxu0 0.0
      %2843 = vmatprep.subr.mxu0 0.0
      %2844 = vmatpush1.msra.mxu0 0.0
      %2845 = vmatprep.subr.mxu0 0.0
      %2846 = vmatpush1.msra.mxu0 0.0
      %2847 = vmatprep.subr.mxu0 0.0
      %2848 = vmatpush1.msra.mxu0 0.0
      %2849 = vmatprep.subr.mxu0 0.0
      %2850 = vmatpush1.msra.mxu0 0.0
      %2851 = vmatprep.subr.mxu0 0.0
      %2852 = vmatpush1.msra.mxu0 0.0
      %2853 = vmatprep.subr.mxu0 0.0
      %2854 = vmatpush1.msra.mxu0 0.0
      %2855 = vmatprep.subr.mxu0 0.0
      %2856 = vmatpush1.msra.mxu0 0.0
      %2857 = vmatprep.subr.mxu0 0.0
      %2858 = vmatpush1.msra.mxu0 0.0
      %2859 = vmatprep.subr.mxu0 0.0
      %2860 = vmatpush1.msra.mxu0 0.0
      %2861 = vmatprep.subr.mxu0 0.0
      %2862 = vmatpush1.msra.mxu0 0.0
      %2863 = vmatprep.subr.mxu0 0.0
      %2864 = vmatpush1.msra.mxu0 0.0
      %2865 = vmatprep.mubr.f32.mxu0 0.0
      %2866 = vmatmul.mubr.f32.gmra.mrb[0].mxu0 %v2769
      %v2867 = vpop.f32.mrb[0].mxu0
      %v2868 = vadd.f32 0.0, %v2867
      %v2869 = vpop.f32.mrb[0].mxu0
      %2870 = vmatprep.mubr.f32.mxu0 0.0
      %2871 = vmatmul.mubr.f32.gmra.mrb[0].mxu0 %v2772
      %v2872 = vpop.f32.mrb[0].mxu0
      %v2873 = vadd.f32 0.0, %v2872
      %v2874 = vpop.f32.mrb[0].mxu0
      %2875 = vmatprep.mubr.f32.mxu0 0.0
      %2876 = vmatmul.mubr.f32.gmra.mrb[0].mxu0 %v2775
      %v2877 = vpop.f32.mrb[0].mxu0
      %v2878 = vadd.f32 0.0, %v2877
      %v2879 = vpop.f32.mrb[0].mxu0
      %2880 = vmatprep.mubr.f32.mxu0 0.0
      %2881 = vmatmul.mubr.f32.gmra.mrb[0].mxu0 %v2778
      %v2882 = vpop.f32.mrb[0].mxu0
      %v2883 = vadd.f32 0.0, %v2882
      %v2884 = vpop.f32.mrb[0].mxu0
      %2885 = vmatprep.mubr.f32.mxu0 0.0
      %2886 = vmatmul.mubr.f32.gmra.mrb[0].mxu0 %v2781
      %v2887 = vpop.f32.mrb[0].mxu0
      %v2888 = vadd.f32 0.0, %v2887
      %v2889 = vpop.f32.mrb[0].mxu0
      %2890 = vmatprep.mubr.f32.mxu0 0.0
      %2891 = vmatmul.mubr.f32.gmra.mrb[0].mxu0 %v2784
      %v2892 = vpop.f32.mrb[0].mxu0
      %v2893 = vadd.f32 0.0, %v2892
      %v2894 = vpop.f32.mrb[0].mxu0
      %2895 = vmatprep.mubr.f32.mxu0 0.0
      %2896 = vmatmul.mubr.f32.gmra.mrb[0].mxu0 %v2787
      %v2897 = vpop.f32.mrb[0].mxu0
      %v2898 = vadd.f32 0.0, %v2897
      %v2899 = vpop.f32.mrb[0].mxu0
      %2900 = vmatprep.mubr.f32.mxu0 0.0
      %2901 = vmatmul.mubr.f32.gmra.mrb[0].mxu0 %v2790
      %v2902 = vpop.f32.mrb[0].mxu0
      %v2903 = vadd.f32 0.0, %v2902
      %v2904 = vpop.f32.mrb[0].mxu0
      %2905 = vmatprep.mubr.f32.mxu0 0.0
      %2906 = vmatmul.mubr.f32.gmra.mrb[0].mxu0 %v2793
      %v2907 = vpop.f32.mrb[0].mxu0
      %v2908 = vadd.f32 0.0, %v2907
      %v2909 = vpop.f32.mrb[0].mxu0
      %2910 = vmatprep.mubr.f32.mxu0 0.0
      %2911 = vmatmul.mubr.f32.gmra.mrb[0].mxu0 %v2796
      %v2912 = vpop.f32.mrb[0].mxu0
      %v2913 = vadd.f32 0.0, %v2912
      %v2914 = vpop.f32.mrb[0].mxu0
      %2915 = vmatprep.mubr.f32.mxu0 0.0
      %2916 = vmatmul.mubr.f32.gmra.mrb[0].mxu0 %v2799
      %v2917 = vpop.f32.mrb[0].mxu0
      %v2918 = vadd.f32 0.0, %v2917
      %v2919 = vpop.f32.mrb[0].mxu0
      %2920 = vdwg.mxu0
      %v2921 = vld [vmem:[%s20] sm:$0xff]
      %v2922 = vld [vmem:[%s20 + $0x8] sm:$0xff]
      %v2923 = vld [vmem:[%s20 + $0x10] sm:$0xff]
      %v2924 = vld [vmem:[%s20 + $0x18] sm:$0xff]
      %v2925 = vld [vmem:[%s20 + $0x20] sm:$0xff]
      %v2926 = vld [vmem:[%s20 + $0x28] sm:$0xff]
      %v2927 = vld [vmem:[%s20 + $0x30] sm:$0xff]
      %v2928 = vld [vmem:[%s20 + $0x38] sm:$0xff]
      %v2929 = vld [vmem:[%s20 + $0x40] sm:$0xff]
      %v2930 = vld [vmem:[%s20 + $0x48] sm:$0xff]
      %v2931 = vld [vmem:[%s20 + $0x50] sm:$0xff]
      %2933 = vset.pattern.permute.xlu0 0
      %2934 = vperm.xlu0 %2933, %v2921
      %v2935 = vpop.permute.xlu0 %2934
      %2938 = vset.pattern.permute.xlu0 0
      %2939 = vperm.xlu0 %2938, %v2922
      %v2940 = vpop.permute.xlu0 %2939
      %2943 = vset.pattern.permute.xlu0 0
      %2944 = vperm.xlu0 %2943, %v2923
      %v2945 = vpop.permute.xlu0 %2944
      %2948 = vset.pattern.permute.xlu0 0
      %2949 = vperm.xlu0 %2948, %v2924
      %v2950 = vpop.permute.xlu0 %2949
      %2953 = vset.pattern.permute.xlu0 0
      %2954 = vperm.xlu0 %2953, %v2925
      %v2955 = vpop.permute.xlu0 %2954
      %2958 = vset.pattern.permute.xlu0 0
      %2959 = vperm.xlu0 %2958, %v2926
      %v2960 = vpop.permute.xlu0 %2959
      %2963 = vset.pattern.permute.xlu0 0
      %2964 = vperm.xlu0 %2963, %v2927
      %v2965 = vpop.permute.xlu0 %2964
      %2968 = vset.pattern.permute.xlu0 0
      %2969 = vperm.xlu0 %2968, %v2928
      %v2970 = vpop.permute.xlu0 %2969
      %2973 = vset.pattern.permute.xlu0 0
      %2974 = vperm.xlu0 %2973, %v2929
      %v2975 = vpop.permute.xlu0 %2974
      %2978 = vset.pattern.permute.xlu0 0
      %2979 = vperm.xlu0 %2978, %v2930
      %v2980 = vpop.permute.xlu0 %2979
      %2983 = vset.pattern.permute.xlu0 0
      %2984 = vperm.xlu0 %2983, %v2931
      %v2985 = vpop.permute.xlu0 %2984
      %v2987 = vmul.f32 %v2868, %v2935
      %v2988 = vmul.f32 %v2873, %v2940
      %v2989 = vmul.f32 %v2878, %v2945
      %v2990 = vmul.f32 %v2883, %v2950
      %v2991 = vmul.f32 %v2888, %v2955
      %v2992 = vmul.f32 %v2893, %v2960
      %v2993 = vmul.f32 %v2898, %v2965
      %v2994 = vmul.f32 %v2903, %v2970
      %v2995 = vmul.f32 %v2908, %v2975
      %v2996 = vmul.f32 %v2913, %v2980
      %v2997 = vmul.f32 %v2918, %v2985
      %v2998 = vld [vmem:[%s21] sm:$0xff]
      %v2999 = vld [vmem:[%s21 + $0x8] sm:$0xff]
      %v3000 = vld [vmem:[%s21 + $0x10] sm:$0xff]
      %v3001 = vld [vmem:[%s21 + $0x18] sm:$0xff]
      %v3002 = vld [vmem:[%s21 + $0x20] sm:$0xff]
      %v3003 = vld [vmem:[%s21 + $0x28] sm:$0xff]
      %v3004 = vld [vmem:[%s21 + $0x30] sm:$0xff]
      %v3005 = vld [vmem:[%s21 + $0x38] sm:$0xff]
      %v3006 = vld [vmem:[%s21 + $0x40] sm:$0xff]
      %v3007 = vld [vmem:[%s21 + $0x48] sm:$0xff]
      %v3008 = vld [vmem:[%s21 + $0x50] sm:$0xff]
      %3010 = vset.pattern.permute.xlu0 0
      %3011 = vperm.xlu0 %3010, %v2998
      %v3012 = vpop.permute.xlu0 %3011
      %3015 = vset.pattern.permute.xlu0 0
      %3016 = vperm.xlu0 %3015, %v2999
      %v3017 = vpop.permute.xlu0 %3016
      %3020 = vset.pattern.permute.xlu0 0
      %3021 = vperm.xlu0 %3020, %v3000
      %v3022 = vpop.permute.xlu0 %3021
      %3025 = vset.pattern.permute.xlu0 0
      %3026 = vperm.xlu0 %3025, %v3001
      %v3027 = vpop.permute.xlu0 %3026
      %3030 = vset.pattern.permute.xlu0 0
      %3031 = vperm.xlu0 %3030, %v3002
      %v3032 = vpop.permute.xlu0 %3031
      %3035 = vset.pattern.permute.xlu0 0
      %3036 = vperm.xlu0 %3035, %v3003
      %v3037 = vpop.permute.xlu0 %3036
      %3040 = vset.pattern.permute.xlu0 0
      %3041 = vperm.xlu0 %3040, %v3004
      %v3042 = vpop.permute.xlu0 %3041
      %3045 = vset.pattern.permute.xlu0 0
      %3046 = vperm.xlu0 %3045, %v3005
      %v3047 = vpop.permute.xlu0 %3046
      %3050 = vset.pattern.permute.xlu0 0
      %3051 = vperm.xlu0 %3050, %v3006
      %v3052 = vpop.permute.xlu0 %3051
      %3055 = vset.pattern.permute.xlu0 0
      %3056 = vperm.xlu0 %3055, %v3007
      %v3057 = vpop.permute.xlu0 %3056
      %3060 = vset.pattern.permute.xlu0 0
      %3061 = vperm.xlu0 %3060, %v3008
      %v3062 = vpop.permute.xlu0 %3061
      %v3064 = vadd.f32 %v2987, %v3012
      %v3065 = vadd.f32 %v2988, %v3017
      %v3066 = vadd.f32 %v2989, %v3022
      %v3067 = vadd.f32 %v2990, %v3027
      %v3068 = vadd.f32 %v2991, %v3032
      %v3069 = vadd.f32 %v2992, %v3037
      %v3070 = vadd.f32 %v2993, %v3042
      %v3071 = vadd.f32 %v2994, %v3047
      %v3072 = vadd.f32 %v2995, %v3052
      %v3073 = vadd.f32 %v2996, %v3057
      %v3074 = vadd.f32 %v2997, %v3062
      %vm3075 = vcmask 48128
      %v3076 = vsel %vm3075, %v3064, 0.0
      %3077 = vadd.xlane.f32.xlu0 %v3076
      %v3078 = vpop.xlane.xlu0 %3077
      %v3079 = vsel %vm3075, %v3065, 0.0
      %3080 = vadd.xlane.f32.xlu0 %v3079
      %v3081 = vpop.xlane.xlu0 %3080
      %v3082 = vsel %vm3075, %v3066, 0.0
      %3083 = vadd.xlane.f32.xlu0 %v3082
      %v3084 = vpop.xlane.xlu0 %3083
      %v3085 = vsel %vm3075, %v3067, 0.0
      %3086 = vadd.xlane.f32.xlu0 %v3085
      %v3087 = vpop.xlane.xlu0 %3086
      %v3088 = vsel %vm3075, %v3068, 0.0
      %3089 = vadd.xlane.f32.xlu0 %v3088
      %v3090 = vpop.xlane.xlu0 %3089
      %v3091 = vsel %vm3075, %v3069, 0.0
      %3092 = vadd.xlane.f32.xlu0 %v3091
      %v3093 = vpop.xlane.xlu0 %3092
      %v3094 = vsel %vm3075, %v3070, 0.0
      %3095 = vadd.xlane.f32.xlu0 %v3094
      %v3096 = vpop.xlane.xlu0 %3095
      %v3097 = vsel %vm3075, %v3071, 0.0
      %3098 = vadd.xlane.f32.xlu0 %v3097
      %v3099 = vpop.xlane.xlu0 %3098
      %v3100 = vsel %vm3075, %v3072, 0.0
      %3101 = vadd.xlane.f32.xlu0 %v3100
      %v3102 = vpop.xlane.xlu0 %3101
      %v3103 = vsel %vm3075, %v3073, 0.0
      %3104 = vadd.xlane.f32.xlu0 %v3103
      %v3105 = vpop.xlane.xlu0 %3104
      %v3106 = vsel %vm3075, %v3074, 0.0
      %3107 = vadd.xlane.f32.xlu0 %v3106
      %v3108 = vpop.xlane.xlu0 %3107
      %v3109 = vrcp.pop 6.0
      %v3110 = vmul.f32 %v3078, %v3109
      %v3111 = vmul.f32 %v3081, %v3109
      %v3112 = vmul.f32 %v3084, %v3109
      %v3113 = vmul.f32 %v3087, %v3109
      %v3114 = vmul.f32 %v3090, %v3109
      %v3115 = vmul.f32 %v3093, %v3109
      %v3116 = vmul.f32 %v3096, %v3109
      %v3117 = vmul.f32 %v3099, %v3109
      %v3118 = vmul.f32 %v3102, %v3109
      %v3119 = vmul.f32 %v3105, %v3109
      %v3120 = vmul.f32 %v3108, %v3109
      %vm3121 = vcmask 7168
      %3122 = vst.msk [vmem:[%s683] sm:$0xff] %vm3121, %v3110
      %3123 = vst.msk [vmem:[%s683 + $0x8] sm:$0xff] %vm3121, %v3111
      %3124 = vst.msk [vmem:[%s683 + $0x10] sm:$0xff] %vm3121, %v3112
      %3125 = vst.msk [vmem:[%s683 + $0x18] sm:$0xff] %vm3121, %v3113
      %3126 = vst.msk [vmem:[%s683 + $0x20] sm:$0xff] %vm3121, %v3114
      %3127 = vst.msk [vmem:[%s683 + $0x28] sm:$0xff] %vm3121, %v3115
      %3128 = vst.msk [vmem:[%s683 + $0x30] sm:$0xff] %vm3121, %v3116
      %3129 = vst.msk [vmem:[%s683 + $0x38] sm:$0xff] %vm3121, %v3117
      %3130 = vst.msk [vmem:[%s683 + $0x40] sm:$0xff] %vm3121, %v3118
      %3131 = vst.msk [vmem:[%s683 + $0x48] sm:$0xff] %vm3121, %v3119
      %3132 = vst.msk [vmem:[%s683 + $0x50] sm:$0xff] %vm3121, %v3120
      %p3133 = scmp.lt.s32.totalorder %s33, 1
      %s3134 = scalar_select %p3133, %s33, 1
      %s3135 = smul.addr %s3134, 11
      %s3136 = smul.addr %s3135, 8
      %s3137 = scalar_lea.vmem %s22, %s3136
      // Predicated region
      $region109: #{all_conv_2016_forward.1} parent=107 // pred_check
        %p3138 = pneg %p518
      $region110: #{all_conv_2016_forward.1} parent=107 // pred_check_branch
        %3140 = sbr.rel (%p3138) target = $region112
      $region111: #{all_conv_2016_forward.1} parent=107 // pred_region
        _
      $region112: #{all_conv_2016_forward.1} parent=107 // pred_fallthru
        _
    $region108: #{all_conv_2016_forward.1} parent=5 // pred_fallthru
      _
    %p3141 = scmp.le.s32.totalorder 2, %s28
    // Predicated region
    $region113: #{all_conv_2016_forward.1} parent=5 // pred_check
      %p3142 = pneg %p3141
    $region114: #{all_conv_2016_forward.1} parent=5 // pred_check_branch
      %3144 = sbr.rel (%p3142) target = $region116
    $region115: #{all_conv_2016_forward.1} parent=5 // pred_region
      %s3145 = ssub.s32 %s28, 2
      // Predicated region
      $region117: #{all_conv_2016_forward.1} parent=115 // pred_check
        %p3146 = pneg %p524
      $region118: #{all_conv_2016_forward.1} parent=115 // pred_check_branch
        %3148 = sbr.rel (%p3146) target = $region120
      $region119: #{all_conv_2016_forward.1} parent=115 // pred_region
        %p3149 = scmp.lt.s32.totalorder %s34, 1
        %s3150 = scalar_select %p3149, %s34, 1
        %s3151 = smul.addr %s3150, 11
        %s3152 = smul.addr %s3151, 8
        %s3153 = scalar_lea.vmem %s22, %s3152
      $region120: #{all_conv_2016_forward.1} parent=115 // pred_fallthru
        _
    $region116: #{all_conv_2016_forward.1} parent=5 // pred_fallthru
      _
  $region6: #{all_conv_2016_forward.1} parent=0 // loop_footer
    %s32 = sadd.s32 1, %s28
  $region7: #{all_conv_2016_forward.1} parent=0 // loop_footer_branch
    %27 = sbr.rel target = $region3
  $region8: #{all_conv_2016_forward.1} parent=0 // loop_exit
    _

</llo_original>
